<compile_context>
chip_gen: v6e
topology: v6e:2x2x1
jax: 0.10.0
libtpu: 0.0.40
codegen_flags: <defaults>
</compile_context>

<pallas_src>
import functools
import numpy as np
import jax
import jax.numpy as jnp
from jax.experimental import pallas as pl
from jax.experimental.pallas import tpu as pltpu


VMEM_LIMIT_BYTES = 48 * 1024 * 1024   # <= v7x's 64 MiB physical; plenty on v5e/v6e


def _round_up(x, m):
    return ((x + m - 1) // m) * m


def _pick_divisor(size, candidates):
    for c in candidates:
        if c <= size and size % c == 0:
            return c
    return size


# ---------------------------------------------------------------------------
# Tiled matmul (+ optional bias, fused LeakyReLU, BN-statistics epilogue)
# ---------------------------------------------------------------------------
def _matmul_kernel(x_ref, w_ref, *rest, slope, with_stats, with_bias):
    idx = 0
    b_ref = None
    if with_bias:
        b_ref = rest[idx]; idx += 1
    o_ref = rest[idx]; idx += 1
    if with_stats:
        sum_ref = rest[idx]; sq_ref = rest[idx + 1]; idx += 2
    acc_ref = rest[idx]

    @pl.when(pl.program_id(2) == 0)
    def _init():
        acc_ref[...] = jnp.zeros_like(acc_ref)

    acc_ref[...] += jnp.dot(x_ref[...], w_ref[...],
                            preferred_element_type=jnp.float32)

    @pl.when(pl.program_id(2) == pl.num_programs(2) - 1)
    def _epilogue():
        out = acc_ref[...]
        if with_bias:
            out = out + b_ref[...]
        if with_stats:
            # per-(M-tile, channel) partial sums for BatchNorm batch statistics
            s = jnp.sum(out, axis=0, keepdims=True)
            q = jnp.sum(out * out, axis=0, keepdims=True)
            sum_ref[...] = jnp.broadcast_to(s, sum_ref.shape)
            sq_ref[...] = jnp.broadcast_to(q, sq_ref.shape)
        if slope is not None:                    # fused LeakyReLU
            out = jnp.where(out >= 0, out, slope * out)
        o_ref[...] = out.astype(o_ref.dtype)


def pallas_matmul(x, w, b=None, *, slope=None, with_stats=False,
                  out_dtype=jnp.float32):
    """out = x @ w (+ b) (optionally fused LeakyReLU / per-channel sum & sumsq).

    Returns out with the logical (M, N) shape.  When with_stats: also returns
    per-channel sum and sum-of-squares over the M rows (f32).  Stats require
    b is None (a per-channel bias before BatchNorm is redundant anyway).
    """
    M, K = x.shape
    K2, N = w.shape
    assert K2 == K
    with_bias = b is not None
    assert not (with_stats and with_bias)

    Mp = _round_up(M, 8)
    Kp = _round_up(K, 128)
    Np = N if N < 128 else _round_up(N, 128)   # small N uses a full-extent lane block

    xp = x.astype(jnp.bfloat16)
    wp = w.astype(jnp.bfloat16)
    if (Mp, Kp) != (M, K):                      # no-op for all conv layers (by plan)
        xp = jnp.pad(xp, ((0, Mp - M), (0, Kp - K)))
    if (Kp, Np) != (K, N):
        wp = jnp.pad(wp, ((0, Kp - K), (0, Np - N)))

    # Tile selection: grow tiles (fewer grid steps, fewer re-fetches).
    tm = _pick_divisor(Mp, (512, 256, 128, 64, 32, 16, 8))
    tn = _pick_divisor(Np, (512, 256, 128))
    tk = _pick_divisor(Kp, (2048, 1024, 512, 256, 128))
    # v7x: make sure the parallel (i, j) grid has >= 2 tiles so both
    # TensorCores get work (no effect on single-TC v5e/v6e).
    if Mp // tm == 1 and Np // tn == 1:
        if tm >= 16 and tm % 2 == 0:
            tm //= 2
        elif tn >= 256 and tn % 2 == 0:
            tn //= 2
    gm, gn, gk = Mp // tm, Np // tn, Kp // tk

    in_specs = [pl.BlockSpec((tm, tk), lambda i, j, k: (i, k)),
                pl.BlockSpec((tk, tn), lambda i, j, k: (k, j))]
    operands = [xp, wp]
    if with_bias:
        bp = b.astype(jnp.float32).reshape(1, N)
        if Np != N:
            bp = jnp.pad(bp, ((0, 0), (0, Np - N)))
        in_specs.append(pl.BlockSpec((1, tn), lambda i, j, k: (0, j)))
        operands.append(bp)

    if with_stats:
        out_shape = (jax.ShapeDtypeStruct((Mp, Np), out_dtype),
                     jax.ShapeDtypeStruct((gm * 8, Np), jnp.float32),
                     jax.ShapeDtypeStruct((gm * 8, Np), jnp.float32))
        out_specs = (pl.BlockSpec((tm, tn), lambda i, j, k: (i, j)),
                     pl.BlockSpec((8, tn), lambda i, j, k: (i, j)),
                     pl.BlockSpec((8, tn), lambda i, j, k: (i, j)))
    else:
        out_shape = jax.ShapeDtypeStruct((Mp, Np), out_dtype)
        out_specs = pl.BlockSpec((tm, tn), lambda i, j, k: (i, j))

    kernel = functools.partial(_matmul_kernel, slope=slope,
                               with_stats=with_stats, with_bias=with_bias)
    results = pl.pallas_call(
        kernel,
        out_shape=out_shape,
        grid=(gm, gn, gk),
        in_specs=in_specs,
        out_specs=out_specs,
        scratch_shapes=[pltpu.VMEM((tm, tn), jnp.float32)],
        compiler_params=pltpu.CompilerParams(
            dimension_semantics=("parallel", "parallel", "arbitrary"),
            vmem_limit_bytes=VMEM_LIMIT_BYTES),
    )(*operands)

    if with_stats:
        out, sums, sqs = results
        # No bias => zero-padded rows contribute exactly 0; stats are exact.
        ch_sum = jnp.sum(sums.reshape(gm, 8, Np)[:, 0, :N], axis=0)
        ch_sq = jnp.sum(sqs.reshape(gm, 8, Np)[:, 0, :N], axis=0)
    else:
        out = results
    if (Mp, Np) != (M, N):                      # static slice; no-op in practice
        out = out[:M, :N]
    if with_stats:
        return out, ch_sum, ch_sq
    return out


# ---------------------------------------------------------------------------
# BatchNorm-apply (precomputed per-channel scale/shift) + LeakyReLU
# ---------------------------------------------------------------------------
def _scale_shift_lrelu_kernel(x_ref, scale_ref, shift_ref, o_ref, *, slope):
    y = x_ref[...].astype(jnp.float32) * scale_ref[...] + shift_ref[...]
    o_ref[...] = jnp.where(y >= 0, y, slope * y).astype(o_ref.dtype)


def pallas_scale_shift_lrelu(x, scale, shift, *, slope=0.2, out_dtype=jnp.bfloat16):
    M, C = x.shape
    Mp = _round_up(M, 8)
    Cp = C if C < 128 else _round_up(C, 128)
    if (Mp, Cp) != (M, C):
        x = jnp.pad(x, ((0, Mp - M), (0, Cp - C)))
    sc = scale.astype(jnp.float32).reshape(1, C)
    sh = shift.astype(jnp.float32).reshape(1, C)
    if Cp != C:
        sc = jnp.pad(sc, ((0, 0), (0, Cp - C)))
        sh = jnp.pad(sh, ((0, 0), (0, Cp - C)))

    # Pure load/store bound: big lane-dense tiles.
    tm = _pick_divisor(Mp, (1024, 512, 256, 128, 64, 32, 16, 8))
    tc = Cp if Cp <= 512 else _pick_divisor(Cp, (512, 256, 128))
    if Mp // tm == 1 and Cp // tc == 1 and tm >= 16 and tm % 2 == 0:
        tm //= 2   # v7x: give both TensorCores a tile
    kernel = functools.partial(_scale_shift_lrelu_kernel, slope=slope)

    out = pl.pallas_call(
        kernel,
        out_shape=jax.ShapeDtypeStruct((Mp, Cp), out_dtype),
        grid=(Mp // tm, Cp // tc),
        in_specs=[pl.BlockSpec((tm, tc), lambda i, j: (i, j)),
                  pl.BlockSpec((1, tc), lambda i, j: (0, j)),
                  pl.BlockSpec((1, tc), lambda i, j: (0, j))],
        out_specs=pl.BlockSpec((tm, tc), lambda i, j: (i, j)),
        compiler_params=pltpu.CompilerParams(
            dimension_semantics=("parallel", "parallel"),
            vmem_limit_bytes=VMEM_LIMIT_BYTES),
    )(x, sc, sh)
    if (Mp, Cp) != (M, C):
        out = out[:M, :C]                       # static slice; no-op in practice
    return out


# ---------------------------------------------------------------------------
# im2col for 4x4 / stride-2 / pad-1 conv (NHWC), bf16 patches
# TODO(synk): replace with an implicit-GEMM conv kernel (16 taps accumulated
# in-kernel) to remove the 16x activation-read blowup.
# ---------------------------------------------------------------------------
def im2col(x_nhwc, kh=4, kw=4, stride=2, pad=1):
    n, h, w, c = x_nhwc.shape
    xp = jnp.pad(x_nhwc, ((0, 0), (pad, pad), (pad, pad), (0, 0)))
    oh = (h + 2 * pad - kh) // stride + 1
    ow = (w + 2 * pad - kw) // stride + 1
    cols = []
    for i in range(kh):
        for j in range(kw):
            cols.append(xp[:, i:i + stride * oh:stride, j:j + stride * ow:stride, :])
    patches = jnp.concatenate(cols, axis=-1)    # K-order = (kh, kw, cin)
    return patches.reshape(n * oh * ow, kh * kw * c), (n, oh, ow)


# ---------------------------------------------------------------------------
# Parameter init (deterministic, synthetic — shapes follow the module __init__)
# ---------------------------------------------------------------------------
def init_params(key, z_dim, y_dim, nc, img_dim):
    layer_num = int(np.log2(img_dim)) - 3
    max_ch = img_dim * 8
    f_num = 4
    params = {"convs": [], "bns": []}
    pre = nc
    for i in range(layer_num + 1):
        now = max_ch // 2 ** (layer_num - i)
        key, k_w, k_b = jax.random.split(key, 3)
        w = jax.random.normal(k_w, (now, pre, 4, 4), jnp.float32) * 0.05  # (Cout,Cin,KH,KW)
        b = jax.random.normal(k_b, (now,), jnp.float32) * 0.05
        params["convs"].append((w, b))
        if i > 0:
            key, k_g, k_be = jax.random.split(key, 3)
            gamma = 1.0 + 0.1 * jax.random.normal(k_g, (now,), jnp.float32)
            beta = 0.1 * jax.random.normal(k_be, (now,), jnp.float32)
            params["bns"].append((gamma, beta))
        else:
            params["bns"].append(None)
        pre = now
    feat = f_num * f_num * max_ch
    key, k1, k2, k3, k4 = jax.random.split(key, 5)
    params["linear_z"] = (jax.random.normal(k1, (feat, 2 * z_dim), jnp.float32) * 0.02,
                          jax.random.normal(k2, (2 * z_dim,), jnp.float32) * 0.02)
    params["linear_y"] = (jax.random.normal(k3, (feat, y_dim), jnp.float32) * 0.02,
                          jax.random.normal(k4, (y_dim,), jnp.float32) * 0.02)
    return params


def prepare_plan(params, f_num=4):
    """One-time static weight re-layout.  No Python-int pytree leaves (they would
    become tracers under jit and break static slicing).

    - Conv weight (Cout, Cin, 4, 4) -> (16*cin_pad, Cout) bf16, Cin padded to a
      multiple of 8 so K is always a multiple of 128 (no post-hoc patches pad).
    - Conv bias dropped on BatchNorm layers (cancelled by mean subtraction).
    - The two Linear heads are fused into one lane-dense (feat, 128-padded)
      matrix with rows pre-permuted from NCHW-flatten to NHWC-flatten order.
    """
    plan = {"convs": []}
    cin_pad = _round_up(params["convs"][0][0].shape[1], 8)
    for (w, b), bn in zip(params["convs"], params["bns"]):
        cout, cin = int(w.shape[0]), int(w.shape[1])
        w4 = jnp.transpose(w, (2, 3, 1, 0))                 # (KH, KW, Cin, Cout)
        if cin_pad != cin:
            w4 = jnp.pad(w4, ((0, 0), (0, 0), (0, cin_pad - cin), (0, 0)))
        w_mat = w4.reshape(-1, cout).astype(jnp.bfloat16)   # (16*cin_pad, Cout)
        plan["convs"].append({
            "w_mat": w_mat,
            "b": b.astype(jnp.float32) if bn is None else None,  # bias redundant before BN
            "bn": None if bn is None else (bn[0].astype(jnp.float32),
                                           bn[1].astype(jnp.float32)),
        })
        assert cout % 8 == 0          # holds for this architecture (64, 128, ...)
        cin_pad = cout                # activations are emitted with exactly cout channels

    wz, bz = params["linear_z"]
    wy, by = params["linear_y"]
    w_head = jnp.concatenate([wz, wy], axis=1)              # NCHW-flatten row order
    b_head = jnp.concatenate([bz, by], axis=0)
    c_last = int(params["convs"][-1][0].shape[0])
    n_head = int(w_head.shape[1])
    # Reorder rows from NCHW-flatten to NHWC-flatten (matches channels-last trunk).
    w_head = jnp.transpose(w_head.reshape(c_last, f_num, f_num, n_head),
                           (1, 2, 0, 3)).reshape(f_num * f_num * c_last, n_head)
    n_pad = _round_up(n_head, 128)
    plan["w_head"] = jnp.pad(w_head, ((0, 0), (0, n_pad - n_head))).astype(jnp.bfloat16)
    plan["b_head"] = jnp.pad(b_head, (0, n_pad - n_head)).astype(jnp.float32)
    return plan


# ---------------------------------------------------------------------------
# Forward pass (matches ICP_Encoder_Big.forward; BatchNorm in training mode)
# ---------------------------------------------------------------------------
def icp_encoder_big_forward(plan, x_nchw, eps, *, z_dim, y_dim):
    # NCHW -> NHWC bf16; pad Cin once so layer-0 K = 16*cin_pad is lane-aligned.
    h = jnp.transpose(x_nchw, (0, 2, 3, 1)).astype(jnp.bfloat16)
    cin_pad0 = plan["convs"][0]["w_mat"].shape[0] // 16
    nc = h.shape[-1]
    if cin_pad0 != nc:
        h = jnp.pad(h, ((0, 0), (0, 0), (0, 0), (0, cin_pad0 - nc)))

    for layer in plan["convs"]:
        w_mat, b, bn = layer["w_mat"], layer["b"], layer["bn"]
        cout = w_mat.shape[1]
        patches, (n, oh, ow) = im2col(h)
        M = patches.shape[0]
        if bn is None:
            out = pallas_matmul(patches, w_mat, b, slope=0.2, out_dtype=jnp.bfloat16)
        else:
            # Conv matmul (no bias: cancelled by BN mean-subtraction) with a
            # BN-statistics epilogue; training-mode (biased) batch stats in f32.
            out, ch_sum, ch_sq = pallas_matmul(patches, w_mat, None,
                                               with_stats=True,
                                               out_dtype=jnp.bfloat16)
            gamma, beta = bn
            mean = ch_sum / M
            var = jnp.maximum(ch_sq / M - mean * mean, 0.0)
            scale = gamma * jax.lax.rsqrt(var + 1e-5)
            shift = beta - mean * scale
            # TODO(synk): stats come from the f32 accumulator while normalization
            # is applied to the bf16-rounded activations (tiny mismatch vs f32 BN).
            out = pallas_scale_shift_lrelu(out, scale, shift, slope=0.2,
                                           out_dtype=jnp.bfloat16)
        h = out.reshape(n, oh, ow, cout)         # exact shape — no slicing copies

    # NHWC flatten; head rows were pre-permuted so this matches the PyTorch
    # View((-1, f_num*f_num*max_channel_num)) over the NCHW layout.
    n, fh, fw, c = h.shape
    feat = h.reshape(n, fh * fw * c)
    head = pallas_matmul(feat, plan["w_head"], plan["b_head"], out_dtype=jnp.float32)
    mu = head[:, :z_dim]
    logvar = head[:, z_dim:2 * z_dim]
    y = head[:, 2 * z_dim:2 * z_dim + y_dim]

    # reparametrize: tiny elementwise op — plain jnp, XLA fuses it.
    # TODO(synk): PyTorch's std.data.new(...).normal_() in-graph RNG is not
    # reproducible here; a caller-supplied standard-normal eps is used instead.
    std = jnp.exp(0.5 * logvar)
    z = mu + std * eps
    return z, mu, logvar, y


if __name__ == "__main__":
    z_dim, y_dim, nc, img_dim = 8, 6, 4, 16   # small config: layer_num=1, max_ch=128
    batch = 2
    key = jax.random.PRNGKey(0)
    pkey, xkey, ekey = jax.random.split(key, 3)

    params = init_params(pkey, z_dim, y_dim, nc, img_dim)
    plan = prepare_plan(params)
    x = jax.random.normal(xkey, (batch, nc, img_dim, img_dim), jnp.float32)
    eps = jax.random.normal(ekey, (batch, z_dim), jnp.float32)

    fwd = jax.jit(functools.partial(icp_encoder_big_forward, z_dim=z_dim, y_dim=y_dim))
    z, mu, logvar, y = fwd(plan, x, eps)
    jax.block_until_ready((z, mu, logvar, y))

    assert z.shape == (batch, z_dim)
    assert mu.shape == (batch, z_dim)
    assert logvar.shape == (batch, z_dim)
    assert y.shape == (batch, y_dim)
    assert all(bool(jnp.isfinite(t).all()) for t in (z, mu, logvar, y))
    print("KERNEL_OK")
</pallas_src>

<mosaic_0001>
module attributes {stable_mosaic.version = 11 : i64} {
  func.func @_matmul_kernel(%arg0: i32, %arg1: i32, %arg2: i32, %arg3: memref<64x128xbf16, #tpu.memory_space<vmem>>, %arg4: memref<128x64xbf16, #tpu.memory_space<vmem>>, %arg5: memref<1x64xf32, #tpu.memory_space<vmem>>, %arg6: memref<64x64xbf16, #tpu.memory_space<vmem>>, %arg7: memref<64x64xf32, #tpu.memory_space<vmem>>) attributes {dimension_semantics = [#tpu.dimension_semantics<parallel>, #tpu.dimension_semantics<parallel>, #tpu.dimension_semantics<arbitrary>], iteration_bounds = array<i64: 2, 1, 1>, scalar_prefetch = 0 : i64, scratch_operands = 1 : i64, tpu.core_type = #tpu.core_type<tc>, window_params = [{transform_indices = @transform_0, window_bounds = array<i64: 64, 128>}, {transform_indices = @transform_1, window_bounds = array<i64: 128, 64>}, {transform_indices = @transform_2, window_bounds = array<i64: 1, 64>}, {transform_indices = @transform_3, window_bounds = array<i64: 64, 64>}]} {
    %c0_i32 = arith.constant 0 : i32
    %0 = arith.cmpi eq, %arg2, %c0_i32 : i32
    %1 = arith.extui %0 : i1 to i32
    %c0_i32_0 = arith.constant 0 : i32
    %2 = arith.cmpi ne, %1, %c0_i32_0 : i32
    scf.if %2 {
      %cst_10 = arith.constant 0.000000e+00 : f32
      %12 = vector.broadcast %cst_10 : f32 to vector<64x64xf32>
      %c0_11 = arith.constant 0 : index
      %c0_12 = arith.constant 0 : index
      %13 = vector.load %arg7[%c0_11, %c0_12] : memref<64x64xf32, #tpu.memory_space<vmem>>, vector<64x64xf32>
      tpu.vector_store %arg7[%c0_11, %c0_12], %12 {strides = array<i32>} : memref<64x64xf32, #tpu.memory_space<vmem>>, vector<64x64xf32>,
    } else {
    }
    %c0 = arith.constant 0 : index
    %c0_1 = arith.constant 0 : index
    %3 = vector.load %arg7[%c0, %c0_1] : memref<64x64xf32, #tpu.memory_space<vmem>>, vector<64x64xf32>
    %c0_2 = arith.constant 0 : index
    %c0_3 = arith.constant 0 : index
    %4 = vector.load %arg3[%c0_2, %c0_3] : memref<64x128xbf16, #tpu.memory_space<vmem>>, vector<64x128xbf16>
    %c0_4 = arith.constant 0 : index
    %c0_5 = arith.constant 0 : index
    %5 = vector.load %arg4[%c0_4, %c0_5] : memref<128x64xbf16, #tpu.memory_space<vmem>>, vector<128x64xbf16>
    %cst = arith.constant dense<0.000000e+00> : vector<64x64xf32>
    %6 = tpu.matmul %4, %5, %cst {dimension_numbers = #tpu.dot_dimension_numbers<[1], [0], [0], [1], [0, 0, 1, 1], [], []>} : vector<64x128xbf16>, vector<128x64xbf16>, vector<64x64xf32> -> vector<64x64xf32>
    %7 = arith.addf %3, %6 : vector<64x64xf32>
    %c0_6 = arith.constant 0 : index
    %c0_7 = arith.constant 0 : index
    %8 = vector.load %arg7[%c0_6, %c0_7] : memref<64x64xf32, #tpu.memory_space<vmem>>, vector<64x64xf32>
    tpu.vector_store %arg7[%c0_6, %c0_7], %7 {strides = array<i32>} : memref<64x64xf32, #tpu.memory_space<vmem>>, vector<64x64xf32>,
    %c0_i32_8 = arith.constant 0 : i32
    %9 = arith.cmpi eq, %arg2, %c0_i32_8 : i32
    %10 = arith.extui %9 : i1 to i32
    %c0_i32_9 = arith.constant 0 : i32
    %11 = arith.cmpi ne, %10, %c0_i32_9 : i32
    scf.if %11 {
      %c0_10 = arith.constant 0 : index
      %c0_11 = arith.constant 0 : index
      %12 = vector.load %arg7[%c0_10, %c0_11] : memref<64x64xf32, #tpu.memory_space<vmem>>, vector<64x64xf32>
      %c0_12 = arith.constant 0 : index
      %c0_13 = arith.constant 0 : index
      %13 = vector.load %arg5[%c0_12, %c0_13] : memref<1x64xf32, #tpu.memory_space<vmem>>, vector<1x64xf32>
      %14 = vector.broadcast %13 : vector<1x64xf32> to vector<64x64xf32>
      %15 = arith.addf %12, %14 : vector<64x64xf32>
      %cst_14 = arith.constant 0.000000e+00 : f32
      %16 = vector.broadcast %cst_14 : f32 to vector<64x64xf32>
      %17 = arith.cmpf oge, %15, %16 : vector<64x64xf32>
      %cst_15 = arith.constant 2.000000e-01 : f32
      %18 = vector.broadcast %cst_15 : f32 to vector<64x64xf32>
      %19 = arith.mulf %18, %15 : vector<64x64xf32>
      %20 = arith.select %17, %15, %19 : vector<64x64xi1>, vector<64x64xf32>
      %21 = arith.truncf %20 : vector<64x64xf32> to vector<64x64xbf16>
      %c0_16 = arith.constant 0 : index
      %c0_17 = arith.constant 0 : index
      %22 = vector.load %arg6[%c0_16, %c0_17] : memref<64x64xbf16, #tpu.memory_space<vmem>>, vector<64x64xbf16>
      tpu.vector_store %arg6[%c0_16, %c0_17], %21 {strides = array<i32>} : memref<64x64xbf16, #tpu.memory_space<vmem>>, vector<64x64xbf16>,
    } else {
    }
    return
  }
  func.func @transform_0(%arg0: i32, %arg1: i32, %arg2: i32) -> (i32, i32) {
    %c0_i32 = arith.constant 0 : i32
    return %arg0, %arg2 : i32, i32
  }
  func.func @transform_1(%arg0: i32, %arg1: i32, %arg2: i32) -> (i32, i32) {
    %c0_i32 = arith.constant 0 : i32
    return %arg2, %arg1 : i32, i32
  }
  func.func @transform_2(%arg0: i32, %arg1: i32, %arg2: i32) -> (i32, i32) {
    %c0_i32 = arith.constant 0 : i32
    %c0_i32_0 = arith.constant 0 : i32
    return %c0_i32, %arg1 : i32, i32
  }
  func.func @transform_3(%arg0: i32, %arg1: i32, %arg2: i32) -> (i32, i32) {
    %c0_i32 = arith.constant 0 : i32
    return %arg0, %arg1 : i32, i32
  }
}

module attributes {stable_mosaic.version = 11 : i64} {
  func.func @_matmul_kernel(%arg0: i32, %arg1: i32, %arg2: i32, %arg3: memref<16x1024xbf16, #tpu.memory_space<vmem>>, %arg4: memref<1024x128xbf16, #tpu.memory_space<vmem>>, %arg5: memref<16x128xbf16, #tpu.memory_space<vmem>>, %arg6: memref<8x128xf32, #tpu.memory_space<vmem>>, %arg7: memref<8x128xf32, #tpu.memory_space<vmem>>, %arg8: memref<16x128xf32, #tpu.memory_space<vmem>>) attributes {dimension_semantics = [#tpu.dimension_semantics<parallel>, #tpu.dimension_semantics<parallel>, #tpu.dimension_semantics<arbitrary>], iteration_bounds = array<i64: 2, 1, 1>, scalar_prefetch = 0 : i64, scratch_operands = 1 : i64, tpu.core_type = #tpu.core_type<tc>, window_params = [{transform_indices = @transform_0, window_bounds = array<i64: 16, 1024>}, {transform_indices = @transform_1, window_bounds = array<i64: 1024, 128>}, {transform_indices = @transform_2, window_bounds = array<i64: 16, 128>}, {transform_indices = @transform_3, window_bounds = array<i64: 8, 128>}, {transform_indices = @transform_4, window_bounds = array<i64: 8, 128>}]} {
    %c0_i32 = arith.constant 0 : i32
    %0 = arith.cmpi eq, %arg2, %c0_i32 : i32
    %1 = arith.extui %0 : i1 to i32
    %c0_i32_0 = arith.constant 0 : i32
    %2 = arith.cmpi ne, %1, %c0_i32_0 : i32
    scf.if %2 {
      %cst_10 = arith.constant 0.000000e+00 : f32
      %12 = vector.broadcast %cst_10 : f32 to vector<16x128xf32>
      %c0_11 = arith.constant 0 : index
      %c0_12 = arith.constant 0 : index
      %13 = vector.load %arg8[%c0_11, %c0_12] : memref<16x128xf32, #tpu.memory_space<vmem>>, vector<16x128xf32>
      tpu.vector_store %arg8[%c0_11, %c0_12], %12 {strides = array<i32>} : memref<16x128xf32, #tpu.memory_space<vmem>>, vector<16x128xf32>,
    } else {
    }
    %c0 = arith.constant 0 : index
    %c0_1 = arith.constant 0 : index
    %3 = vector.load %arg8[%c0, %c0_1] : memref<16x128xf32, #tpu.memory_space<vmem>>, vector<16x128xf32>
    %c0_2 = arith.constant 0 : index
    %c0_3 = arith.constant 0 : index
    %4 = vector.load %arg3[%c0_2, %c0_3] : memref<16x1024xbf16, #tpu.memory_space<vmem>>, vector<16x1024xbf16>
    %c0_4 = arith.constant 0 : index
    %c0_5 = arith.constant 0 : index
    %5 = vector.load %arg4[%c0_4, %c0_5] : memref<1024x128xbf16, #tpu.memory_space<vmem>>, vector<1024x128xbf16>
    %cst = arith.constant dense<0.000000e+00> : vector<16x128xf32>
    %6 = tpu.matmul %4, %5, %cst {dimension_numbers = #tpu.dot_dimension_numbers<[1], [0], [0], [1], [0, 0, 1, 1], [], []>} : vector<16x1024xbf16>, vector<1024x128xbf16>, vector<16x128xf32> -> vector<16x128xf32>
    %7 = arith.addf %3, %6 : vector<16x128xf32>
    %c0_6 = arith.constant 0 : index
    %c0_7 = arith.constant 0 : index
    %8 = vector.load %arg8[%c0_6, %c0_7] : memref<16x128xf32, #tpu.memory_space<vmem>>, vector<16x128xf32>
    tpu.vector_store %arg8[%c0_6, %c0_7], %7 {strides = array<i32>} : memref<16x128xf32, #tpu.memory_space<vmem>>, vector<16x128xf32>,
    %c0_i32_8 = arith.constant 0 : i32
    %9 = arith.cmpi eq, %arg2, %c0_i32_8 : i32
    %10 = arith.extui %9 : i1 to i32
    %c0_i32_9 = arith.constant 0 : i32
    %11 = arith.cmpi ne, %10, %c0_i32_9 : i32
    scf.if %11 {
      %c0_10 = arith.constant 0 : index
      %c0_11 = arith.constant 0 : index
      %12 = vector.load %arg8[%c0_10, %c0_11] : memref<16x128xf32, #tpu.memory_space<vmem>>, vector<16x128xf32>
      %cst_12 = arith.constant dense<0.000000e+00> : vector<128xf32>
      %13 = vector.multi_reduction <add>, %12, %cst_12 [0] : vector<16x128xf32> to vector<128xf32>
      %14 = vector.shape_cast %13 : vector<128xf32> to vector<1x128xf32>
      %15 = arith.mulf %12, %12 : vector<16x128xf32>
      %cst_13 = arith.constant dense<0.000000e+00> : vector<128xf32>
      %16 = vector.multi_reduction <add>, %15, %cst_13 [0] : vector<16x128xf32> to vector<128xf32>
      %17 = vector.shape_cast %16 : vector<128xf32> to vector<1x128xf32>
      %18 = vector.shape_cast %14 : vector<1x128xf32> to vector<1x128xf32>
      %19 = vector.broadcast %18 : vector<1x128xf32> to vector<8x128xf32>
      %c0_14 = arith.constant 0 : index
      %c0_15 = arith.constant 0 : index
      %20 = vector.load %arg6[%c0_14, %c0_15] : memref<8x128xf32, #tpu.memory_space<vmem>>, vector<8x128xf32>
      tpu.vector_store %arg6[%c0_14, %c0_15], %19 {strides = array<i32>} : memref<8x128xf32, #tpu.memory_space<vmem>>, vector<8x128xf32>,
      %21 = vector.shape_cast %17 : vector<1x128xf32> to vector<1x128xf32>
      %22 = vector.broadcast %21 : vector<1x128xf32> to vector<8x128xf32>
      %c0_16 = arith.constant 0 : index
      %c0_17 = arith.constant 0 : index
      %23 = vector.load %arg7[%c0_16, %c0_17] : memref<8x128xf32, #tpu.memory_space<vmem>>, vector<8x128xf32>
      tpu.vector_store %arg7[%c0_16, %c0_17], %22 {strides = array<i32>} : memref<8x128xf32, #tpu.memory_space<vmem>>, vector<8x128xf32>,
      %24 = arith.truncf %12 : vector<16x128xf32> to vector<16x128xbf16>
      %c0_18 = arith.constant 0 : index
      %c0_19 = arith.constant 0 : index
      %25 = vector.load %arg5[%c0_18, %c0_19] : memref<16x128xbf16, #tpu.memory_space<vmem>>, vector<16x128xbf16>
      tpu.vector_store %arg5[%c0_18, %c0_19], %24 {strides = array<i32>} : memref<16x128xbf16, #tpu.memory_space<vmem>>, vector<16x128xbf16>,
    } else {
    }
    return
  }
  func.func @transform_0(%arg0: i32, %arg1: i32, %arg2: i32) -> (i32, i32) {
    %c0_i32 = arith.constant 0 : i32
    return %arg0, %arg2 : i32, i32
  }
  func.func @transform_1(%arg0: i32, %arg1: i32, %arg2: i32) -> (i32, i32) {
    %c0_i32 = arith.constant 0 : i32
    return %arg2, %arg1 : i32, i32
  }
  func.func @transform_2(%arg0: i32, %arg1: i32, %arg2: i32) -> (i32, i32) {
    %c0_i32 = arith.constant 0 : i32
    return %arg0, %arg1 : i32, i32
  }
  func.func @transform_3(%arg0: i32, %arg1: i32, %arg2: i32) -> (i32, i32) {
    %c0_i32 = arith.constant 0 : i32
    return %arg0, %arg1 : i32, i32
  }
  func.func @transform_4(%arg0: i32, %arg1: i32, %arg2: i32) -> (i32, i32) {
    %c0_i32 = arith.constant 0 : i32
    return %arg0, %arg1 : i32, i32
  }
}

module attributes {stable_mosaic.version = 11 : i64} {
  func.func @_scale_shift_lrelu_kernel(%arg0: i32, %arg1: i32, %arg2: memref<16x128xbf16, #tpu.memory_space<vmem>>, %arg3: memref<1x128xf32, #tpu.memory_space<vmem>>, %arg4: memref<1x128xf32, #tpu.memory_space<vmem>>, %arg5: memref<16x128xbf16, #tpu.memory_space<vmem>>) attributes {dimension_semantics = [#tpu.dimension_semantics<parallel>, #tpu.dimension_semantics<parallel>], iteration_bounds = array<i64: 2, 1>, scalar_prefetch = 0 : i64, scratch_operands = 0 : i64, tpu.core_type = #tpu.core_type<tc>, window_params = [{transform_indices = @transform_0, window_bounds = array<i64: 16, 128>}, {transform_indices = @transform_1, window_bounds = array<i64: 1, 128>}, {transform_indices = @transform_2, window_bounds = array<i64: 1, 128>}, {transform_indices = @transform_3, window_bounds = array<i64: 16, 128>}]} {
    %c0 = arith.constant 0 : index
    %c0_0 = arith.constant 0 : index
    %0 = vector.load %arg2[%c0, %c0_0] : memref<16x128xbf16, #tpu.memory_space<vmem>>, vector<16x128xbf16>
    %1 = arith.extf %0 : vector<16x128xbf16> to vector<16x128xf32>
    %c0_1 = arith.constant 0 : index
    %c0_2 = arith.constant 0 : index
    %2 = vector.load %arg3[%c0_1, %c0_2] : memref<1x128xf32, #tpu.memory_space<vmem>>, vector<1x128xf32>
    %3 = vector.broadcast %2 : vector<1x128xf32> to vector<16x128xf32>
    %4 = arith.mulf %1, %3 : vector<16x128xf32>
    %c0_3 = arith.constant 0 : index
    %c0_4 = arith.constant 0 : index
    %5 = vector.load %arg4[%c0_3, %c0_4] : memref<1x128xf32, #tpu.memory_space<vmem>>, vector<1x128xf32>
    %6 = vector.broadcast %5 : vector<1x128xf32> to vector<16x128xf32>
    %7 = arith.addf %4, %6 : vector<16x128xf32>
    %cst = arith.constant 0.000000e+00 : f32
    %8 = vector.broadcast %cst : f32 to vector<16x128xf32>
    %9 = arith.cmpf oge, %7, %8 : vector<16x128xf32>
    %cst_5 = arith.constant 2.000000e-01 : f32
    %10 = vector.broadcast %cst_5 : f32 to vector<16x128xf32>
    %11 = arith.mulf %10, %7 : vector<16x128xf32>
    %12 = arith.select %9, %7, %11 : vector<16x128xi1>, vector<16x128xf32>
    %13 = arith.truncf %12 : vector<16x128xf32> to vector<16x128xbf16>
    %c0_6 = arith.constant 0 : index
    %c0_7 = arith.constant 0 : index
    %14 = vector.load %arg5[%c0_6, %c0_7] : memref<16x128xbf16, #tpu.memory_space<vmem>>, vector<16x128xbf16>
    tpu.vector_store %arg5[%c0_6, %c0_7], %13 {strides = array<i32>} : memref<16x128xbf16, #tpu.memory_space<vmem>>, vector<16x128xbf16>,
    return
  }
  func.func @transform_0(%arg0: i32, %arg1: i32) -> (i32, i32) {
    %c0_i32 = arith.constant 0 : i32
    return %arg0, %arg1 : i32, i32
  }
  func.func @transform_1(%arg0: i32, %arg1: i32) -> (i32, i32) {
    %c0_i32 = arith.constant 0 : i32
    %c0_i32_0 = arith.constant 0 : i32
    return %c0_i32, %arg1 : i32, i32
  }
  func.func @transform_2(%arg0: i32, %arg1: i32) -> (i32, i32) {
    %c0_i32 = arith.constant 0 : i32
    %c0_i32_0 = arith.constant 0 : i32
    return %c0_i32, %arg1 : i32, i32
  }
  func.func @transform_3(%arg0: i32, %arg1: i32) -> (i32, i32) {
    %c0_i32 = arith.constant 0 : i32
    return %arg0, %arg1 : i32, i32
  }
}

module attributes {stable_mosaic.version = 11 : i64} {
  func.func @_matmul_kernel(%arg0: i32, %arg1: i32, %arg2: i32, %arg3: memref<8x2048xbf16, #tpu.memory_space<vmem>>, %arg4: memref<2048x128xbf16, #tpu.memory_space<vmem>>, %arg5: memref<1x128xf32, #tpu.memory_space<vmem>>, %arg6: memref<8x128xf32, #tpu.memory_space<vmem>>, %arg7: memref<8x128xf32, #tpu.memory_space<vmem>>) attributes {dimension_semantics = [#tpu.dimension_semantics<parallel>, #tpu.dimension_semantics<parallel>, #tpu.dimension_semantics<arbitrary>], iteration_bounds = array<i64: 1, 1, 1>, scalar_prefetch = 0 : i64, scratch_operands = 1 : i64, tpu.core_type = #tpu.core_type<tc>, window_params = [{transform_indices = @transform_0, window_bounds = array<i64: 8, 2048>}, {transform_indices = @transform_1, window_bounds = array<i64: 2048, 128>}, {transform_indices = @transform_2, window_bounds = array<i64: 1, 128>}, {transform_indices = @transform_3, window_bounds = array<i64: 8, 128>}]} {
    %c0_i32 = arith.constant 0 : i32
    %0 = arith.cmpi eq, %arg2, %c0_i32 : i32
    %1 = arith.extui %0 : i1 to i32
    %c0_i32_0 = arith.constant 0 : i32
    %2 = arith.cmpi ne, %1, %c0_i32_0 : i32
    scf.if %2 {
      %cst_10 = arith.constant 0.000000e+00 : f32
      %12 = vector.broadcast %cst_10 : f32 to vector<8x128xf32>
      %c0_11 = arith.constant 0 : index
      %c0_12 = arith.constant 0 : index
      %13 = vector.load %arg7[%c0_11, %c0_12] : memref<8x128xf32, #tpu.memory_space<vmem>>, vector<8x128xf32>
      tpu.vector_store %arg7[%c0_11, %c0_12], %12 {strides = array<i32>} : memref<8x128xf32, #tpu.memory_space<vmem>>, vector<8x128xf32>,
    } else {
    }
    %c0 = arith.constant 0 : index
    %c0_1 = arith.constant 0 : index
    %3 = vector.load %arg7[%c0, %c0_1] : memref<8x128xf32, #tpu.memory_space<vmem>>, vector<8x128xf32>
    %c0_2 = arith.constant 0 : index
    %c0_3 = arith.constant 0 : index
    %4 = vector.load %arg3[%c0_2, %c0_3] : memref<8x2048xbf16, #tpu.memory_space<vmem>>, vector<8x2048xbf16>
    %c0_4 = arith.constant 0 : index
    %c0_5 = arith.constant 0 : index
    %5 = vector.load %arg4[%c0_4, %c0_5] : memref<2048x128xbf16, #tpu.memory_space<vmem>>, vector<2048x128xbf16>
    %cst = arith.constant dense<0.000000e+00> : vector<8x128xf32>
    %6 = tpu.matmul %4, %5, %cst {dimension_numbers = #tpu.dot_dimension_numbers<[1], [0], [0], [1], [0, 0, 1, 1], [], []>} : vector<8x2048xbf16>, vector<2048x128xbf16>, vector<8x128xf32> -> vector<8x128xf32>
    %7 = arith.addf %3, %6 : vector<8x128xf32>
    %c0_6 = arith.constant 0 : index
    %c0_7 = arith.constant 0 : index
    %8 = vector.load %arg7[%c0_6, %c0_7] : memref<8x128xf32, #tpu.memory_space<vmem>>, vector<8x128xf32>
    tpu.vector_store %arg7[%c0_6, %c0_7], %7 {strides = array<i32>} : memref<8x128xf32, #tpu.memory_space<vmem>>, vector<8x128xf32>,
    %c0_i32_8 = arith.constant 0 : i32
    %9 = arith.cmpi eq, %arg2, %c0_i32_8 : i32
    %10 = arith.extui %9 : i1 to i32
    %c0_i32_9 = arith.constant 0 : i32
    %11 = arith.cmpi ne, %10, %c0_i32_9 : i32
    scf.if %11 {
      %c0_10 = arith.constant 0 : index
      %c0_11 = arith.constant 0 : index
      %12 = vector.load %arg7[%c0_10, %c0_11] : memref<8x128xf32, #tpu.memory_space<vmem>>, vector<8x128xf32>
      %c0_12 = arith.constant 0 : index
      %c0_13 = arith.constant 0 : index
      %13 = vector.load %arg5[%c0_12, %c0_13] : memref<1x128xf32, #tpu.memory_space<vmem>>, vector<1x128xf32>
      %14 = vector.broadcast %13 : vector<1x128xf32> to vector<8x128xf32>
      %15 = arith.addf %12, %14 : vector<8x128xf32>
      %c0_14 = arith.constant 0 : index
      %c0_15 = arith.constant 0 : index
      %16 = vector.load %arg6[%c0_14, %c0_15] : memref<8x128xf32, #tpu.memory_space<vmem>>, vector<8x128xf32>
      tpu.vector_store %arg6[%c0_14, %c0_15], %15 {strides = array<i32>} : memref<8x128xf32, #tpu.memory_space<vmem>>, vector<8x128xf32>,
    } else {
    }
    return
  }
  func.func @transform_0(%arg0: i32, %arg1: i32, %arg2: i32) -> (i32, i32) {
    %c0_i32 = arith.constant 0 : i32
    return %arg0, %arg2 : i32, i32
  }
  func.func @transform_1(%arg0: i32, %arg1: i32, %arg2: i32) -> (i32, i32) {
    %c0_i32 = arith.constant 0 : i32
    return %arg2, %arg1 : i32, i32
  }
  func.func @transform_2(%arg0: i32, %arg1: i32, %arg2: i32) -> (i32, i32) {
    %c0_i32 = arith.constant 0 : i32
    %c0_i32_0 = arith.constant 0 : i32
    return %c0_i32, %arg1 : i32, i32
  }
  func.func @transform_3(%arg0: i32, %arg1: i32, %arg2: i32) -> (i32, i32) {
    %c0_i32 = arith.constant 0 : i32
    return %arg0, %arg1 : i32, i32
  }
}

</mosaic_0001>

<llo_original>
// kernel: icp_encoder_big_forward.4
$region0: #{icp_encoder_big_forward.4}
  #allocation0 [shape = 'u32[]', space=smem, size = 0x4, offset = 0x4, fixed_abs, tag = 'smem constant byte address 0x4 - core index']
  #allocation1 [shape = 'u32[144,128]{1,0:T(1,128)}', space=vmem, size = 0x12000, scoped, tag = 'internal scratch']
  #allocation2 [shape = 'f32[64,64]{1,0:T(8,128)}', space=vmem, size = 0x8000, scoped, tag = 'scratch operand']
  %s0 = inlined_call_operand.vmem [shape: bf16[128,128], index: 0, kind: input, shape index: {}]
  %s1 = inlined_call_operand.vmem [shape: bf16[128,64], index: 1, kind: input, shape index: {}]
  %s2 = inlined_call_operand.vmem [shape: f32[1,64], index: 2, kind: input, shape index: {}]
  %s3 = inlined_call_operand.vmem [shape: bf16[128,64], index: 3, kind: output, shape index: {}]
  %s4 = sld [smem:[#allocation0]]
  $region53: #{icp_encoder_big_forward.4} parent=0
    _
  %s6 = ssub.s32 1, %s4
  %s7 = scalar_select 0, %s6, %s4
  loop: start=0, step=1, limit=4
  $region2: #{icp_encoder_big_forward.4} parent=0 // loop_pre_header
    _
  $region3: #{icp_encoder_big_forward.4} parent=0 // loop_header
    %s9 = sphi 0, %s13
    %p10 = scmp.ge.s32.totalorder %s9, 4
    %s16 = sphi 0, %s35
    %s17 = sphi 0, %s31
    %s18 = sphi 0, %s27
    %s19 = sphi 0, %s16
    %s20 = sphi 0, %s17
    %s21 = sphi 0, %s18
    %s22 = sphi 0, %s19
    %s23 = sphi 0, %s20
    %s24 = sphi 0, %s21
    %s40 = sphi 0, %s42
    %s43 = sphi 0, %s40
    %s44 = sphi 0, %s43
    %s60 = sphi 0, %s44
    %s68 = sphi 0, %s70
    %s71 = sphi 0, %s68
    %s72 = sphi 0, %s71
    %s88 = sphi 0, %s72
    %s94 = sphi 0, %s96
    %s97 = sphi 0, %s94
    %s98 = sphi 0, %s97
    %s114 = sphi 0, %s98
    %s122 = sphi 0, %s124
    %s125 = sphi 0, %s122
    %s126 = sphi 0, %s125
    %s142 = sphi 0, %s126
  $region4: #{icp_encoder_big_forward.4} parent=0 // loop_header_branch
    %12 = sbr.rel (%p10) target = $region8
  $region5: #{icp_encoder_big_forward.4} parent=0 // loop_body
    %s14 = ssub.s32 %s9, 1
    %s15 = ssub.s32 %s9, 2
    %s25 = sadd.s32 1, %s18
    %p26 = scmp.ge.s32.totalorder %s25, 1
    %s27 = scalar_select %p26, 0, %s25
    %s28 = sadd.s32 1, %s17
    %s29 = scalar_select %p26, %s28, %s17
    %p30 = scmp.ge.s32.totalorder %s29, 1
    %s31 = scalar_select %p30, 0, %s29
    %s32 = sadd.s32 1, %s16
    %s33 = scalar_select %p30, %s32, %s16
    %p34 = scmp.ge.s32.totalorder %s33, 2
    %s35 = scalar_select %p34, 0, %s33
    %s36 = ssub.s32 %s16, %s35
    %s37 = ssub.s32 %s18, %s27
    %s38 = sor.u32 %s36, %s37
    %p39 = scmp.eq.s32.totalorder %s38, 0
    %s41 = sadd.s32 %s40, 1
    %s42 = scalar_select %p39, %s40, %s41
    %p45 = pneg %p39
    %p46 = scmp.eq.s32.totalorder %s9, 1
    %p47 = por %p45, %p46
    %p48 = scmp.ne.s32.totalorder %s40, %s43
    %p49 = scmp.eq.s32.totalorder %s9, 0
    %p50 = por %p48, %p49
    %p51 = scmp.ne.s32.totalorder %s40, %s43
    %p52 = scmp.eq.s32.totalorder %s14, 1
    %p53 = por %p51, %p52
    %p54 = scmp.ne.s32.totalorder %s43, %s44
    %p55 = scmp.eq.s32.totalorder %s14, 0
    %p56 = por %p54, %p55
    %p57 = scmp.ne.s32.totalorder %s43, %s44
    %p58 = scmp.eq.s32.totalorder %s15, 1
    %p59 = por %p57, %p58
    %p61 = scmp.ne.s32.totalorder %s44, %s60
    %p62 = scmp.eq.s32.totalorder %s15, 0
    %p63 = por %p61, %p62
    %s64 = ssub.s32 %s18, %s27
    %s65 = ssub.s32 %s17, %s31
    %s66 = sor.u32 %s64, %s65
    %p67 = scmp.eq.s32.totalorder %s66, 0
    %s69 = sadd.s32 %s68, 1
    %s70 = scalar_select %p67, %s68, %s69
    %p73 = pneg %p67
    %p74 = scmp.eq.s32.totalorder %s9, 1
    %p75 = por %p73, %p74
    %p76 = scmp.ne.s32.totalorder %s68, %s71
    %p77 = scmp.eq.s32.totalorder %s9, 0
    %p78 = por %p76, %p77
    %p79 = scmp.ne.s32.totalorder %s68, %s71
    %p80 = scmp.eq.s32.totalorder %s14, 1
    %p81 = por %p79, %p80
    %p82 = scmp.ne.s32.totalorder %s71, %s72
    %p83 = scmp.eq.s32.totalorder %s14, 0
    %p84 = por %p82, %p83
    %p85 = scmp.ne.s32.totalorder %s71, %s72
    %p86 = scmp.eq.s32.totalorder %s15, 1
    %p87 = por %p85, %p86
    %p89 = scmp.ne.s32.totalorder %s72, %s88
    %p90 = scmp.eq.s32.totalorder %s15, 0
    %p91 = por %p89, %p90
    %s92 = ssub.s32 %s17, %s31
    %p93 = scmp.eq.s32.totalorder %s92, 0
    %s95 = sadd.s32 %s94, 1
    %s96 = scalar_select %p93, %s94, %s95
    %p99 = pneg %p93
    %p100 = scmp.eq.s32.totalorder %s9, 1
    %p101 = por %p99, %p100
    %p102 = scmp.ne.s32.totalorder %s94, %s97
    %p103 = scmp.eq.s32.totalorder %s9, 0
    %p104 = por %p102, %p103
    %p105 = scmp.ne.s32.totalorder %s94, %s97
    %p106 = scmp.eq.s32.totalorder %s14, 1
    %p107 = por %p105, %p106
    %p108 = scmp.ne.s32.totalorder %s97, %s98
    %p109 = scmp.eq.s32.totalorder %s14, 0
    %p110 = por %p108, %p109
    %p111 = scmp.ne.s32.totalorder %s97, %s98
    %p112 = scmp.eq.s32.totalorder %s15, 1
    %p113 = por %p111, %p112
    %p115 = scmp.ne.s32.totalorder %s98, %s114
    %p116 = scmp.eq.s32.totalorder %s15, 0
    %p117 = por %p115, %p116
    %s118 = ssub.s32 %s16, %s35
    %s119 = ssub.s32 %s17, %s31
    %s120 = sor.u32 %s118, %s119
    %p121 = scmp.eq.s32.totalorder %s120, 0
    %s123 = sadd.s32 %s122, 1
    %s124 = scalar_select %p121, %s122, %s123
    %p127 = pneg %p121
    %p128 = scmp.eq.s32.totalorder %s9, 1
    %p129 = por %p127, %p128
    %p130 = scmp.ne.s32.totalorder %s122, %s125
    %p131 = scmp.eq.s32.totalorder %s9, 0
    %p132 = por %p130, %p131
    %p133 = scmp.ne.s32.totalorder %s122, %s125
    %p134 = scmp.eq.s32.totalorder %s14, 1
    %p135 = por %p133, %p134
    %p136 = scmp.ne.s32.totalorder %s125, %s126
    %p137 = scmp.eq.s32.totalorder %s14, 0
    %p138 = por %p136, %p137
    %p139 = scmp.ne.s32.totalorder %s125, %s126
    %p140 = scmp.eq.s32.totalorder %s15, 1
    %p141 = por %p139, %p140
    %p143 = scmp.ne.s32.totalorder %s126, %s142
    %p144 = scmp.eq.s32.totalorder %s15, 0
    %p145 = por %p143, %p144
    %p146 = scmp.le.s32.totalorder 1, %s9
    %p147 = scmp.lt.s32.totalorder %s9, 3
    %p148 = pnand %p146, %p147
    %p149 = pneg %p148
    // Predicated region
    $region9: #{icp_encoder_big_forward.4} parent=5 // pred_check
      _
    $region10: #{icp_encoder_big_forward.4} parent=5 // pred_check_branch
      %151 = sbr.rel (%p148) target = $region12
    $region11: #{icp_encoder_big_forward.4} parent=5 // pred_region
      %s152 = ssub.s32 %s9, 1
      // Predicated region
      $region13: #{icp_encoder_big_forward.4} parent=11 // pred_check
        %p153 = pneg %p84
      $region14: #{icp_encoder_big_forward.4} parent=11 // pred_check_branch
        %155 = sbr.rel (%p153) target = $region16
      $region15: #{icp_encoder_big_forward.4} parent=11 // pred_region
        %s156 = smul.u32 16, %s21
        %p157 = scmp.lt.s32.totalorder %s156, 15
        %s158 = scalar_select %p157, %s156, 15
        %p159 = scmp.lt.s32.totalorder %s20, 0
        %s160 = scalar_select %p159, %s20, 0
        %s161 = sadd.s32 %s160, %s158
        %s162 = smul.addr %s161, 4
        %s163 = scalar_lea.vmem %s1, %s162
        %s164 = smul.u32 16, %s21
      $region16: #{icp_encoder_big_forward.4} parent=11 // pred_fallthru
        _
      // Predicated region
      $region17: #{icp_encoder_big_forward.4} parent=11 // pred_check
        %p165 = pneg %p110
      $region18: #{icp_encoder_big_forward.4} parent=11 // pred_check_branch
        %167 = sbr.rel (%p165) target = $region20
      $region19: #{icp_encoder_big_forward.4} parent=11 // pred_region
        %p168 = scmp.lt.s32.totalorder %s20, 0
        %s169 = scalar_select %p168, %s20, 0
        %s170 = scalar_lea.vmem %s2, %s169
      $region20: #{icp_encoder_big_forward.4} parent=11 // pred_fallthru
        _
    $region12: #{icp_encoder_big_forward.4} parent=5 // pred_fallthru
      _
    %p171 = scmp.lt.s32.totalorder %s9, 2
    // Predicated region
    $region21: #{icp_encoder_big_forward.4} parent=5 // pred_check
      %p172 = pneg %p171
    $region22: #{icp_encoder_big_forward.4} parent=5 // pred_check_branch
      %174 = sbr.rel (%p172) target = $region24
    $region23: #{icp_encoder_big_forward.4} parent=5 // pred_region
      // Predicated region
      $region25: #{icp_encoder_big_forward.4} parent=23 // pred_check
        %p175 = pneg %p50
      $region26: #{icp_encoder_big_forward.4} parent=23 // pred_check_branch
        %177 = sbr.rel (%p175) target = $region28
      $region27: #{icp_encoder_big_forward.4} parent=23 // pred_region
        %s178 = smul.u32 8, %s16
        %p179 = scmp.lt.s32.totalorder %s178, 15
        %s180 = scalar_select %p179, %s178, 15
        %p181 = scmp.lt.s32.totalorder %s18, 0
        %s182 = scalar_select %p181, %s18, 0
        %s183 = sadd.s32 %s182, %s180
        %s184 = smul.addr %s183, 4
        %s185 = scalar_lea.vmem %s0, %s184
        %s186 = smul.u32 8, %s16
      $region28: #{icp_encoder_big_forward.4} parent=23 // pred_fallthru
        _
    $region24: #{icp_encoder_big_forward.4} parent=5 // pred_fallthru
      _
    %p187 = scmp.le.s32.totalorder 1, %s9
    %p188 = scmp.lt.s32.totalorder %s9, 3
    %p189 = pnand %p187, %p188
    %p190 = pneg %p189
    // Predicated region
    $region29: #{icp_encoder_big_forward.4} parent=5 // pred_check
      _
    $region30: #{icp_encoder_big_forward.4} parent=5 // pred_check_branch
      %192 = sbr.rel (%p189) target = $region32
    $region31: #{icp_encoder_big_forward.4} parent=5 // pred_region
      %s193 = ssub.s32 %s9, 1
      %s194 = smul.u32 8, %s19
      %p195 = scmp.lt.s32.totalorder %s194, 15
      %s196 = scalar_select %p195, %s194, 15
      %p197 = scmp.lt.s32.totalorder %s21, 0
      %s198 = scalar_select %p197, %s21, 0
      %s199 = sadd.s32 %s198, %s196
      %s200 = smul.addr %s199, 4
      %s201 = scalar_lea.vmem %s0, %s200
      %p202 = pneg %p56
      %p203 = pneg %p53
      %s204 = smul.u32 16, %s21
      %p205 = scmp.lt.s32.totalorder %s204, 15
      %s206 = scalar_select %p205, %s204, 15
      %p207 = scmp.lt.s32.totalorder %s20, 0
      %s208 = scalar_select %p207, %s20, 0
      %s209 = sadd.s32 %s208, %s206
      %s210 = smul.addr %s209, 4
      %s211 = scalar_lea.vmem %s1, %s210
      %p212 = pneg %p84
      %p213 = pneg %p81
      %p214 = scmp.lt.s32.totalorder %s20, 0
      %s215 = scalar_select %p214, %s20, 0
      %s216 = scalar_lea.vmem %s2, %s215
      %p217 = pneg %p110
      %p218 = pneg %p107
      %p219 = pneg %p138
      %p220 = pneg %p135
      %s221 = smul.u32 8, %s19
      %p222 = scmp.lt.s32.totalorder %s221, 15
      %s223 = scalar_select %p222, %s221, 15
      %p224 = scmp.lt.s32.totalorder %s20, 0
      %s225 = scalar_select %p224, %s20, 0
      %s226 = sadd.s32 %s225, %s223
      %s227 = smul.addr %s226, 4
      %s228 = scalar_lea.vmem %s3, %s227
      %s229 = smul.u32 8, %s19
      %p230 = scmp.lt.s32.totalorder %s229, 15
      %s231 = scalar_select %p230, %s229, 15
      %p232 = scmp.lt.s32.totalorder %s21, 0
      %s233 = scalar_select %p232, %s21, 0
      %s234 = sadd.s32 %s233, %s231
      %s235 = smul.addr %s234, 4
      %s236 = scalar_lea.vmem %s0, %s235
      %s237 = smul.u32 8, %s19
      %s238 = smul.u32 16, %s21
      %p239 = scmp.lt.s32.totalorder %s238, 15
      %s240 = scalar_select %p239, %s238, 15
      %p241 = scmp.lt.s32.totalorder %s20, 0
      %s242 = scalar_select %p241, %s20, 0
      %s243 = sadd.s32 %s242, %s240
      %s244 = smul.addr %s243, 4
      %s245 = scalar_lea.vmem %s1, %s244
      %s246 = smul.u32 16, %s21
      %p247 = scmp.lt.s32.totalorder %s20, 0
      %s248 = scalar_select %p247, %s20, 0
      %s249 = scalar_lea.vmem %s2, %s248
      %s250 = smul.u32 8, %s19
      %p251 = scmp.lt.s32.totalorder %s250, 15
      %s252 = scalar_select %p251, %s250, 15
      %p253 = scmp.lt.s32.totalorder %s20, 0
      %s254 = scalar_select %p253, %s20, 0
      %s255 = sadd.s32 %s254, %s252
      %s256 = smul.addr %s255, 4
      %s257 = scalar_lea.vmem %s3, %s256
      %s258 = smul.u32 8, %s19
      %p260 = scmp.eq.s32.totalorder %s21, 0
      // Predicated region
      $region33: #{icp_encoder_big_forward.4} parent=31 // pred_check
        %p261 = pneg %p260
      $region34: #{icp_encoder_big_forward.4} parent=31 // pred_check_branch
        %263 = sbr.rel (%p261) target = $region36
      $region35: #{icp_encoder_big_forward.4} parent=31 // pred_region
        %vm264 = vcmask 523264
        %265 = vst.msk [vmem:[#allocation2] sm:$0xff] %vm264, 0.0
        %266 = vst.msk [vmem:[#allocation2 + $0x8] sm:$0xff] %vm264, 0.0
        %267 = vst.msk [vmem:[#allocation2 + $0x10] sm:$0xff] %vm264, 0.0
        %268 = vst.msk [vmem:[#allocation2 + $0x18] sm:$0xff] %vm264, 0.0
        %269 = vst.msk [vmem:[#allocation2 + $0x20] sm:$0xff] %vm264, 0.0
        %270 = vst.msk [vmem:[#allocation2 + $0x28] sm:$0xff] %vm264, 0.0
        %271 = vst.msk [vmem:[#allocation2 + $0x30] sm:$0xff] %vm264, 0.0
        %272 = vst.msk [vmem:[#allocation2 + $0x38] sm:$0xff] %vm264, 0.0
      $region36: #{icp_encoder_big_forward.4} parent=31 // pred_fallthru
        _
      %v273 = vld [vmem:[#allocation2] sm:$0xff]
      %v274 = vld [vmem:[#allocation2 + $0x8] sm:$0xff]
      %v275 = vld [vmem:[#allocation2 + $0x10] sm:$0xff]
      %v276 = vld [vmem:[#allocation2 + $0x18] sm:$0xff]
      %v277 = vld [vmem:[#allocation2 + $0x20] sm:$0xff]
      %v278 = vld [vmem:[#allocation2 + $0x28] sm:$0xff]
      %v279 = vld [vmem:[#allocation2 + $0x30] sm:$0xff]
      %v280 = vld [vmem:[#allocation2 + $0x38] sm:$0xff]
      %v281 = vld [vmem:[%s236] sm:$0xf]
      %v282 = vld [vmem:[%s236 + $0x4] sm:$0xf]
      %v283 = vld [vmem:[%s236 + $0x8] sm:$0xf]
      %v284 = vld [vmem:[%s236 + $0xc] sm:$0xf]
      %v285 = vld [vmem:[%s236 + $0x10] sm:$0xf]
      %v286 = vld [vmem:[%s236 + $0x14] sm:$0xf]
      %v287 = vld [vmem:[%s236 + $0x18] sm:$0xf]
      %v288 = vld [vmem:[%s236 + $0x1c] sm:$0xf]
      %v289 = vld [vmem:[%s245] sm:$0xf]
      %v290 = vld [vmem:[%s245 + $0x4] sm:$0xf]
      %v291 = vld [vmem:[%s245 + $0x8] sm:$0xf]
      %v292 = vld [vmem:[%s245 + $0xc] sm:$0xf]
      %v293 = vld [vmem:[%s245 + $0x10] sm:$0xf]
      %v294 = vld [vmem:[%s245 + $0x14] sm:$0xf]
      %v295 = vld [vmem:[%s245 + $0x18] sm:$0xf]
      %v296 = vld [vmem:[%s245 + $0x1c] sm:$0xf]
      %v297 = vld [vmem:[%s245 + $0x20] sm:$0xf]
      %v298 = vld [vmem:[%s245 + $0x24] sm:$0xf]
      %v299 = vld [vmem:[%s245 + $0x28] sm:$0xf]
      %v300 = vld [vmem:[%s245 + $0x2c] sm:$0xf]
      %v301 = vld [vmem:[%s245 + $0x30] sm:$0xf]
      %v302 = vld [vmem:[%s245 + $0x34] sm:$0xf]
      %v303 = vld [vmem:[%s245 + $0x38] sm:$0xf]
      %v304 = vld [vmem:[%s245 + $0x3c] sm:$0xf]
      %v313 = vunpack.c.l.b16 %v281
      %v314 = vunpack.c.l.b16 %v282
      %v315 = vunpack.c.l.b16 %v283
      %v316 = vunpack.c.l.b16 %v284
      %v317 = vunpack.c.l.b16 %v285
      %v318 = vunpack.c.l.b16 %v286
      %v319 = vunpack.c.l.b16 %v287
      %v320 = vunpack.c.l.b16 %v288
      %v321 = vpack.c.b16 %v314, %v313
      %v322 = vpack.c.b16 %v316, %v315
      %v323 = vpack.c.b16 %v318, %v317
      %v324 = vpack.c.b16 %v320, %v319
      %v345 = vunpack.c.l.b16 %v289
      %v346 = vunpack.c.l.b16 %v290
      %v347 = vunpack.c.l.b16 %v291
      %v348 = vunpack.c.l.b16 %v292
      %v349 = vunpack.c.l.b16 %v293
      %v350 = vunpack.c.l.b16 %v294
      %v351 = vunpack.c.l.b16 %v295
      %v352 = vunpack.c.l.b16 %v296
      %v353 = vunpack.c.l.b16 %v297
      %v354 = vunpack.c.l.b16 %v298
      %v355 = vunpack.c.l.b16 %v299
      %v356 = vunpack.c.l.b16 %v300
      %v357 = vunpack.c.l.b16 %v301
      %v358 = vunpack.c.l.b16 %v302
      %v359 = vunpack.c.l.b16 %v303
      %v360 = vunpack.c.l.b16 %v304
      %v361 = vpack.c.b16 %v346, %v345
      %v362 = vpack.c.b16 %v348, %v347
      %v363 = vpack.c.b16 %v350, %v349
      %v364 = vpack.c.b16 %v352, %v351
      %v365 = vpack.c.b16 %v354, %v353
      %v366 = vpack.c.b16 %v356, %v355
      %v367 = vpack.c.b16 %v358, %v357
      %v368 = vpack.c.b16 %v360, %v359
      %377 = vmatprep.subr.bf16.mxu0 0
      %378 = vmatpush1.bf16.msra.mxu0 %v368
      %379 = vmatprep.subr.bf16.mxu0 0
      %380 = vmatpush1.bf16.msra.mxu0 %v367
      %381 = vmatprep.subr.bf16.mxu0 0
      %382 = vmatpush1.bf16.msra.mxu0 %v366
      %383 = vmatprep.subr.bf16.mxu0 0
      %384 = vmatpush1.bf16.msra.mxu0 %v365
      %385 = vmatprep.subr.bf16.mxu0 0
      %386 = vmatpush1.bf16.msra.mxu0 %v364
      %387 = vmatprep.subr.bf16.mxu0 0
      %388 = vmatpush1.bf16.msra.mxu0 %v363
      %389 = vmatprep.subr.bf16.mxu0 0
      %390 = vmatpush1.bf16.msra.mxu0 %v362
      %391 = vmatprep.subr.bf16.mxu0 0
      %392 = vmatpush1.bf16.msra.mxu0 %v361
      %393 = vmatprep.subr.bf16.mxu0 0
      %394 = vmatpush2.bf16.msra.mxu0 0
      %395 = vmatprep.subr.bf16.mxu0 0
      %396 = vmatpush2.bf16.msra.mxu0 0
      %397 = vmatprep.subr.bf16.mxu0 0
      %398 = vmatpush2.bf16.msra.mxu0 0
      %399 = vmatprep.subr.bf16.mxu0 0
      %400 = vmatpush2.bf16.msra.mxu0 0
      %401 = vmatprep.subr.bf16.mxu0 0
      %402 = vmatpush2.bf16.msra.mxu0 0
      %403 = vmatprep.subr.bf16.mxu0 0
      %404 = vmatpush2.bf16.msra.mxu0 0
      %405 = vmatprep.subr.bf16.mxu0 0
      %406 = vmatpush2.bf16.msra.mxu0 0
      %407 = vmatprep.subr.bf16.mxu0 0
      %408 = vmatpush2.bf16.msra.mxu0 0
      %409 = vmatprep.mubr.bf16.mxu0 0
      %410 = vmatmul.mubr.bf16.gmra.mxu0 %v321
      %v411 = vpop.f32.mrf.mxu0
      %v412 = vadd.f32 0.0, %v411
      %v413 = vpop.f32.mrf.mxu0
      %v414 = vpop.f32.mrf.mxu0
      %v415 = vadd.f32 0.0, %v414
      %v416 = vpop.f32.mrf.mxu0
      %417 = vmatprep.mubr.bf16.mxu0 0
      %418 = vmatmul.mubr.bf16.gmra.mxu0 %v322
      %v419 = vpop.f32.mrf.mxu0
      %v420 = vadd.f32 0.0, %v419
      %v421 = vpop.f32.mrf.mxu0
      %v422 = vpop.f32.mrf.mxu0
      %v423 = vadd.f32 0.0, %v422
      %v424 = vpop.f32.mrf.mxu0
      %425 = vmatprep.mubr.bf16.mxu0 0
      %426 = vmatmul.mubr.bf16.gmra.mxu0 %v323
      %v427 = vpop.f32.mrf.mxu0
      %v428 = vadd.f32 0.0, %v427
      %v429 = vpop.f32.mrf.mxu0
      %v430 = vpop.f32.mrf.mxu0
      %v431 = vadd.f32 0.0, %v430
      %v432 = vpop.f32.mrf.mxu0
      %433 = vmatprep.mubr.bf16.mxu0 0
      %434 = vmatmul.mubr.bf16.gmra.mxu0 %v324
      %v435 = vpop.f32.mrf.mxu0
      %v436 = vadd.f32 0.0, %v435
      %v437 = vpop.f32.mrf.mxu0
      %v438 = vpop.f32.mrf.mxu0
      %v439 = vadd.f32 0.0, %v438
      %v440 = vpop.f32.mrf.mxu0
      %441 = vdwg.mxu0
      %v442 = vadd.f32 %v273, %v412
      %v443 = vadd.f32 %v274, %v415
      %v444 = vadd.f32 %v275, %v420
      %v445 = vadd.f32 %v276, %v423
      %v446 = vadd.f32 %v277, %v428
      %v447 = vadd.f32 %v278, %v431
      %v448 = vadd.f32 %v279, %v436
      %v449 = vadd.f32 %v280, %v439
      %vm450 = vcmask 523264
      %451 = vst.msk [vmem:[#allocation2] sm:$0xff] %vm450, %v442
      %452 = vst.msk [vmem:[#allocation2 + $0x8] sm:$0xff] %vm450, %v443
      %453 = vst.msk [vmem:[#allocation2 + $0x10] sm:$0xff] %vm450, %v444
      %454 = vst.msk [vmem:[#allocation2 + $0x18] sm:$0xff] %vm450, %v445
      %455 = vst.msk [vmem:[#allocation2 + $0x20] sm:$0xff] %vm450, %v446
      %456 = vst.msk [vmem:[#allocation2 + $0x28] sm:$0xff] %vm450, %v447
      %457 = vst.msk [vmem:[#allocation2 + $0x30] sm:$0xff] %vm450, %v448
      %458 = vst.msk [vmem:[#allocation2 + $0x38] sm:$0xff] %vm450, %v449
      // Predicated region
      $region37: #{icp_encoder_big_forward.4} parent=31 // pred_check
        %p459 = pneg %p260
      $region38: #{icp_encoder_big_forward.4} parent=31 // pred_check_branch
        %461 = sbr.rel (%p459) target = $region40
      $region39: #{icp_encoder_big_forward.4} parent=31 // pred_region
        %v462 = vld [vmem:[#allocation2] sm:$0xff]
        %v463 = vld [vmem:[#allocation2 + $0x8] sm:$0xff]
        %v464 = vld [vmem:[#allocation2 + $0x10] sm:$0xff]
        %v465 = vld [vmem:[#allocation2 + $0x18] sm:$0xff]
        %v466 = vld [vmem:[#allocation2 + $0x20] sm:$0xff]
        %v467 = vld [vmem:[#allocation2 + $0x28] sm:$0xff]
        %v468 = vld [vmem:[#allocation2 + $0x30] sm:$0xff]
        %v469 = vld [vmem:[#allocation2 + $0x38] sm:$0xff]
        %v470 = vld [vmem:[%s249] sm:$0x1]
        %v472 = vlaneseq
        %v473 = vshrl.u32 %v472, 7
        %v474 = vsub.s32 0, %v473
        %v475 = vrot.slane %v470, %v474
        %v477 = vadd.f32 %v462, %v475
        %v478 = vadd.f32 %v463, %v475
        %v479 = vadd.f32 %v464, %v475
        %v480 = vadd.f32 %v465, %v475
        %v481 = vadd.f32 %v466, %v475
        %v482 = vadd.f32 %v467, %v475
        %v483 = vadd.f32 %v468, %v475
        %v484 = vadd.f32 %v469, %v475
        %vm485 = vcmp.ge.f32.partialorder %v477, 0.0
        %vm486 = vcmp.ge.f32.partialorder %v478, 0.0
        %vm487 = vcmp.ge.f32.partialorder %v479, 0.0
        %vm488 = vcmp.ge.f32.partialorder %v480, 0.0
        %vm489 = vcmp.ge.f32.partialorder %v481, 0.0
        %vm490 = vcmp.ge.f32.partialorder %v482, 0.0
        %vm491 = vcmp.ge.f32.partialorder %v483, 0.0
        %vm492 = vcmp.ge.f32.partialorder %v484, 0.0
        %v493 = vmul.f32 %v477, 0.2
        %v494 = vmul.f32 %v478, 0.2
        %v495 = vmul.f32 %v479, 0.2
        %v496 = vmul.f32 %v480, 0.2
        %v497 = vmul.f32 %v481, 0.2
        %v498 = vmul.f32 %v482, 0.2
        %v499 = vmul.f32 %v483, 0.2
        %v500 = vmul.f32 %v484, 0.2
        %v501 = vsel %vm485, %v477, %v493
        %v502 = vsel %vm486, %v478, %v494
        %v503 = vsel %vm487, %v479, %v495
        %v504 = vsel %vm488, %v480, %v496
        %v505 = vsel %vm489, %v481, %v497
        %v506 = vsel %vm490, %v482, %v498
        %v507 = vsel %vm491, %v483, %v499
        %v508 = vsel %vm492, %v484, %v500
        %v509 = vpack.c.bf16 %v502, %v501
        %v510 = vpack.c.bf16 %v504, %v503
        %v511 = vpack.c.bf16 %v506, %v505
        %v512 = vpack.c.bf16 %v508, %v507
        %v517 = vunpack.c.l.b16 %v509
        %v518 = vunpack.c.h.b16 %v509
        %v519 = vunpack.c.l.b16 %v510
        %v520 = vunpack.c.h.b16 %v510
        %v521 = vunpack.c.l.b16 %v511
        %v522 = vunpack.c.h.b16 %v511
        %v523 = vunpack.c.l.b16 %v512
        %v524 = vunpack.c.h.b16 %v512
        %v525 = vpack.c.b16 %v517, %v517
        %v526 = vpack.c.b16 %v518, %v518
        %v527 = vpack.c.b16 %v519, %v519
        %v528 = vpack.c.b16 %v520, %v520
        %v529 = vpack.c.b16 %v521, %v521
        %v530 = vpack.c.b16 %v522, %v522
        %v531 = vpack.c.b16 %v523, %v523
        %v532 = vpack.c.b16 %v524, %v524
        %vm541 = vcmask 519168
        %542 = vst.msk [vmem:[%s257] sm:$0xf] %vm541, %v525
        %543 = vst.msk [vmem:[%s257 + $0x4] sm:$0xf] %vm541, %v526
        %544 = vst.msk [vmem:[%s257 + $0x8] sm:$0xf] %vm541, %v527
        %545 = vst.msk [vmem:[%s257 + $0xc] sm:$0xf] %vm541, %v528
        %546 = vst.msk [vmem:[%s257 + $0x10] sm:$0xf] %vm541, %v529
        %547 = vst.msk [vmem:[%s257 + $0x14] sm:$0xf] %vm541, %v530
        %548 = vst.msk [vmem:[%s257 + $0x18] sm:$0xf] %vm541, %v531
        %549 = vst.msk [vmem:[%s257 + $0x1c] sm:$0xf] %vm541, %v532
      $region40: #{icp_encoder_big_forward.4} parent=31 // pred_fallthru
        _
      %s550 = smul.u32 8, %s19
      %p551 = scmp.lt.s32.totalorder %s550, 15
      %s552 = scalar_select %p551, %s550, 15
      %p553 = scmp.lt.s32.totalorder %s20, 0
      %s554 = scalar_select %p553, %s20, 0
      %s555 = sadd.s32 %s554, %s552
      %s556 = smul.addr %s555, 4
      %s557 = scalar_lea.vmem %s3, %s556
      // Predicated region
      $region41: #{icp_encoder_big_forward.4} parent=31 // pred_check
        %p558 = pneg %p135
      $region42: #{icp_encoder_big_forward.4} parent=31 // pred_check_branch
        %560 = sbr.rel (%p558) target = $region44
      $region43: #{icp_encoder_big_forward.4} parent=31 // pred_region
        %s561 = smul.u32 8, %s19
      $region44: #{icp_encoder_big_forward.4} parent=31 // pred_fallthru
        _
    $region32: #{icp_encoder_big_forward.4} parent=5 // pred_fallthru
      _
    %p562 = scmp.le.s32.totalorder 2, %s9
    // Predicated region
    $region45: #{icp_encoder_big_forward.4} parent=5 // pred_check
      %p563 = pneg %p562
    $region46: #{icp_encoder_big_forward.4} parent=5 // pred_check_branch
      %565 = sbr.rel (%p563) target = $region48
    $region47: #{icp_encoder_big_forward.4} parent=5 // pred_region
      %s566 = ssub.s32 %s9, 2
      // Predicated region
      $region49: #{icp_encoder_big_forward.4} parent=47 // pred_check
        %p567 = pneg %p141
      $region50: #{icp_encoder_big_forward.4} parent=47 // pred_check_branch
        %569 = sbr.rel (%p567) target = $region52
      $region51: #{icp_encoder_big_forward.4} parent=47 // pred_region
        %s570 = smul.u32 8, %s22
        %p571 = scmp.lt.s32.totalorder %s570, 15
        %s572 = scalar_select %p571, %s570, 15
        %p573 = scmp.lt.s32.totalorder %s23, 0
        %s574 = scalar_select %p573, %s23, 0
        %s575 = sadd.s32 %s574, %s572
        %s576 = smul.addr %s575, 4
        %s577 = scalar_lea.vmem %s3, %s576
      $region52: #{icp_encoder_big_forward.4} parent=47 // pred_fallthru
        _
    $region48: #{icp_encoder_big_forward.4} parent=5 // pred_fallthru
      _
  $region6: #{icp_encoder_big_forward.4} parent=0 // loop_footer
    %s13 = sadd.s32 1, %s9
  $region7: #{icp_encoder_big_forward.4} parent=0 // loop_footer_branch
    %8 = sbr.rel target = $region3
  $region8: #{icp_encoder_big_forward.4} parent=0 // loop_exit
    _

// kernel: icp_encoder_big_forward.6
$region0: #{icp_encoder_big_forward.6}
  #allocation0 [shape = 'u32[]', space=smem, size = 0x4, offset = 0x4, fixed_abs, tag = 'smem constant byte address 0x4 - core index']
  #allocation1 [shape = 'u32[144,128]{1,0:T(1,128)}', space=vmem, size = 0x12000, scoped, tag = 'internal scratch']
  %s0 = inlined_call_operand.vmem [shape: bf16[32,128], index: 0, kind: input, shape index: {}]
  %s1 = inlined_call_operand.vmem [shape: f32[1,128], index: 1, kind: input, shape index: {}]
  %s2 = inlined_call_operand.vmem [shape: f32[1,128], index: 2, kind: input, shape index: {}]
  %s3 = inlined_call_operand.vmem [shape: bf16[32,128], index: 3, kind: output, shape index: {}]
  %s4 = sld [smem:[#allocation0]]
  $region45: #{icp_encoder_big_forward.6} parent=0
    _
  %s6 = ssub.s32 1, %s4
  %s7 = scalar_select 0, %s6, %s4
  loop: start=0, step=1, limit=4
  $region2: #{icp_encoder_big_forward.6} parent=0 // loop_pre_header
    _
  $region3: #{icp_encoder_big_forward.6} parent=0 // loop_header
    %s9 = sphi 0, %s13
    %p10 = scmp.ge.s32.totalorder %s9, 4
    %s16 = sphi 0, %s28
    %s17 = sphi 0, %s24
    %s18 = sphi 0, %s16
    %s19 = sphi 0, %s17
    %s20 = sphi 0, %s18
    %s21 = sphi 0, %s19
    %s33 = sphi 0, %s35
    %s36 = sphi 0, %s33
    %s37 = sphi 0, %s36
    %s53 = sphi 0, %s37
    %s59 = sphi 0, %s61
    %s62 = sphi 0, %s59
    %s63 = sphi 0, %s62
    %s79 = sphi 0, %s63
    %s85 = sphi 0, %s87
    %s88 = sphi 0, %s85
    %s89 = sphi 0, %s88
    %s105 = sphi 0, %s89
    %s113 = sphi 0, %s115
    %s116 = sphi 0, %s113
    %s117 = sphi 0, %s116
    %s133 = sphi 0, %s117
  $region4: #{icp_encoder_big_forward.6} parent=0 // loop_header_branch
    %12 = sbr.rel (%p10) target = $region8
  $region5: #{icp_encoder_big_forward.6} parent=0 // loop_body
    %s14 = ssub.s32 %s9, 1
    %s15 = ssub.s32 %s9, 2
    %s22 = sadd.s32 1, %s17
    %p23 = scmp.ge.s32.totalorder %s22, 1
    %s24 = scalar_select %p23, 0, %s22
    %s25 = sadd.s32 1, %s16
    %s26 = scalar_select %p23, %s25, %s16
    %p27 = scmp.ge.s32.totalorder %s26, 2
    %s28 = scalar_select %p27, 0, %s26
    %s29 = ssub.s32 %s16, %s28
    %s30 = ssub.s32 %s17, %s24
    %s31 = sor.u32 %s29, %s30
    %p32 = scmp.eq.s32.totalorder %s31, 0
    %s34 = sadd.s32 %s33, 1
    %s35 = scalar_select %p32, %s33, %s34
    %p38 = pneg %p32
    %p39 = scmp.eq.s32.totalorder %s9, 1
    %p40 = por %p38, %p39
    %p41 = scmp.ne.s32.totalorder %s33, %s36
    %p42 = scmp.eq.s32.totalorder %s9, 0
    %p43 = por %p41, %p42
    %p44 = scmp.ne.s32.totalorder %s33, %s36
    %p45 = scmp.eq.s32.totalorder %s14, 1
    %p46 = por %p44, %p45
    %p47 = scmp.ne.s32.totalorder %s36, %s37
    %p48 = scmp.eq.s32.totalorder %s14, 0
    %p49 = por %p47, %p48
    %p50 = scmp.ne.s32.totalorder %s36, %s37
    %p51 = scmp.eq.s32.totalorder %s15, 1
    %p52 = por %p50, %p51
    %p54 = scmp.ne.s32.totalorder %s37, %s53
    %p55 = scmp.eq.s32.totalorder %s15, 0
    %p56 = por %p54, %p55
    %s57 = ssub.s32 %s17, %s24
    %p58 = scmp.eq.s32.totalorder %s57, 0
    %s60 = sadd.s32 %s59, 1
    %s61 = scalar_select %p58, %s59, %s60
    %p64 = pneg %p58
    %p65 = scmp.eq.s32.totalorder %s9, 1
    %p66 = por %p64, %p65
    %p67 = scmp.ne.s32.totalorder %s59, %s62
    %p68 = scmp.eq.s32.totalorder %s9, 0
    %p69 = por %p67, %p68
    %p70 = scmp.ne.s32.totalorder %s59, %s62
    %p71 = scmp.eq.s32.totalorder %s14, 1
    %p72 = por %p70, %p71
    %p73 = scmp.ne.s32.totalorder %s62, %s63
    %p74 = scmp.eq.s32.totalorder %s14, 0
    %p75 = por %p73, %p74
    %p76 = scmp.ne.s32.totalorder %s62, %s63
    %p77 = scmp.eq.s32.totalorder %s15, 1
    %p78 = por %p76, %p77
    %p80 = scmp.ne.s32.totalorder %s63, %s79
    %p81 = scmp.eq.s32.totalorder %s15, 0
    %p82 = por %p80, %p81
    %s83 = ssub.s32 %s17, %s24
    %p84 = scmp.eq.s32.totalorder %s83, 0
    %s86 = sadd.s32 %s85, 1
    %s87 = scalar_select %p84, %s85, %s86
    %p90 = pneg %p84
    %p91 = scmp.eq.s32.totalorder %s9, 1
    %p92 = por %p90, %p91
    %p93 = scmp.ne.s32.totalorder %s85, %s88
    %p94 = scmp.eq.s32.totalorder %s9, 0
    %p95 = por %p93, %p94
    %p96 = scmp.ne.s32.totalorder %s85, %s88
    %p97 = scmp.eq.s32.totalorder %s14, 1
    %p98 = por %p96, %p97
    %p99 = scmp.ne.s32.totalorder %s88, %s89
    %p100 = scmp.eq.s32.totalorder %s14, 0
    %p101 = por %p99, %p100
    %p102 = scmp.ne.s32.totalorder %s88, %s89
    %p103 = scmp.eq.s32.totalorder %s15, 1
    %p104 = por %p102, %p103
    %p106 = scmp.ne.s32.totalorder %s89, %s105
    %p107 = scmp.eq.s32.totalorder %s15, 0
    %p108 = por %p106, %p107
    %s109 = ssub.s32 %s16, %s28
    %s110 = ssub.s32 %s17, %s24
    %s111 = sor.u32 %s109, %s110
    %p112 = scmp.eq.s32.totalorder %s111, 0
    %s114 = sadd.s32 %s113, 1
    %s115 = scalar_select %p112, %s113, %s114
    %p118 = pneg %p112
    %p119 = scmp.eq.s32.totalorder %s9, 1
    %p120 = por %p118, %p119
    %p121 = scmp.ne.s32.totalorder %s113, %s116
    %p122 = scmp.eq.s32.totalorder %s9, 0
    %p123 = por %p121, %p122
    %p124 = scmp.ne.s32.totalorder %s113, %s116
    %p125 = scmp.eq.s32.totalorder %s14, 1
    %p126 = por %p124, %p125
    %p127 = scmp.ne.s32.totalorder %s116, %s117
    %p128 = scmp.eq.s32.totalorder %s14, 0
    %p129 = por %p127, %p128
    %p130 = scmp.ne.s32.totalorder %s116, %s117
    %p131 = scmp.eq.s32.totalorder %s15, 1
    %p132 = por %p130, %p131
    %p134 = scmp.ne.s32.totalorder %s117, %s133
    %p135 = scmp.eq.s32.totalorder %s15, 0
    %p136 = por %p134, %p135
    %p137 = scmp.le.s32.totalorder 1, %s9
    %p138 = scmp.lt.s32.totalorder %s9, 3
    %p139 = pnand %p137, %p138
    %p140 = pneg %p139
    // Predicated region
    $region9: #{icp_encoder_big_forward.6} parent=5 // pred_check
      _
    $region10: #{icp_encoder_big_forward.6} parent=5 // pred_check_branch
      %142 = sbr.rel (%p139) target = $region12
    $region11: #{icp_encoder_big_forward.6} parent=5 // pred_region
      %s143 = ssub.s32 %s9, 1
      // Predicated region
      $region13: #{icp_encoder_big_forward.6} parent=11 // pred_check
        %p144 = pneg %p75
      $region14: #{icp_encoder_big_forward.6} parent=11 // pred_check_branch
        %146 = sbr.rel (%p144) target = $region16
      $region15: #{icp_encoder_big_forward.6} parent=11 // pred_region
        %p147 = scmp.lt.s32.totalorder %s19, 0
        %s148 = scalar_select %p147, %s19, 0
        %s149 = scalar_lea.vmem %s1, %s148
      $region16: #{icp_encoder_big_forward.6} parent=11 // pred_fallthru
        _
      // Predicated region
      $region17: #{icp_encoder_big_forward.6} parent=11 // pred_check
        %p150 = pneg %p101
      $region18: #{icp_encoder_big_forward.6} parent=11 // pred_check_branch
        %152 = sbr.rel (%p150) target = $region20
      $region19: #{icp_encoder_big_forward.6} parent=11 // pred_region
        %p153 = scmp.lt.s32.totalorder %s19, 0
        %s154 = scalar_select %p153, %s19, 0
        %s155 = scalar_lea.vmem %s2, %s154
      $region20: #{icp_encoder_big_forward.6} parent=11 // pred_fallthru
        _
    $region12: #{icp_encoder_big_forward.6} parent=5 // pred_fallthru
      _
    %p156 = scmp.lt.s32.totalorder %s9, 2
    // Predicated region
    $region21: #{icp_encoder_big_forward.6} parent=5 // pred_check
      %p157 = pneg %p156
    $region22: #{icp_encoder_big_forward.6} parent=5 // pred_check_branch
      %159 = sbr.rel (%p157) target = $region24
    $region23: #{icp_encoder_big_forward.6} parent=5 // pred_region
      // Predicated region
      $region25: #{icp_encoder_big_forward.6} parent=23 // pred_check
        %p160 = pneg %p43
      $region26: #{icp_encoder_big_forward.6} parent=23 // pred_check_branch
        %162 = sbr.rel (%p160) target = $region28
      $region27: #{icp_encoder_big_forward.6} parent=23 // pred_region
        %s163 = smul.u32 2, %s16
        %p164 = scmp.lt.s32.totalorder %s163, 3
        %s165 = scalar_select %p164, %s163, 3
        %p166 = scmp.lt.s32.totalorder %s17, 0
        %s167 = scalar_select %p166, %s17, 0
        %s168 = sadd.s32 %s167, %s165
        %s169 = smul.addr %s168, 4
        %s170 = scalar_lea.vmem %s0, %s169
        %s171 = smul.u32 2, %s16
      $region28: #{icp_encoder_big_forward.6} parent=23 // pred_fallthru
        _
    $region24: #{icp_encoder_big_forward.6} parent=5 // pred_fallthru
      _
    %p172 = scmp.le.s32.totalorder 1, %s9
    %p173 = scmp.lt.s32.totalorder %s9, 3
    %p174 = pnand %p172, %p173
    %p175 = pneg %p174
    // Predicated region
    $region29: #{icp_encoder_big_forward.6} parent=5 // pred_check
      _
    $region30: #{icp_encoder_big_forward.6} parent=5 // pred_check_branch
      %177 = sbr.rel (%p174) target = $region32
    $region31: #{icp_encoder_big_forward.6} parent=5 // pred_region
      %s178 = ssub.s32 %s9, 1
      %s179 = smul.u32 2, %s18
      %p180 = scmp.lt.s32.totalorder %s179, 3
      %s181 = scalar_select %p180, %s179, 3
      %p182 = scmp.lt.s32.totalorder %s19, 0
      %s183 = scalar_select %p182, %s19, 0
      %s184 = sadd.s32 %s183, %s181
      %s185 = smul.addr %s184, 4
      %s186 = scalar_lea.vmem %s0, %s185
      %p187 = pneg %p49
      %p188 = pneg %p46
      %p189 = scmp.lt.s32.totalorder %s19, 0
      %s190 = scalar_select %p189, %s19, 0
      %s191 = scalar_lea.vmem %s1, %s190
      %p192 = pneg %p75
      %p193 = pneg %p72
      %p194 = scmp.lt.s32.totalorder %s19, 0
      %s195 = scalar_select %p194, %s19, 0
      %s196 = scalar_lea.vmem %s2, %s195
      %p197 = pneg %p101
      %p198 = pneg %p98
      %p199 = pneg %p129
      %p200 = pneg %p126
      %s201 = smul.u32 2, %s18
      %p202 = scmp.lt.s32.totalorder %s201, 3
      %s203 = scalar_select %p202, %s201, 3
      %p204 = scmp.lt.s32.totalorder %s19, 0
      %s205 = scalar_select %p204, %s19, 0
      %s206 = sadd.s32 %s205, %s203
      %s207 = smul.addr %s206, 4
      %s208 = scalar_lea.vmem %s3, %s207
      %s209 = smul.u32 2, %s18
      %p210 = scmp.lt.s32.totalorder %s209, 3
      %s211 = scalar_select %p210, %s209, 3
      %p212 = scmp.lt.s32.totalorder %s19, 0
      %s213 = scalar_select %p212, %s19, 0
      %s214 = sadd.s32 %s213, %s211
      %s215 = smul.addr %s214, 4
      %s216 = scalar_lea.vmem %s0, %s215
      %s217 = smul.u32 2, %s18
      %p218 = scmp.lt.s32.totalorder %s19, 0
      %s219 = scalar_select %p218, %s19, 0
      %s220 = scalar_lea.vmem %s1, %s219
      %p221 = scmp.lt.s32.totalorder %s19, 0
      %s222 = scalar_select %p221, %s19, 0
      %s223 = scalar_lea.vmem %s2, %s222
      %s224 = smul.u32 2, %s18
      %p225 = scmp.lt.s32.totalorder %s224, 3
      %s226 = scalar_select %p225, %s224, 3
      %p227 = scmp.lt.s32.totalorder %s19, 0
      %s228 = scalar_select %p227, %s19, 0
      %s229 = sadd.s32 %s228, %s226
      %s230 = smul.addr %s229, 4
      %s231 = scalar_lea.vmem %s3, %s230
      %s232 = smul.u32 2, %s18
      %v233 = vld [vmem:[%s216] sm:$0xf]
      %v234 = vld [vmem:[%s216 + $0x4] sm:$0xf]
      %v235 = vunpack.c.l.bf16 %v233
      %v236 = vunpack.c.l.bf16 %v234
      %v237 = vld [vmem:[%s220] sm:$0x1]
      %v239 = vlaneseq
      %v240 = vshrl.u32 %v239, 7
      %v241 = vsub.s32 0, %v240
      %v242 = vrot.slane %v237, %v241
      %v244 = vmul.f32 %v235, %v242
      %v245 = vmul.f32 %v236, %v242
      %v246 = vld [vmem:[%s223] sm:$0x1]
      %v248 = vlaneseq
      %v249 = vshrl.u32 %v248, 7
      %v250 = vsub.s32 0, %v249
      %v251 = vrot.slane %v246, %v250
      %v253 = vadd.f32 %v244, %v251
      %v254 = vadd.f32 %v245, %v251
      %vm255 = vcmp.ge.f32.partialorder %v253, 0.0
      %vm256 = vcmp.ge.f32.partialorder %v254, 0.0
      %v257 = vmul.f32 %v253, 0.2
      %v258 = vmul.f32 %v254, 0.2
      %v259 = vsel %vm255, %v253, %v257
      %v260 = vsel %vm256, %v254, %v258
      %v261 = vpack.c.bf16 %v260, %v259
      %v263 = vunpack.c.l.b16 %v261
      %v264 = vunpack.c.h.b16 %v261
      %v265 = vpack.c.b16 %v263, %v263
      %v266 = vpack.c.b16 %v264, %v264
      %269 = vst [vmem:[%s231] sm:$0xf] %v265
      %270 = vst [vmem:[%s231 + $0x4] sm:$0xf] %v266
      %s271 = smul.u32 2, %s18
      %p272 = scmp.lt.s32.totalorder %s271, 3
      %s273 = scalar_select %p272, %s271, 3
      %p274 = scmp.lt.s32.totalorder %s19, 0
      %s275 = scalar_select %p274, %s19, 0
      %s276 = sadd.s32 %s275, %s273
      %s277 = smul.addr %s276, 4
      %s278 = scalar_lea.vmem %s3, %s277
      // Predicated region
      $region33: #{icp_encoder_big_forward.6} parent=31 // pred_check
        %p279 = pneg %p126
      $region34: #{icp_encoder_big_forward.6} parent=31 // pred_check_branch
        %281 = sbr.rel (%p279) target = $region36
      $region35: #{icp_encoder_big_forward.6} parent=31 // pred_region
        %s282 = smul.u32 2, %s18
      $region36: #{icp_encoder_big_forward.6} parent=31 // pred_fallthru
        _
    $region32: #{icp_encoder_big_forward.6} parent=5 // pred_fallthru
      _
    %p283 = scmp.le.s32.totalorder 2, %s9
    // Predicated region
    $region37: #{icp_encoder_big_forward.6} parent=5 // pred_check
      %p284 = pneg %p283
    $region38: #{icp_encoder_big_forward.6} parent=5 // pred_check_branch
      %286 = sbr.rel (%p284) target = $region40
    $region39: #{icp_encoder_big_forward.6} parent=5 // pred_region
      %s287 = ssub.s32 %s9, 2
      // Predicated region
      $region41: #{icp_encoder_big_forward.6} parent=39 // pred_check
        %p288 = pneg %p132
      $region42: #{icp_encoder_big_forward.6} parent=39 // pred_check_branch
        %290 = sbr.rel (%p288) target = $region44
      $region43: #{icp_encoder_big_forward.6} parent=39 // pred_region
        %s291 = smul.u32 2, %s20
        %p292 = scmp.lt.s32.totalorder %s291, 3
        %s293 = scalar_select %p292, %s291, 3
        %p294 = scmp.lt.s32.totalorder %s21, 0
        %s295 = scalar_select %p294, %s21, 0
        %s296 = sadd.s32 %s295, %s293
        %s297 = smul.addr %s296, 4
        %s298 = scalar_lea.vmem %s3, %s297
      $region44: #{icp_encoder_big_forward.6} parent=39 // pred_fallthru
        _
    $region40: #{icp_encoder_big_forward.6} parent=5 // pred_fallthru
      _
  $region6: #{icp_encoder_big_forward.6} parent=0 // loop_footer
    %s13 = sadd.s32 1, %s9
  $region7: #{icp_encoder_big_forward.6} parent=0 // loop_footer_branch
    %8 = sbr.rel target = $region3
  $region8: #{icp_encoder_big_forward.6} parent=0 // loop_exit
    _

// kernel: icp_encoder_big_forward.5
$region0: #{icp_encoder_big_forward.5}
  #allocation0 [shape = 'u32[]', space=smem, size = 0x4, offset = 0x4, fixed_abs, tag = 'smem constant byte address 0x4 - core index']
  #allocation1 [shape = 'u32[144,128]{1,0:T(1,128)}', space=vmem, size = 0x12000, scoped, tag = 'internal scratch']
  #allocation2 [shape = 'f32[16,128]{1,0:T(8,128)}', space=vmem, size = 0x2000, scoped, tag = 'scratch operand']
  %s0 = inlined_call_operand.vmem [shape: bf16[32,1024], index: 0, kind: input, shape index: {}]
  %s1 = inlined_call_operand.vmem [shape: bf16[1024,128], index: 1, kind: input, shape index: {}]
  %s2 = inlined_call_operand.vmem [shape: bf16[32,128], index: 2, kind: output, shape index: {0}]
  %s3 = inlined_call_operand.vmem [shape: f32[16,128], index: 3, kind: output, shape index: {1}]
  %s4 = inlined_call_operand.vmem [shape: f32[16,128], index: 4, kind: output, shape index: {2}]
  %5 = xla_tuple %s2, %s3, %s4
  %s6 = sld [smem:[#allocation0]]
  $region65: #{icp_encoder_big_forward.5} parent=0
    _
  %s8 = ssub.s32 1, %s6
  %s9 = scalar_select 0, %s8, %s6
  loop: start=0, step=1, limit=4
  $region2: #{icp_encoder_big_forward.5} parent=0 // loop_pre_header
    _
  $region3: #{icp_encoder_big_forward.5} parent=0 // loop_header
    %s11 = sphi 0, %s15
    %p12 = scmp.ge.s32.totalorder %s11, 4
    %s18 = sphi 0, %s37
    %s19 = sphi 0, %s33
    %s20 = sphi 0, %s29
    %s21 = sphi 0, %s18
    %s22 = sphi 0, %s19
    %s23 = sphi 0, %s20
    %s24 = sphi 0, %s21
    %s25 = sphi 0, %s22
    %s26 = sphi 0, %s23
    %s42 = sphi 0, %s44
    %s45 = sphi 0, %s42
    %s46 = sphi 0, %s45
    %s62 = sphi 0, %s46
    %s70 = sphi 0, %s72
    %s73 = sphi 0, %s70
    %s74 = sphi 0, %s73
    %s90 = sphi 0, %s74
    %s98 = sphi 0, %s100
    %s101 = sphi 0, %s98
    %s102 = sphi 0, %s101
    %s118 = sphi 0, %s102
    %s126 = sphi 0, %s128
    %s129 = sphi 0, %s126
    %s130 = sphi 0, %s129
    %s146 = sphi 0, %s130
    %s154 = sphi 0, %s156
    %s157 = sphi 0, %s154
    %s158 = sphi 0, %s157
    %s174 = sphi 0, %s158
  $region4: #{icp_encoder_big_forward.5} parent=0 // loop_header_branch
    %14 = sbr.rel (%p12) target = $region8
  $region5: #{icp_encoder_big_forward.5} parent=0 // loop_body
    %s16 = ssub.s32 %s11, 1
    %s17 = ssub.s32 %s11, 2
    %s27 = sadd.s32 1, %s20
    %p28 = scmp.ge.s32.totalorder %s27, 1
    %s29 = scalar_select %p28, 0, %s27
    %s30 = sadd.s32 1, %s19
    %s31 = scalar_select %p28, %s30, %s19
    %p32 = scmp.ge.s32.totalorder %s31, 1
    %s33 = scalar_select %p32, 0, %s31
    %s34 = sadd.s32 1, %s18
    %s35 = scalar_select %p32, %s34, %s18
    %p36 = scmp.ge.s32.totalorder %s35, 2
    %s37 = scalar_select %p36, 0, %s35
    %s38 = ssub.s32 %s18, %s37
    %s39 = ssub.s32 %s20, %s29
    %s40 = sor.u32 %s38, %s39
    %p41 = scmp.eq.s32.totalorder %s40, 0
    %s43 = sadd.s32 %s42, 1
    %s44 = scalar_select %p41, %s42, %s43
    %p47 = pneg %p41
    %p48 = scmp.eq.s32.totalorder %s11, 1
    %p49 = por %p47, %p48
    %p50 = scmp.ne.s32.totalorder %s42, %s45
    %p51 = scmp.eq.s32.totalorder %s11, 0
    %p52 = por %p50, %p51
    %p53 = scmp.ne.s32.totalorder %s42, %s45
    %p54 = scmp.eq.s32.totalorder %s16, 1
    %p55 = por %p53, %p54
    %p56 = scmp.ne.s32.totalorder %s45, %s46
    %p57 = scmp.eq.s32.totalorder %s16, 0
    %p58 = por %p56, %p57
    %p59 = scmp.ne.s32.totalorder %s45, %s46
    %p60 = scmp.eq.s32.totalorder %s17, 1
    %p61 = por %p59, %p60
    %p63 = scmp.ne.s32.totalorder %s46, %s62
    %p64 = scmp.eq.s32.totalorder %s17, 0
    %p65 = por %p63, %p64
    %s66 = ssub.s32 %s20, %s29
    %s67 = ssub.s32 %s19, %s33
    %s68 = sor.u32 %s66, %s67
    %p69 = scmp.eq.s32.totalorder %s68, 0
    %s71 = sadd.s32 %s70, 1
    %s72 = scalar_select %p69, %s70, %s71
    %p75 = pneg %p69
    %p76 = scmp.eq.s32.totalorder %s11, 1
    %p77 = por %p75, %p76
    %p78 = scmp.ne.s32.totalorder %s70, %s73
    %p79 = scmp.eq.s32.totalorder %s11, 0
    %p80 = por %p78, %p79
    %p81 = scmp.ne.s32.totalorder %s70, %s73
    %p82 = scmp.eq.s32.totalorder %s16, 1
    %p83 = por %p81, %p82
    %p84 = scmp.ne.s32.totalorder %s73, %s74
    %p85 = scmp.eq.s32.totalorder %s16, 0
    %p86 = por %p84, %p85
    %p87 = scmp.ne.s32.totalorder %s73, %s74
    %p88 = scmp.eq.s32.totalorder %s17, 1
    %p89 = por %p87, %p88
    %p91 = scmp.ne.s32.totalorder %s74, %s90
    %p92 = scmp.eq.s32.totalorder %s17, 0
    %p93 = por %p91, %p92
    %s94 = ssub.s32 %s18, %s37
    %s95 = ssub.s32 %s19, %s33
    %s96 = sor.u32 %s94, %s95
    %p97 = scmp.eq.s32.totalorder %s96, 0
    %s99 = sadd.s32 %s98, 1
    %s100 = scalar_select %p97, %s98, %s99
    %p103 = pneg %p97
    %p104 = scmp.eq.s32.totalorder %s11, 1
    %p105 = por %p103, %p104
    %p106 = scmp.ne.s32.totalorder %s98, %s101
    %p107 = scmp.eq.s32.totalorder %s11, 0
    %p108 = por %p106, %p107
    %p109 = scmp.ne.s32.totalorder %s98, %s101
    %p110 = scmp.eq.s32.totalorder %s16, 1
    %p111 = por %p109, %p110
    %p112 = scmp.ne.s32.totalorder %s101, %s102
    %p113 = scmp.eq.s32.totalorder %s16, 0
    %p114 = por %p112, %p113
    %p115 = scmp.ne.s32.totalorder %s101, %s102
    %p116 = scmp.eq.s32.totalorder %s17, 1
    %p117 = por %p115, %p116
    %p119 = scmp.ne.s32.totalorder %s102, %s118
    %p120 = scmp.eq.s32.totalorder %s17, 0
    %p121 = por %p119, %p120
    %s122 = ssub.s32 %s18, %s37
    %s123 = ssub.s32 %s19, %s33
    %s124 = sor.u32 %s122, %s123
    %p125 = scmp.eq.s32.totalorder %s124, 0
    %s127 = sadd.s32 %s126, 1
    %s128 = scalar_select %p125, %s126, %s127
    %p131 = pneg %p125
    %p132 = scmp.eq.s32.totalorder %s11, 1
    %p133 = por %p131, %p132
    %p134 = scmp.ne.s32.totalorder %s126, %s129
    %p135 = scmp.eq.s32.totalorder %s11, 0
    %p136 = por %p134, %p135
    %p137 = scmp.ne.s32.totalorder %s126, %s129
    %p138 = scmp.eq.s32.totalorder %s16, 1
    %p139 = por %p137, %p138
    %p140 = scmp.ne.s32.totalorder %s129, %s130
    %p141 = scmp.eq.s32.totalorder %s16, 0
    %p142 = por %p140, %p141
    %p143 = scmp.ne.s32.totalorder %s129, %s130
    %p144 = scmp.eq.s32.totalorder %s17, 1
    %p145 = por %p143, %p144
    %p147 = scmp.ne.s32.totalorder %s130, %s146
    %p148 = scmp.eq.s32.totalorder %s17, 0
    %p149 = por %p147, %p148
    %s150 = ssub.s32 %s18, %s37
    %s151 = ssub.s32 %s19, %s33
    %s152 = sor.u32 %s150, %s151
    %p153 = scmp.eq.s32.totalorder %s152, 0
    %s155 = sadd.s32 %s154, 1
    %s156 = scalar_select %p153, %s154, %s155
    %p159 = pneg %p153
    %p160 = scmp.eq.s32.totalorder %s11, 1
    %p161 = por %p159, %p160
    %p162 = scmp.ne.s32.totalorder %s154, %s157
    %p163 = scmp.eq.s32.totalorder %s11, 0
    %p164 = por %p162, %p163
    %p165 = scmp.ne.s32.totalorder %s154, %s157
    %p166 = scmp.eq.s32.totalorder %s16, 1
    %p167 = por %p165, %p166
    %p168 = scmp.ne.s32.totalorder %s157, %s158
    %p169 = scmp.eq.s32.totalorder %s16, 0
    %p170 = por %p168, %p169
    %p171 = scmp.ne.s32.totalorder %s157, %s158
    %p172 = scmp.eq.s32.totalorder %s17, 1
    %p173 = por %p171, %p172
    %p175 = scmp.ne.s32.totalorder %s158, %s174
    %p176 = scmp.eq.s32.totalorder %s17, 0
    %p177 = por %p175, %p176
    %p178 = scmp.le.s32.totalorder 1, %s11
    %p179 = scmp.lt.s32.totalorder %s11, 3
    %p180 = pnand %p178, %p179
    %p181 = pneg %p180
    // Predicated region
    $region9: #{icp_encoder_big_forward.5} parent=5 // pred_check
      _
    $region10: #{icp_encoder_big_forward.5} parent=5 // pred_check_branch
      %183 = sbr.rel (%p180) target = $region12
    $region11: #{icp_encoder_big_forward.5} parent=5 // pred_region
      %s184 = ssub.s32 %s11, 1
      // Predicated region
      $region13: #{icp_encoder_big_forward.5} parent=11 // pred_check
        %p185 = pneg %p86
      $region14: #{icp_encoder_big_forward.5} parent=11 // pred_check_branch
        %187 = sbr.rel (%p185) target = $region16
      $region15: #{icp_encoder_big_forward.5} parent=11 // pred_region
        %s188 = smul.u32 128, %s23
        %p189 = scmp.lt.s32.totalorder %s188, 127
        %s190 = scalar_select %p189, %s188, 127
        %p191 = scmp.lt.s32.totalorder %s22, 0
        %s192 = scalar_select %p191, %s22, 0
        %s193 = sadd.s32 %s192, %s190
        %s194 = smul.addr %s193, 4
        %s195 = scalar_lea.vmem %s1, %s194
        %s196 = smul.u32 128, %s23
      $region16: #{icp_encoder_big_forward.5} parent=11 // pred_fallthru
        _
    $region12: #{icp_encoder_big_forward.5} parent=5 // pred_fallthru
      _
    %p197 = scmp.lt.s32.totalorder %s11, 2
    // Predicated region
    $region17: #{icp_encoder_big_forward.5} parent=5 // pred_check
      %p198 = pneg %p197
    $region18: #{icp_encoder_big_forward.5} parent=5 // pred_check_branch
      %200 = sbr.rel (%p198) target = $region20
    $region19: #{icp_encoder_big_forward.5} parent=5 // pred_region
      // Predicated region
      $region21: #{icp_encoder_big_forward.5} parent=19 // pred_check
        %p201 = pneg %p52
      $region22: #{icp_encoder_big_forward.5} parent=19 // pred_check_branch
        %203 = sbr.rel (%p201) target = $region24
      $region23: #{icp_encoder_big_forward.5} parent=19 // pred_region
        %s204 = smul.u32 2, %s18
        %s205 = smul.u32 8, %s20
        %p206 = scmp.lt.s32.totalorder %s204, 3
        %s207 = scalar_select %p206, %s204, 3
        %p208 = scmp.lt.s32.totalorder %s205, 7
        %s209 = scalar_select %p208, %s205, 7
        %s210 = smul.addr %s207, 8
        %s211 = sadd.s32 %s209, %s210
        %s212 = smul.addr %s211, 4
        %s213 = scalar_lea.vmem %s0, %s212
        %s214 = smul.u32 2, %s18
        %s215 = smul.u32 8, %s20
      $region24: #{icp_encoder_big_forward.5} parent=19 // pred_fallthru
        _
    $region20: #{icp_encoder_big_forward.5} parent=5 // pred_fallthru
      _
    %p216 = scmp.le.s32.totalorder 1, %s11
    %p217 = scmp.lt.s32.totalorder %s11, 3
    %p218 = pnand %p216, %p217
    %p219 = pneg %p218
    // Predicated region
    $region25: #{icp_encoder_big_forward.5} parent=5 // pred_check
      _
    $region26: #{icp_encoder_big_forward.5} parent=5 // pred_check_branch
      %221 = sbr.rel (%p218) target = $region28
    $region27: #{icp_encoder_big_forward.5} parent=5 // pred_region
      %s222 = ssub.s32 %s11, 1
      %s223 = smul.u32 2, %s21
      %s224 = smul.u32 8, %s23
      %p225 = scmp.lt.s32.totalorder %s223, 3
      %s226 = scalar_select %p225, %s223, 3
      %p227 = scmp.lt.s32.totalorder %s224, 7
      %s228 = scalar_select %p227, %s224, 7
      %s229 = smul.addr %s226, 8
      %s230 = sadd.s32 %s228, %s229
      %s231 = smul.addr %s230, 4
      %s232 = scalar_lea.vmem %s0, %s231
      %p233 = pneg %p58
      %p234 = pneg %p55
      %s235 = smul.u32 128, %s23
      %p236 = scmp.lt.s32.totalorder %s235, 127
      %s237 = scalar_select %p236, %s235, 127
      %p238 = scmp.lt.s32.totalorder %s22, 0
      %s239 = scalar_select %p238, %s22, 0
      %s240 = sadd.s32 %s239, %s237
      %s241 = smul.addr %s240, 4
      %s242 = scalar_lea.vmem %s1, %s241
      %p243 = pneg %p86
      %p244 = pneg %p83
      %p245 = pneg %p114
      %p246 = pneg %p111
      %s247 = smul.u32 2, %s21
      %p248 = scmp.lt.s32.totalorder %s247, 3
      %s249 = scalar_select %p248, %s247, 3
      %p250 = scmp.lt.s32.totalorder %s22, 0
      %s251 = scalar_select %p250, %s22, 0
      %s252 = sadd.s32 %s251, %s249
      %s253 = smul.addr %s252, 4
      %s254 = scalar_lea.vmem %s2, %s253
      %p255 = pneg %p142
      %p256 = pneg %p139
      %p257 = scmp.lt.s32.totalorder %s21, 1
      %s258 = scalar_select %p257, %s21, 1
      %p259 = scmp.lt.s32.totalorder %s22, 0
      %s260 = scalar_select %p259, %s22, 0
      %s261 = sadd.s32 %s260, %s258
      %s262 = smul.addr %s261, 8
      %s263 = scalar_lea.vmem %s3, %s262
      %p264 = pneg %p170
      %p265 = pneg %p167
      %p266 = scmp.lt.s32.totalorder %s21, 1
      %s267 = scalar_select %p266, %s21, 1
      %p268 = scmp.lt.s32.totalorder %s22, 0
      %s269 = scalar_select %p268, %s22, 0
      %s270 = sadd.s32 %s269, %s267
      %s271 = smul.addr %s270, 8
      %s272 = scalar_lea.vmem %s4, %s271
      %s273 = smul.u32 2, %s21
      %s274 = smul.u32 8, %s23
      %p275 = scmp.lt.s32.totalorder %s273, 3
      %s276 = scalar_select %p275, %s273, 3
      %p277 = scmp.lt.s32.totalorder %s274, 7
      %s278 = scalar_select %p277, %s274, 7
      %s279 = smul.addr %s276, 8
      %s280 = sadd.s32 %s278, %s279
      %s281 = smul.addr %s280, 4
      %s282 = scalar_lea.vmem %s0, %s281
      %s283 = smul.u32 2, %s21
      %s284 = smul.u32 8, %s23
      %s285 = smul.u32 128, %s23
      %p286 = scmp.lt.s32.totalorder %s285, 127
      %s287 = scalar_select %p286, %s285, 127
      %p288 = scmp.lt.s32.totalorder %s22, 0
      %s289 = scalar_select %p288, %s22, 0
      %s290 = sadd.s32 %s289, %s287
      %s291 = smul.addr %s290, 4
      %s292 = scalar_lea.vmem %s1, %s291
      %s293 = smul.u32 128, %s23
      %s294 = smul.u32 2, %s21
      %p295 = scmp.lt.s32.totalorder %s294, 3
      %s296 = scalar_select %p295, %s294, 3
      %p297 = scmp.lt.s32.totalorder %s22, 0
      %s298 = scalar_select %p297, %s22, 0
      %s299 = sadd.s32 %s298, %s296
      %s300 = smul.addr %s299, 4
      %s301 = scalar_lea.vmem %s2, %s300
      %s302 = smul.u32 2, %s21
      %p303 = scmp.lt.s32.totalorder %s21, 1
      %s304 = scalar_select %p303, %s21, 1
      %p305 = scmp.lt.s32.totalorder %s22, 0
      %s306 = scalar_select %p305, %s22, 0
      %s307 = sadd.s32 %s306, %s304
      %s308 = smul.addr %s307, 8
      %s309 = scalar_lea.vmem %s3, %s308
      %p310 = scmp.lt.s32.totalorder %s21, 1
      %s311 = scalar_select %p310, %s21, 1
      %p312 = scmp.lt.s32.totalorder %s22, 0
      %s313 = scalar_select %p312, %s22, 0
      %s314 = sadd.s32 %s313, %s311
      %s315 = smul.addr %s314, 8
      %s316 = scalar_lea.vmem %s4, %s315
      %p318 = scmp.eq.s32.totalorder %s23, 0
      // Predicated region
      $region29: #{icp_encoder_big_forward.5} parent=27 // pred_check
        %p319 = pneg %p318
      $region30: #{icp_encoder_big_forward.5} parent=27 // pred_check_branch
        %321 = sbr.rel (%p319) target = $region32
      $region31: #{icp_encoder_big_forward.5} parent=27 // pred_region
        %322 = vst [vmem:[#allocation2] sm:$0xff] 0.0
        %323 = vst [vmem:[#allocation2 + $0x8] sm:$0xff] 0.0
      $region32: #{icp_encoder_big_forward.5} parent=27 // pred_fallthru
        _
      %v324 = vld [vmem:[#allocation2] sm:$0xff]
      %v325 = vld [vmem:[#allocation2 + $0x8] sm:$0xff]
      %v326 = vld [vmem:[%s282] sm:$0xff]
      %v327 = vld [vmem:[%s282 + $0x8] sm:$0xff]
      %v328 = vld [vmem:[%s282 + $0x10] sm:$0xff]
      %v329 = vld [vmem:[%s282 + $0x18] sm:$0xff]
      %v330 = vld [vmem:[%s282 + $0x20] sm:$0xff]
      %v331 = vld [vmem:[%s282 + $0x28] sm:$0xff]
      %v332 = vld [vmem:[%s282 + $0x30] sm:$0xff]
      %v333 = vld [vmem:[%s282 + $0x38] sm:$0xff]
      %v334 = vld [vmem:[%s292] sm:$0xf]
      %v335 = vld [vmem:[%s292 + $0x4] sm:$0xf]
      %v336 = vld [vmem:[%s292 + $0x8] sm:$0xf]
      %v337 = vld [vmem:[%s292 + $0xc] sm:$0xf]
      %v338 = vld [vmem:[%s292 + $0x10] sm:$0xf]
      %v339 = vld [vmem:[%s292 + $0x14] sm:$0xf]
      %v340 = vld [vmem:[%s292 + $0x18] sm:$0xf]
      %v341 = vld [vmem:[%s292 + $0x1c] sm:$0xf]
      %v342 = vld [vmem:[%s292 + $0x20] sm:$0xf]
      %v343 = vld [vmem:[%s292 + $0x24] sm:$0xf]
      %v344 = vld [vmem:[%s292 + $0x28] sm:$0xf]
      %v345 = vld [vmem:[%s292 + $0x2c] sm:$0xf]
      %v346 = vld [vmem:[%s292 + $0x30] sm:$0xf]
      %v347 = vld [vmem:[%s292 + $0x34] sm:$0xf]
      %v348 = vld [vmem:[%s292 + $0x38] sm:$0xf]
      %v349 = vld [vmem:[%s292 + $0x3c] sm:$0xf]
      %v350 = vld [vmem:[%s292 + $0x40] sm:$0xf]
      %v351 = vld [vmem:[%s292 + $0x44] sm:$0xf]
      %v352 = vld [vmem:[%s292 + $0x48] sm:$0xf]
      %v353 = vld [vmem:[%s292 + $0x4c] sm:$0xf]
      %v354 = vld [vmem:[%s292 + $0x50] sm:$0xf]
      %v355 = vld [vmem:[%s292 + $0x54] sm:$0xf]
      %v356 = vld [vmem:[%s292 + $0x58] sm:$0xf]
      %v357 = vld [vmem:[%s292 + $0x5c] sm:$0xf]
      %v358 = vld [vmem:[%s292 + $0x60] sm:$0xf]
      %v359 = vld [vmem:[%s292 + $0x64] sm:$0xf]
      %v360 = vld [vmem:[%s292 + $0x68] sm:$0xf]
      %v361 = vld [vmem:[%s292 + $0x6c] sm:$0xf]
      %v362 = vld [vmem:[%s292 + $0x70] sm:$0xf]
      %v363 = vld [vmem:[%s292 + $0x74] sm:$0xf]
      %v364 = vld [vmem:[%s292 + $0x78] sm:$0xf]
      %v365 = vld [vmem:[%s292 + $0x7c] sm:$0xf]
      %v366 = vld [vmem:[%s292 + $0x80] sm:$0xf]
      %v367 = vld [vmem:[%s292 + $0x84] sm:$0xf]
      %v368 = vld [vmem:[%s292 + $0x88] sm:$0xf]
      %v369 = vld [vmem:[%s292 + $0x8c] sm:$0xf]
      %v370 = vld [vmem:[%s292 + $0x90] sm:$0xf]
      %v371 = vld [vmem:[%s292 + $0x94] sm:$0xf]
      %v372 = vld [vmem:[%s292 + $0x98] sm:$0xf]
      %v373 = vld [vmem:[%s292 + $0x9c] sm:$0xf]
      %v374 = vld [vmem:[%s292 + $0xa0] sm:$0xf]
      %v375 = vld [vmem:[%s292 + $0xa4] sm:$0xf]
      %v376 = vld [vmem:[%s292 + $0xa8] sm:$0xf]
      %v377 = vld [vmem:[%s292 + $0xac] sm:$0xf]
      %v378 = vld [vmem:[%s292 + $0xb0] sm:$0xf]
      %v379 = vld [vmem:[%s292 + $0xb4] sm:$0xf]
      %v380 = vld [vmem:[%s292 + $0xb8] sm:$0xf]
      %v381 = vld [vmem:[%s292 + $0xbc] sm:$0xf]
      %v382 = vld [vmem:[%s292 + $0xc0] sm:$0xf]
      %v383 = vld [vmem:[%s292 + $0xc4] sm:$0xf]
      %v384 = vld [vmem:[%s292 + $0xc8] sm:$0xf]
      %v385 = vld [vmem:[%s292 + $0xcc] sm:$0xf]
      %v386 = vld [vmem:[%s292 + $0xd0] sm:$0xf]
      %v387 = vld [vmem:[%s292 + $0xd4] sm:$0xf]
      %v388 = vld [vmem:[%s292 + $0xd8] sm:$0xf]
      %v389 = vld [vmem:[%s292 + $0xdc] sm:$0xf]
      %v390 = vld [vmem:[%s292 + $0xe0] sm:$0xf]
      %v391 = vld [vmem:[%s292 + $0xe4] sm:$0xf]
      %v392 = vld [vmem:[%s292 + $0xe8] sm:$0xf]
      %v393 = vld [vmem:[%s292 + $0xec] sm:$0xf]
      %v394 = vld [vmem:[%s292 + $0xf0] sm:$0xf]
      %v395 = vld [vmem:[%s292 + $0xf4] sm:$0xf]
      %v396 = vld [vmem:[%s292 + $0xf8] sm:$0xf]
      %v397 = vld [vmem:[%s292 + $0xfc] sm:$0xf]
      %v398 = vld [vmem:[%s292 + $0x100] sm:$0xf]
      %v399 = vld [vmem:[%s292 + $0x104] sm:$0xf]
      %v400 = vld [vmem:[%s292 + $0x108] sm:$0xf]
      %v401 = vld [vmem:[%s292 + $0x10c] sm:$0xf]
      %v402 = vld [vmem:[%s292 + $0x110] sm:$0xf]
      %v403 = vld [vmem:[%s292 + $0x114] sm:$0xf]
      %v404 = vld [vmem:[%s292 + $0x118] sm:$0xf]
      %v405 = vld [vmem:[%s292 + $0x11c] sm:$0xf]
      %v406 = vld [vmem:[%s292 + $0x120] sm:$0xf]
      %v407 = vld [vmem:[%s292 + $0x124] sm:$0xf]
      %v408 = vld [vmem:[%s292 + $0x128] sm:$0xf]
      %v409 = vld [vmem:[%s292 + $0x12c] sm:$0xf]
      %v410 = vld [vmem:[%s292 + $0x130] sm:$0xf]
      %v411 = vld [vmem:[%s292 + $0x134] sm:$0xf]
      %v412 = vld [vmem:[%s292 + $0x138] sm:$0xf]
      %v413 = vld [vmem:[%s292 + $0x13c] sm:$0xf]
      %v414 = vld [vmem:[%s292 + $0x140] sm:$0xf]
      %v415 = vld [vmem:[%s292 + $0x144] sm:$0xf]
      %v416 = vld [vmem:[%s292 + $0x148] sm:$0xf]
      %v417 = vld [vmem:[%s292 + $0x14c] sm:$0xf]
      %v418 = vld [vmem:[%s292 + $0x150] sm:$0xf]
      %v419 = vld [vmem:[%s292 + $0x154] sm:$0xf]
      %v420 = vld [vmem:[%s292 + $0x158] sm:$0xf]
      %v421 = vld [vmem:[%s292 + $0x15c] sm:$0xf]
      %v422 = vld [vmem:[%s292 + $0x160] sm:$0xf]
      %v423 = vld [vmem:[%s292 + $0x164] sm:$0xf]
      %v424 = vld [vmem:[%s292 + $0x168] sm:$0xf]
      %v425 = vld [vmem:[%s292 + $0x16c] sm:$0xf]
      %v426 = vld [vmem:[%s292 + $0x170] sm:$0xf]
      %v427 = vld [vmem:[%s292 + $0x174] sm:$0xf]
      %v428 = vld [vmem:[%s292 + $0x178] sm:$0xf]
      %v429 = vld [vmem:[%s292 + $0x17c] sm:$0xf]
      %v430 = vld [vmem:[%s292 + $0x180] sm:$0xf]
      %v431 = vld [vmem:[%s292 + $0x184] sm:$0xf]
      %v432 = vld [vmem:[%s292 + $0x188] sm:$0xf]
      %v433 = vld [vmem:[%s292 + $0x18c] sm:$0xf]
      %v434 = vld [vmem:[%s292 + $0x190] sm:$0xf]
      %v435 = vld [vmem:[%s292 + $0x194] sm:$0xf]
      %v436 = vld [vmem:[%s292 + $0x198] sm:$0xf]
      %v437 = vld [vmem:[%s292 + $0x19c] sm:$0xf]
      %v438 = vld [vmem:[%s292 + $0x1a0] sm:$0xf]
      %v439 = vld [vmem:[%s292 + $0x1a4] sm:$0xf]
      %v440 = vld [vmem:[%s292 + $0x1a8] sm:$0xf]
      %v441 = vld [vmem:[%s292 + $0x1ac] sm:$0xf]
      %v442 = vld [vmem:[%s292 + $0x1b0] sm:$0xf]
      %v443 = vld [vmem:[%s292 + $0x1b4] sm:$0xf]
      %v444 = vld [vmem:[%s292 + $0x1b8] sm:$0xf]
      %v445 = vld [vmem:[%s292 + $0x1bc] sm:$0xf]
      %v446 = vld [vmem:[%s292 + $0x1c0] sm:$0xf]
      %v447 = vld [vmem:[%s292 + $0x1c4] sm:$0xf]
      %v448 = vld [vmem:[%s292 + $0x1c8] sm:$0xf]
      %v449 = vld [vmem:[%s292 + $0x1cc] sm:$0xf]
      %v450 = vld [vmem:[%s292 + $0x1d0] sm:$0xf]
      %v451 = vld [vmem:[%s292 + $0x1d4] sm:$0xf]
      %v452 = vld [vmem:[%s292 + $0x1d8] sm:$0xf]
      %v453 = vld [vmem:[%s292 + $0x1dc] sm:$0xf]
      %v454 = vld [vmem:[%s292 + $0x1e0] sm:$0xf]
      %v455 = vld [vmem:[%s292 + $0x1e4] sm:$0xf]
      %v456 = vld [vmem:[%s292 + $0x1e8] sm:$0xf]
      %v457 = vld [vmem:[%s292 + $0x1ec] sm:$0xf]
      %v458 = vld [vmem:[%s292 + $0x1f0] sm:$0xf]
      %v459 = vld [vmem:[%s292 + $0x1f4] sm:$0xf]
      %v460 = vld [vmem:[%s292 + $0x1f8] sm:$0xf]
      %v461 = vld [vmem:[%s292 + $0x1fc] sm:$0xf]
      %v470 = vunpack.c.l.b16 %v326
      %v471 = vunpack.c.h.b16 %v326
      %v472 = vunpack.c.l.b16 %v327
      %v473 = vunpack.c.h.b16 %v327
      %v474 = vunpack.c.l.b16 %v328
      %v475 = vunpack.c.h.b16 %v328
      %v476 = vunpack.c.l.b16 %v329
      %v477 = vunpack.c.h.b16 %v329
      %v478 = vunpack.c.l.b16 %v330
      %v479 = vunpack.c.h.b16 %v330
      %v480 = vunpack.c.l.b16 %v331
      %v481 = vunpack.c.h.b16 %v331
      %v482 = vunpack.c.l.b16 %v332
      %v483 = vunpack.c.h.b16 %v332
      %v484 = vunpack.c.l.b16 %v333
      %v485 = vunpack.c.h.b16 %v333
      %v486 = vpack.c.b16 %v478, %v470
      %v487 = vpack.c.b16 %v479, %v471
      %v488 = vpack.c.b16 %v480, %v472
      %v489 = vpack.c.b16 %v481, %v473
      %v490 = vpack.c.b16 %v482, %v474
      %v491 = vpack.c.b16 %v483, %v475
      %v492 = vpack.c.b16 %v484, %v476
      %v493 = vpack.c.b16 %v485, %v477
      %v630 = vunpack.c.l.b16 %v334
      %v631 = vunpack.c.l.b16 %v335
      %v632 = vunpack.c.l.b16 %v336
      %v633 = vunpack.c.l.b16 %v337
      %v634 = vunpack.c.l.b16 %v338
      %v635 = vunpack.c.l.b16 %v339
      %v636 = vunpack.c.l.b16 %v340
      %v637 = vunpack.c.l.b16 %v341
      %v638 = vunpack.c.l.b16 %v342
      %v639 = vunpack.c.l.b16 %v343
      %v640 = vunpack.c.l.b16 %v344
      %v641 = vunpack.c.l.b16 %v345
      %v642 = vunpack.c.l.b16 %v346
      %v643 = vunpack.c.l.b16 %v347
      %v644 = vunpack.c.l.b16 %v348
      %v645 = vunpack.c.l.b16 %v349
      %v646 = vunpack.c.l.b16 %v350
      %v647 = vunpack.c.l.b16 %v351
      %v648 = vunpack.c.l.b16 %v352
      %v649 = vunpack.c.l.b16 %v353
      %v650 = vunpack.c.l.b16 %v354
      %v651 = vunpack.c.l.b16 %v355
      %v652 = vunpack.c.l.b16 %v356
      %v653 = vunpack.c.l.b16 %v357
      %v654 = vunpack.c.l.b16 %v358
      %v655 = vunpack.c.l.b16 %v359
      %v656 = vunpack.c.l.b16 %v360
      %v657 = vunpack.c.l.b16 %v361
      %v658 = vunpack.c.l.b16 %v362
      %v659 = vunpack.c.l.b16 %v363
      %v660 = vunpack.c.l.b16 %v364
      %v661 = vunpack.c.l.b16 %v365
      %v662 = vunpack.c.l.b16 %v366
      %v663 = vunpack.c.l.b16 %v367
      %v664 = vunpack.c.l.b16 %v368
      %v665 = vunpack.c.l.b16 %v369
      %v666 = vunpack.c.l.b16 %v370
      %v667 = vunpack.c.l.b16 %v371
      %v668 = vunpack.c.l.b16 %v372
      %v669 = vunpack.c.l.b16 %v373
      %v670 = vunpack.c.l.b16 %v374
      %v671 = vunpack.c.l.b16 %v375
      %v672 = vunpack.c.l.b16 %v376
      %v673 = vunpack.c.l.b16 %v377
      %v674 = vunpack.c.l.b16 %v378
      %v675 = vunpack.c.l.b16 %v379
      %v676 = vunpack.c.l.b16 %v380
      %v677 = vunpack.c.l.b16 %v381
      %v678 = vunpack.c.l.b16 %v382
      %v679 = vunpack.c.l.b16 %v383
      %v680 = vunpack.c.l.b16 %v384
      %v681 = vunpack.c.l.b16 %v385
      %v682 = vunpack.c.l.b16 %v386
      %v683 = vunpack.c.l.b16 %v387
      %v684 = vunpack.c.l.b16 %v388
      %v685 = vunpack.c.l.b16 %v389
      %v686 = vunpack.c.l.b16 %v390
      %v687 = vunpack.c.l.b16 %v391
      %v688 = vunpack.c.l.b16 %v392
      %v689 = vunpack.c.l.b16 %v393
      %v690 = vunpack.c.l.b16 %v394
      %v691 = vunpack.c.l.b16 %v395
      %v692 = vunpack.c.l.b16 %v396
      %v693 = vunpack.c.l.b16 %v397
      %v694 = vunpack.c.l.b16 %v398
      %v695 = vunpack.c.l.b16 %v399
      %v696 = vunpack.c.l.b16 %v400
      %v697 = vunpack.c.l.b16 %v401
      %v698 = vunpack.c.l.b16 %v402
      %v699 = vunpack.c.l.b16 %v403
      %v700 = vunpack.c.l.b16 %v404
      %v701 = vunpack.c.l.b16 %v405
      %v702 = vunpack.c.l.b16 %v406
      %v703 = vunpack.c.l.b16 %v407
      %v704 = vunpack.c.l.b16 %v408
      %v705 = vunpack.c.l.b16 %v409
      %v706 = vunpack.c.l.b16 %v410
      %v707 = vunpack.c.l.b16 %v411
      %v708 = vunpack.c.l.b16 %v412
      %v709 = vunpack.c.l.b16 %v413
      %v710 = vunpack.c.l.b16 %v414
      %v711 = vunpack.c.l.b16 %v415
      %v712 = vunpack.c.l.b16 %v416
      %v713 = vunpack.c.l.b16 %v417
      %v714 = vunpack.c.l.b16 %v418
      %v715 = vunpack.c.l.b16 %v419
      %v716 = vunpack.c.l.b16 %v420
      %v717 = vunpack.c.l.b16 %v421
      %v718 = vunpack.c.l.b16 %v422
      %v719 = vunpack.c.l.b16 %v423
      %v720 = vunpack.c.l.b16 %v424
      %v721 = vunpack.c.l.b16 %v425
      %v722 = vunpack.c.l.b16 %v426
      %v723 = vunpack.c.l.b16 %v427
      %v724 = vunpack.c.l.b16 %v428
      %v725 = vunpack.c.l.b16 %v429
      %v726 = vunpack.c.l.b16 %v430
      %v727 = vunpack.c.l.b16 %v431
      %v728 = vunpack.c.l.b16 %v432
      %v729 = vunpack.c.l.b16 %v433
      %v730 = vunpack.c.l.b16 %v434
      %v731 = vunpack.c.l.b16 %v435
      %v732 = vunpack.c.l.b16 %v436
      %v733 = vunpack.c.l.b16 %v437
      %v734 = vunpack.c.l.b16 %v438
      %v735 = vunpack.c.l.b16 %v439
      %v736 = vunpack.c.l.b16 %v440
      %v737 = vunpack.c.l.b16 %v441
      %v738 = vunpack.c.l.b16 %v442
      %v739 = vunpack.c.l.b16 %v443
      %v740 = vunpack.c.l.b16 %v444
      %v741 = vunpack.c.l.b16 %v445
      %v742 = vunpack.c.l.b16 %v446
      %v743 = vunpack.c.l.b16 %v447
      %v744 = vunpack.c.l.b16 %v448
      %v745 = vunpack.c.l.b16 %v449
      %v746 = vunpack.c.l.b16 %v450
      %v747 = vunpack.c.l.b16 %v451
      %v748 = vunpack.c.l.b16 %v452
      %v749 = vunpack.c.l.b16 %v453
      %v750 = vunpack.c.l.b16 %v454
      %v751 = vunpack.c.l.b16 %v455
      %v752 = vunpack.c.l.b16 %v456
      %v753 = vunpack.c.l.b16 %v457
      %v754 = vunpack.c.l.b16 %v458
      %v755 = vunpack.c.l.b16 %v459
      %v756 = vunpack.c.l.b16 %v460
      %v757 = vunpack.c.l.b16 %v461
      %v758 = vpack.c.b16 %v631, %v630
      %v759 = vpack.c.b16 %v633, %v632
      %v760 = vpack.c.b16 %v635, %v634
      %v761 = vpack.c.b16 %v637, %v636
      %v762 = vpack.c.b16 %v639, %v638
      %v763 = vpack.c.b16 %v641, %v640
      %v764 = vpack.c.b16 %v643, %v642
      %v765 = vpack.c.b16 %v645, %v644
      %v766 = vpack.c.b16 %v647, %v646
      %v767 = vpack.c.b16 %v649, %v648
      %v768 = vpack.c.b16 %v651, %v650
      %v769 = vpack.c.b16 %v653, %v652
      %v770 = vpack.c.b16 %v655, %v654
      %v771 = vpack.c.b16 %v657, %v656
      %v772 = vpack.c.b16 %v659, %v658
      %v773 = vpack.c.b16 %v661, %v660
      %v774 = vpack.c.b16 %v663, %v662
      %v775 = vpack.c.b16 %v665, %v664
      %v776 = vpack.c.b16 %v667, %v666
      %v777 = vpack.c.b16 %v669, %v668
      %v778 = vpack.c.b16 %v671, %v670
      %v779 = vpack.c.b16 %v673, %v672
      %v780 = vpack.c.b16 %v675, %v674
      %v781 = vpack.c.b16 %v677, %v676
      %v782 = vpack.c.b16 %v679, %v678
      %v783 = vpack.c.b16 %v681, %v680
      %v784 = vpack.c.b16 %v683, %v682
      %v785 = vpack.c.b16 %v685, %v684
      %v786 = vpack.c.b16 %v687, %v686
      %v787 = vpack.c.b16 %v689, %v688
      %v788 = vpack.c.b16 %v691, %v690
      %v789 = vpack.c.b16 %v693, %v692
      %v790 = vpack.c.b16 %v695, %v694
      %v791 = vpack.c.b16 %v697, %v696
      %v792 = vpack.c.b16 %v699, %v698
      %v793 = vpack.c.b16 %v701, %v700
      %v794 = vpack.c.b16 %v703, %v702
      %v795 = vpack.c.b16 %v705, %v704
      %v796 = vpack.c.b16 %v707, %v706
      %v797 = vpack.c.b16 %v709, %v708
      %v798 = vpack.c.b16 %v711, %v710
      %v799 = vpack.c.b16 %v713, %v712
      %v800 = vpack.c.b16 %v715, %v714
      %v801 = vpack.c.b16 %v717, %v716
      %v802 = vpack.c.b16 %v719, %v718
      %v803 = vpack.c.b16 %v721, %v720
      %v804 = vpack.c.b16 %v723, %v722
      %v805 = vpack.c.b16 %v725, %v724
      %v806 = vpack.c.b16 %v727, %v726
      %v807 = vpack.c.b16 %v729, %v728
      %v808 = vpack.c.b16 %v731, %v730
      %v809 = vpack.c.b16 %v733, %v732
      %v810 = vpack.c.b16 %v735, %v734
      %v811 = vpack.c.b16 %v737, %v736
      %v812 = vpack.c.b16 %v739, %v738
      %v813 = vpack.c.b16 %v741, %v740
      %v814 = vpack.c.b16 %v743, %v742
      %v815 = vpack.c.b16 %v745, %v744
      %v816 = vpack.c.b16 %v747, %v746
      %v817 = vpack.c.b16 %v749, %v748
      %v818 = vpack.c.b16 %v751, %v750
      %v819 = vpack.c.b16 %v753, %v752
      %v820 = vpack.c.b16 %v755, %v754
      %v821 = vpack.c.b16 %v757, %v756
      %886 = vmatprep.subr.bf16.mxu0 0
      %887 = vmatpush1.bf16.msra.mxu0 %v765
      %888 = vmatprep.subr.bf16.mxu0 0
      %889 = vmatpush1.bf16.msra.mxu0 %v764
      %890 = vmatprep.subr.bf16.mxu0 0
      %891 = vmatpush1.bf16.msra.mxu0 %v763
      %892 = vmatprep.subr.bf16.mxu0 0
      %893 = vmatpush1.bf16.msra.mxu0 %v762
      %894 = vmatprep.subr.bf16.mxu0 0
      %895 = vmatpush1.bf16.msra.mxu0 %v761
      %896 = vmatprep.subr.bf16.mxu0 0
      %897 = vmatpush1.bf16.msra.mxu0 %v760
      %898 = vmatprep.subr.bf16.mxu0 0
      %899 = vmatpush1.bf16.msra.mxu0 %v759
      %900 = vmatprep.subr.bf16.mxu0 0
      %901 = vmatpush1.bf16.msra.mxu0 %v758
      %902 = vmatprep.subr.bf16.mxu0 0
      %903 = vmatpush2.bf16.msra.mxu0 %v773
      %904 = vmatprep.subr.bf16.mxu0 0
      %905 = vmatpush2.bf16.msra.mxu0 %v772
      %906 = vmatprep.subr.bf16.mxu0 0
      %907 = vmatpush2.bf16.msra.mxu0 %v771
      %908 = vmatprep.subr.bf16.mxu0 0
      %909 = vmatpush2.bf16.msra.mxu0 %v770
      %910 = vmatprep.subr.bf16.mxu0 0
      %911 = vmatpush2.bf16.msra.mxu0 %v769
      %912 = vmatprep.subr.bf16.mxu0 0
      %913 = vmatpush2.bf16.msra.mxu0 %v768
      %914 = vmatprep.subr.bf16.mxu0 0
      %915 = vmatpush2.bf16.msra.mxu0 %v767
      %916 = vmatprep.subr.bf16.mxu0 0
      %917 = vmatpush2.bf16.msra.mxu0 %v766
      %918 = vmatprep.mubr.bf16.mxu0 %v487
      %919 = vmatmul.mubr.bf16.gmra.mxu0 %v486
      %v920 = vpop.f32.mrf.mxu0
      %v921 = vadd.f32 0.0, %v920
      %v922 = vpop.f32.mrf.mxu0
      %v923 = vpop.f32.mrf.mxu0
      %v924 = vadd.f32 0.0, %v923
      %v925 = vpop.f32.mrf.mxu0
      %926 = vdwg.mxu0
      %927 = vmatprep.subr.bf16.mxu0 0
      %928 = vmatpush1.bf16.msra.mxu0 %v781
      %929 = vmatprep.subr.bf16.mxu0 0
      %930 = vmatpush1.bf16.msra.mxu0 %v780
      %931 = vmatprep.subr.bf16.mxu0 0
      %932 = vmatpush1.bf16.msra.mxu0 %v779
      %933 = vmatprep.subr.bf16.mxu0 0
      %934 = vmatpush1.bf16.msra.mxu0 %v778
      %935 = vmatprep.subr.bf16.mxu0 0
      %936 = vmatpush1.bf16.msra.mxu0 %v777
      %937 = vmatprep.subr.bf16.mxu0 0
      %938 = vmatpush1.bf16.msra.mxu0 %v776
      %939 = vmatprep.subr.bf16.mxu0 0
      %940 = vmatpush1.bf16.msra.mxu0 %v775
      %941 = vmatprep.subr.bf16.mxu0 0
      %942 = vmatpush1.bf16.msra.mxu0 %v774
      %943 = vmatprep.subr.bf16.mxu0 0
      %944 = vmatpush2.bf16.msra.mxu0 %v789
      %945 = vmatprep.subr.bf16.mxu0 0
      %946 = vmatpush2.bf16.msra.mxu0 %v788
      %947 = vmatprep.subr.bf16.mxu0 0
      %948 = vmatpush2.bf16.msra.mxu0 %v787
      %949 = vmatprep.subr.bf16.mxu0 0
      %950 = vmatpush2.bf16.msra.mxu0 %v786
      %951 = vmatprep.subr.bf16.mxu0 0
      %952 = vmatpush2.bf16.msra.mxu0 %v785
      %953 = vmatprep.subr.bf16.mxu0 0
      %954 = vmatpush2.bf16.msra.mxu0 %v784
      %955 = vmatprep.subr.bf16.mxu0 0
      %956 = vmatpush2.bf16.msra.mxu0 %v783
      %957 = vmatprep.subr.bf16.mxu0 0
      %958 = vmatpush2.bf16.msra.mxu0 %v782
      %959 = vmatprep.mubr.bf16.mxu0 %v489
      %960 = vmatmul.mubr.bf16.gmra.mxu0 %v488
      %v961 = vpop.f32.mrf.mxu0
      %v962 = vadd.f32 %v921, %v961
      %v963 = vpop.f32.mrf.mxu0
      %v964 = vpop.f32.mrf.mxu0
      %v965 = vadd.f32 %v924, %v964
      %v966 = vpop.f32.mrf.mxu0
      %967 = vdwg.mxu0
      %968 = vmatprep.subr.bf16.mxu0 0
      %969 = vmatpush1.bf16.msra.mxu0 %v797
      %970 = vmatprep.subr.bf16.mxu0 0
      %971 = vmatpush1.bf16.msra.mxu0 %v796
      %972 = vmatprep.subr.bf16.mxu0 0
      %973 = vmatpush1.bf16.msra.mxu0 %v795
      %974 = vmatprep.subr.bf16.mxu0 0
      %975 = vmatpush1.bf16.msra.mxu0 %v794
      %976 = vmatprep.subr.bf16.mxu0 0
      %977 = vmatpush1.bf16.msra.mxu0 %v793
      %978 = vmatprep.subr.bf16.mxu0 0
      %979 = vmatpush1.bf16.msra.mxu0 %v792
      %980 = vmatprep.subr.bf16.mxu0 0
      %981 = vmatpush1.bf16.msra.mxu0 %v791
      %982 = vmatprep.subr.bf16.mxu0 0
      %983 = vmatpush1.bf16.msra.mxu0 %v790
      %984 = vmatprep.subr.bf16.mxu0 0
      %985 = vmatpush2.bf16.msra.mxu0 %v805
      %986 = vmatprep.subr.bf16.mxu0 0
      %987 = vmatpush2.bf16.msra.mxu0 %v804
      %988 = vmatprep.subr.bf16.mxu0 0
      %989 = vmatpush2.bf16.msra.mxu0 %v803
      %990 = vmatprep.subr.bf16.mxu0 0
      %991 = vmatpush2.bf16.msra.mxu0 %v802
      %992 = vmatprep.subr.bf16.mxu0 0
      %993 = vmatpush2.bf16.msra.mxu0 %v801
      %994 = vmatprep.subr.bf16.mxu0 0
      %995 = vmatpush2.bf16.msra.mxu0 %v800
      %996 = vmatprep.subr.bf16.mxu0 0
      %997 = vmatpush2.bf16.msra.mxu0 %v799
      %998 = vmatprep.subr.bf16.mxu0 0
      %999 = vmatpush2.bf16.msra.mxu0 %v798
      %1000 = vmatprep.mubr.bf16.mxu0 %v491
      %1001 = vmatmul.mubr.bf16.gmra.mxu0 %v490
      %v1002 = vpop.f32.mrf.mxu0
      %v1003 = vadd.f32 %v962, %v1002
      %v1004 = vpop.f32.mrf.mxu0
      %v1005 = vpop.f32.mrf.mxu0
      %v1006 = vadd.f32 %v965, %v1005
      %v1007 = vpop.f32.mrf.mxu0
      %1008 = vdwg.mxu0
      %1009 = vmatprep.subr.bf16.mxu0 0
      %1010 = vmatpush1.bf16.msra.mxu0 %v813
      %1011 = vmatprep.subr.bf16.mxu0 0
      %1012 = vmatpush1.bf16.msra.mxu0 %v812
      %1013 = vmatprep.subr.bf16.mxu0 0
      %1014 = vmatpush1.bf16.msra.mxu0 %v811
      %1015 = vmatprep.subr.bf16.mxu0 0
      %1016 = vmatpush1.bf16.msra.mxu0 %v810
      %1017 = vmatprep.subr.bf16.mxu0 0
      %1018 = vmatpush1.bf16.msra.mxu0 %v809
      %1019 = vmatprep.subr.bf16.mxu0 0
      %1020 = vmatpush1.bf16.msra.mxu0 %v808
      %1021 = vmatprep.subr.bf16.mxu0 0
      %1022 = vmatpush1.bf16.msra.mxu0 %v807
      %1023 = vmatprep.subr.bf16.mxu0 0
      %1024 = vmatpush1.bf16.msra.mxu0 %v806
      %1025 = vmatprep.subr.bf16.mxu0 0
      %1026 = vmatpush2.bf16.msra.mxu0 %v821
      %1027 = vmatprep.subr.bf16.mxu0 0
      %1028 = vmatpush2.bf16.msra.mxu0 %v820
      %1029 = vmatprep.subr.bf16.mxu0 0
      %1030 = vmatpush2.bf16.msra.mxu0 %v819
      %1031 = vmatprep.subr.bf16.mxu0 0
      %1032 = vmatpush2.bf16.msra.mxu0 %v818
      %1033 = vmatprep.subr.bf16.mxu0 0
      %1034 = vmatpush2.bf16.msra.mxu0 %v817
      %1035 = vmatprep.subr.bf16.mxu0 0
      %1036 = vmatpush2.bf16.msra.mxu0 %v816
      %1037 = vmatprep.subr.bf16.mxu0 0
      %1038 = vmatpush2.bf16.msra.mxu0 %v815
      %1039 = vmatprep.subr.bf16.mxu0 0
      %1040 = vmatpush2.bf16.msra.mxu0 %v814
      %1041 = vmatprep.mubr.bf16.mxu0 %v493
      %1042 = vmatmul.mubr.bf16.gmra.mxu0 %v492
      %v1043 = vpop.f32.mrf.mxu0
      %v1044 = vadd.f32 %v1003, %v1043
      %v1045 = vpop.f32.mrf.mxu0
      %v1046 = vpop.f32.mrf.mxu0
      %v1047 = vadd.f32 %v1006, %v1046
      %v1048 = vpop.f32.mrf.mxu0
      %1049 = vdwg.mxu0
      %v1050 = vadd.f32 %v324, %v1044
      %v1051 = vadd.f32 %v325, %v1047
      %1052 = vst [vmem:[#allocation2] sm:$0xff] %v1050
      %1053 = vst [vmem:[#allocation2 + $0x8] sm:$0xff] %v1051
      // Predicated region
      $region33: #{icp_encoder_big_forward.5} parent=27 // pred_check
        %p1054 = pneg %p318
      $region34: #{icp_encoder_big_forward.5} parent=27 // pred_check_branch
        %1056 = sbr.rel (%p1054) target = $region36
      $region35: #{icp_encoder_big_forward.5} parent=27 // pred_region
        %v1057 = vld [vmem:[#allocation2] sm:$0xff]
        %v1058 = vld [vmem:[#allocation2 + $0x8] sm:$0xff]
        %v1059 = vadd.f32 %v1057, %v1058
        %v1060 = vrot.slane %v1059, 4
        %v1061 = vadd.f32 %v1059, %v1060
        %v1062 = vrot.slane %v1061, 2
        %v1063 = vadd.f32 %v1061, %v1062
        %v1064 = vrot.slane %v1063, 1
        %v1065 = vadd.f32 %v1063, %v1064
        %v1066 = vmul.f32 %v1057, %v1057
        %v1067 = vmul.f32 %v1058, %v1058
        %v1068 = vadd.f32 %v1066, %v1067
        %v1069 = vrot.slane %v1068, 4
        %v1070 = vadd.f32 %v1068, %v1069
        %v1071 = vrot.slane %v1070, 2
        %v1072 = vadd.f32 %v1070, %v1071
        %v1073 = vrot.slane %v1072, 1
        %v1074 = vadd.f32 %v1072, %v1073
        %1075 = vst [vmem:[%s309] sm:$0xff] %v1065
        %1076 = vst [vmem:[%s316] sm:$0xff] %v1074
        %v1077 = vpack.c.bf16 %v1058, %v1057
        %v1079 = vunpack.c.l.b16 %v1077
        %v1080 = vunpack.c.h.b16 %v1077
        %v1081 = vpack.c.b16 %v1079, %v1079
        %v1082 = vpack.c.b16 %v1080, %v1080
        %1085 = vst [vmem:[%s301] sm:$0xf] %v1081
        %1086 = vst [vmem:[%s301 + $0x4] sm:$0xf] %v1082
      $region36: #{icp_encoder_big_forward.5} parent=27 // pred_fallthru
        _
      %s1087 = smul.u32 2, %s21
      %p1088 = scmp.lt.s32.totalorder %s1087, 3
      %s1089 = scalar_select %p1088, %s1087, 3
      %p1090 = scmp.lt.s32.totalorder %s22, 0
      %s1091 = scalar_select %p1090, %s22, 0
      %s1092 = sadd.s32 %s1091, %s1089
      %s1093 = smul.addr %s1092, 4
      %s1094 = scalar_lea.vmem %s2, %s1093
      %p1095 = scmp.lt.s32.totalorder %s21, 1
      %s1096 = scalar_select %p1095, %s21, 1
      %p1097 = scmp.lt.s32.totalorder %s22, 0
      %s1098 = scalar_select %p1097, %s22, 0
      %s1099 = sadd.s32 %s1098, %s1096
      %s1100 = smul.addr %s1099, 8
      %s1101 = scalar_lea.vmem %s3, %s1100
      %p1102 = scmp.lt.s32.totalorder %s21, 1
      %s1103 = scalar_select %p1102, %s21, 1
      %p1104 = scmp.lt.s32.totalorder %s22, 0
      %s1105 = scalar_select %p1104, %s22, 0
      %s1106 = sadd.s32 %s1105, %s1103
      %s1107 = smul.addr %s1106, 8
      %s1108 = scalar_lea.vmem %s4, %s1107
      // Predicated region
      $region37: #{icp_encoder_big_forward.5} parent=27 // pred_check
        %p1109 = pneg %p111
      $region38: #{icp_encoder_big_forward.5} parent=27 // pred_check_branch
        %1111 = sbr.rel (%p1109) target = $region40
      $region39: #{icp_encoder_big_forward.5} parent=27 // pred_region
        %s1112 = smul.u32 2, %s21
      $region40: #{icp_encoder_big_forward.5} parent=27 // pred_fallthru
        _
      // Predicated region
      $region41: #{icp_encoder_big_forward.5} parent=27 // pred_check
        %p1113 = pneg %p139
      $region42: #{icp_encoder_big_forward.5} parent=27 // pred_check_branch
        %1115 = sbr.rel (%p1113) target = $region44
      $region43: #{icp_encoder_big_forward.5} parent=27 // pred_region
        _
      $region44: #{icp_encoder_big_forward.5} parent=27 // pred_fallthru
        _
      // Predicated region
      $region45: #{icp_encoder_big_forward.5} parent=27 // pred_check
        %p1116 = pneg %p167
      $region46: #{icp_encoder_big_forward.5} parent=27 // pred_check_branch
        %1118 = sbr.rel (%p1116) target = $region48
      $region47: #{icp_encoder_big_forward.5} parent=27 // pred_region
        _
      $region48: #{icp_encoder_big_forward.5} parent=27 // pred_fallthru
        _
    $region28: #{icp_encoder_big_forward.5} parent=5 // pred_fallthru
      _
    %p1119 = scmp.le.s32.totalorder 2, %s11
    // Predicated region
    $region49: #{icp_encoder_big_forward.5} parent=5 // pred_check
      %p1120 = pneg %p1119
    $region50: #{icp_encoder_big_forward.5} parent=5 // pred_check_branch
      %1122 = sbr.rel (%p1120) target = $region52
    $region51: #{icp_encoder_big_forward.5} parent=5 // pred_region
      %s1123 = ssub.s32 %s11, 2
      // Predicated region
      $region53: #{icp_encoder_big_forward.5} parent=51 // pred_check
        %p1124 = pneg %p117
      $region54: #{icp_encoder_big_forward.5} parent=51 // pred_check_branch
        %1126 = sbr.rel (%p1124) target = $region56
      $region55: #{icp_encoder_big_forward.5} parent=51 // pred_region
        %s1127 = smul.u32 2, %s24
        %p1128 = scmp.lt.s32.totalorder %s1127, 3
        %s1129 = scalar_select %p1128, %s1127, 3
        %p1130 = scmp.lt.s32.totalorder %s25, 0
        %s1131 = scalar_select %p1130, %s25, 0
        %s1132 = sadd.s32 %s1131, %s1129
        %s1133 = smul.addr %s1132, 4
        %s1134 = scalar_lea.vmem %s2, %s1133
      $region56: #{icp_encoder_big_forward.5} parent=51 // pred_fallthru
        _
      // Predicated region
      $region57: #{icp_encoder_big_forward.5} parent=51 // pred_check
        %p1135 = pneg %p145
      $region58: #{icp_encoder_big_forward.5} parent=51 // pred_check_branch
        %1137 = sbr.rel (%p1135) target = $region60
      $region59: #{icp_encoder_big_forward.5} parent=51 // pred_region
        %p1138 = scmp.lt.s32.totalorder %s24, 1
        %s1139 = scalar_select %p1138, %s24, 1
        %p1140 = scmp.lt.s32.totalorder %s25, 0
        %s1141 = scalar_select %p1140, %s25, 0
        %s1142 = sadd.s32 %s1141, %s1139
        %s1143 = smul.addr %s1142, 8
        %s1144 = scalar_lea.vmem %s3, %s1143
      $region60: #{icp_encoder_big_forward.5} parent=51 // pred_fallthru
        _
      // Predicated region
      $region61: #{icp_encoder_big_forward.5} parent=51 // pred_check
        %p1145 = pneg %p173
      $region62: #{icp_encoder_big_forward.5} parent=51 // pred_check_branch
        %1147 = sbr.rel (%p1145) target = $region64
      $region63: #{icp_encoder_big_forward.5} parent=51 // pred_region
        %p1148 = scmp.lt.s32.totalorder %s24, 1
        %s1149 = scalar_select %p1148, %s24, 1
        %p1150 = scmp.lt.s32.totalorder %s25, 0
        %s1151 = scalar_select %p1150, %s25, 0
        %s1152 = sadd.s32 %s1151, %s1149
        %s1153 = smul.addr %s1152, 8
        %s1154 = scalar_lea.vmem %s4, %s1153
      $region64: #{icp_encoder_big_forward.5} parent=51 // pred_fallthru
        _
    $region52: #{icp_encoder_big_forward.5} parent=5 // pred_fallthru
      _
  $region6: #{icp_encoder_big_forward.5} parent=0 // loop_footer
    %s15 = sadd.s32 1, %s11
  $region7: #{icp_encoder_big_forward.5} parent=0 // loop_footer_branch
    %10 = sbr.rel target = $region3
  $region8: #{icp_encoder_big_forward.5} parent=0 // loop_exit
    _

// kernel: icp_encoder_big_forward.7
$region0: #{icp_encoder_big_forward.7}
  #allocation0 [shape = 'u32[]', space=smem, size = 0x4, offset = 0x4, fixed_abs, tag = 'smem constant byte address 0x4 - core index']
  #allocation1 [shape = 'u32[144,128]{1,0:T(1,128)}', space=vmem, size = 0x12000, scoped, tag = 'internal scratch']
  #allocation2 [shape = 'f32[8,128]{1,0:T(8,128)}', space=vmem, size = 0x1000, scoped, tag = 'scratch operand']
  %s0 = inlined_call_operand.vmem [shape: bf16[8,2048], index: 0, kind: input, shape index: {}]
  %s1 = inlined_call_operand.vmem [shape: bf16[2048,128], index: 1, kind: input, shape index: {}]
  %s2 = inlined_call_operand.vmem [shape: f32[1,128], index: 2, kind: input, shape index: {}]
  %s3 = inlined_call_operand.vmem [shape: f32[8,128], index: 3, kind: output, shape index: {}]
  %s4 = sld [smem:[#allocation0]]
  $region30: #{icp_encoder_big_forward.7} parent=0
    _
  %s6 = ssub.s32 1, %s4
  %s7 = scalar_select 0, %s6, %s4
  // Predicated region
  $region2: #{icp_encoder_big_forward.7} parent=0 // pred_check
    _
  $region3: #{icp_encoder_big_forward.7} parent=0 // pred_check_branch
    %9 = sbr.rel (0) target = $region5
  $region4: #{icp_encoder_big_forward.7} parent=0 // pred_region
    _
  $region5: #{icp_encoder_big_forward.7} parent=0 // pred_fallthru
    _
  // Predicated region
  $region6: #{icp_encoder_big_forward.7} parent=0 // pred_check
    _
  $region7: #{icp_encoder_big_forward.7} parent=0 // pred_check_branch
    %11 = sbr.rel (0) target = $region9
  $region8: #{icp_encoder_big_forward.7} parent=0 // pred_region
    _
  $region9: #{icp_encoder_big_forward.7} parent=0 // pred_fallthru
    _
  // Predicated region
  $region10: #{icp_encoder_big_forward.7} parent=0 // pred_check
    _
  $region11: #{icp_encoder_big_forward.7} parent=0 // pred_check_branch
    %13 = sbr.rel (0) target = $region13
  $region12: #{icp_encoder_big_forward.7} parent=0 // pred_region
    _
  $region13: #{icp_encoder_big_forward.7} parent=0 // pred_fallthru
    _
  %p15 = scmp.eq.s32.totalorder 0, 0
  // Predicated region
  $region14: #{icp_encoder_big_forward.7} parent=0 // pred_check
    %p16 = pneg %p15
  $region15: #{icp_encoder_big_forward.7} parent=0 // pred_check_branch
    %18 = sbr.rel (%p16) target = $region17
  $region16: #{icp_encoder_big_forward.7} parent=0 // pred_region
    %19 = vst [vmem:[#allocation2] sm:$0xff] 0.0
  $region17: #{icp_encoder_big_forward.7} parent=0 // pred_fallthru
    _
  %v20 = vld [vmem:[#allocation2] sm:$0xff]
  %v21 = vld [vmem:[%s0] sm:$0xff]
  %v22 = vld [vmem:[%s0 + $0x8] sm:$0xff]
  %v23 = vld [vmem:[%s0 + $0x10] sm:$0xff]
  %v24 = vld [vmem:[%s0 + $0x18] sm:$0xff]
  %v25 = vld [vmem:[%s0 + $0x20] sm:$0xff]
  %v26 = vld [vmem:[%s0 + $0x28] sm:$0xff]
  %v27 = vld [vmem:[%s0 + $0x30] sm:$0xff]
  %v28 = vld [vmem:[%s0 + $0x38] sm:$0xff]
  %v29 = vld [vmem:[%s1] sm:$0xf]
  %v30 = vld [vmem:[%s1 + $0x4] sm:$0xf]
  %v31 = vld [vmem:[%s1 + $0x8] sm:$0xf]
  %v32 = vld [vmem:[%s1 + $0xc] sm:$0xf]
  %v33 = vld [vmem:[%s1 + $0x10] sm:$0xf]
  %v34 = vld [vmem:[%s1 + $0x14] sm:$0xf]
  %v35 = vld [vmem:[%s1 + $0x18] sm:$0xf]
  %v36 = vld [vmem:[%s1 + $0x1c] sm:$0xf]
  %v37 = vld [vmem:[%s1 + $0x20] sm:$0xf]
  %v38 = vld [vmem:[%s1 + $0x24] sm:$0xf]
  %v39 = vld [vmem:[%s1 + $0x28] sm:$0xf]
  %v40 = vld [vmem:[%s1 + $0x2c] sm:$0xf]
  %v41 = vld [vmem:[%s1 + $0x30] sm:$0xf]
  %v42 = vld [vmem:[%s1 + $0x34] sm:$0xf]
  %v43 = vld [vmem:[%s1 + $0x38] sm:$0xf]
  %v44 = vld [vmem:[%s1 + $0x3c] sm:$0xf]
  %v45 = vld [vmem:[%s1 + $0x40] sm:$0xf]
  %v46 = vld [vmem:[%s1 + $0x44] sm:$0xf]
  %v47 = vld [vmem:[%s1 + $0x48] sm:$0xf]
  %v48 = vld [vmem:[%s1 + $0x4c] sm:$0xf]
  %v49 = vld [vmem:[%s1 + $0x50] sm:$0xf]
  %v50 = vld [vmem:[%s1 + $0x54] sm:$0xf]
  %v51 = vld [vmem:[%s1 + $0x58] sm:$0xf]
  %v52 = vld [vmem:[%s1 + $0x5c] sm:$0xf]
  %v53 = vld [vmem:[%s1 + $0x60] sm:$0xf]
  %v54 = vld [vmem:[%s1 + $0x64] sm:$0xf]
  %v55 = vld [vmem:[%s1 + $0x68] sm:$0xf]
  %v56 = vld [vmem:[%s1 + $0x6c] sm:$0xf]
  %v57 = vld [vmem:[%s1 + $0x70] sm:$0xf]
  %v58 = vld [vmem:[%s1 + $0x74] sm:$0xf]
  %v59 = vld [vmem:[%s1 + $0x78] sm:$0xf]
  %v60 = vld [vmem:[%s1 + $0x7c] sm:$0xf]
  %v61 = vld [vmem:[%s1 + $0x80] sm:$0xf]
  %v62 = vld [vmem:[%s1 + $0x84] sm:$0xf]
  %v63 = vld [vmem:[%s1 + $0x88] sm:$0xf]
  %v64 = vld [vmem:[%s1 + $0x8c] sm:$0xf]
  %v65 = vld [vmem:[%s1 + $0x90] sm:$0xf]
  %v66 = vld [vmem:[%s1 + $0x94] sm:$0xf]
  %v67 = vld [vmem:[%s1 + $0x98] sm:$0xf]
  %v68 = vld [vmem:[%s1 + $0x9c] sm:$0xf]
  %v69 = vld [vmem:[%s1 + $0xa0] sm:$0xf]
  %v70 = vld [vmem:[%s1 + $0xa4] sm:$0xf]
  %v71 = vld [vmem:[%s1 + $0xa8] sm:$0xf]
  %v72 = vld [vmem:[%s1 + $0xac] sm:$0xf]
  %v73 = vld [vmem:[%s1 + $0xb0] sm:$0xf]
  %v74 = vld [vmem:[%s1 + $0xb4] sm:$0xf]
  %v75 = vld [vmem:[%s1 + $0xb8] sm:$0xf]
  %v76 = vld [vmem:[%s1 + $0xbc] sm:$0xf]
  %v77 = vld [vmem:[%s1 + $0xc0] sm:$0xf]
  %v78 = vld [vmem:[%s1 + $0xc4] sm:$0xf]
  %v79 = vld [vmem:[%s1 + $0xc8] sm:$0xf]
  %v80 = vld [vmem:[%s1 + $0xcc] sm:$0xf]
  %v81 = vld [vmem:[%s1 + $0xd0] sm:$0xf]
  %v82 = vld [vmem:[%s1 + $0xd4] sm:$0xf]
  %v83 = vld [vmem:[%s1 + $0xd8] sm:$0xf]
  %v84 = vld [vmem:[%s1 + $0xdc] sm:$0xf]
  %v85 = vld [vmem:[%s1 + $0xe0] sm:$0xf]
  %v86 = vld [vmem:[%s1 + $0xe4] sm:$0xf]
  %v87 = vld [vmem:[%s1 + $0xe8] sm:$0xf]
  %v88 = vld [vmem:[%s1 + $0xec] sm:$0xf]
  %v89 = vld [vmem:[%s1 + $0xf0] sm:$0xf]
  %v90 = vld [vmem:[%s1 + $0xf4] sm:$0xf]
  %v91 = vld [vmem:[%s1 + $0xf8] sm:$0xf]
  %v92 = vld [vmem:[%s1 + $0xfc] sm:$0xf]
  %v93 = vld [vmem:[%s1 + $0x100] sm:$0xf]
  %v94 = vld [vmem:[%s1 + $0x104] sm:$0xf]
  %v95 = vld [vmem:[%s1 + $0x108] sm:$0xf]
  %v96 = vld [vmem:[%s1 + $0x10c] sm:$0xf]
  %v97 = vld [vmem:[%s1 + $0x110] sm:$0xf]
  %v98 = vld [vmem:[%s1 + $0x114] sm:$0xf]
  %v99 = vld [vmem:[%s1 + $0x118] sm:$0xf]
  %v100 = vld [vmem:[%s1 + $0x11c] sm:$0xf]
  %v101 = vld [vmem:[%s1 + $0x120] sm:$0xf]
  %v102 = vld [vmem:[%s1 + $0x124] sm:$0xf]
  %v103 = vld [vmem:[%s1 + $0x128] sm:$0xf]
  %v104 = vld [vmem:[%s1 + $0x12c] sm:$0xf]
  %v105 = vld [vmem:[%s1 + $0x130] sm:$0xf]
  %v106 = vld [vmem:[%s1 + $0x134] sm:$0xf]
  %v107 = vld [vmem:[%s1 + $0x138] sm:$0xf]
  %v108 = vld [vmem:[%s1 + $0x13c] sm:$0xf]
  %v109 = vld [vmem:[%s1 + $0x140] sm:$0xf]
  %v110 = vld [vmem:[%s1 + $0x144] sm:$0xf]
  %v111 = vld [vmem:[%s1 + $0x148] sm:$0xf]
  %v112 = vld [vmem:[%s1 + $0x14c] sm:$0xf]
  %v113 = vld [vmem:[%s1 + $0x150] sm:$0xf]
  %v114 = vld [vmem:[%s1 + $0x154] sm:$0xf]
  %v115 = vld [vmem:[%s1 + $0x158] sm:$0xf]
  %v116 = vld [vmem:[%s1 + $0x15c] sm:$0xf]
  %v117 = vld [vmem:[%s1 + $0x160] sm:$0xf]
  %v118 = vld [vmem:[%s1 + $0x164] sm:$0xf]
  %v119 = vld [vmem:[%s1 + $0x168] sm:$0xf]
  %v120 = vld [vmem:[%s1 + $0x16c] sm:$0xf]
  %v121 = vld [vmem:[%s1 + $0x170] sm:$0xf]
  %v122 = vld [vmem:[%s1 + $0x174] sm:$0xf]
  %v123 = vld [vmem:[%s1 + $0x178] sm:$0xf]
  %v124 = vld [vmem:[%s1 + $0x17c] sm:$0xf]
  %v125 = vld [vmem:[%s1 + $0x180] sm:$0xf]
  %v126 = vld [vmem:[%s1 + $0x184] sm:$0xf]
  %v127 = vld [vmem:[%s1 + $0x188] sm:$0xf]
  %v128 = vld [vmem:[%s1 + $0x18c] sm:$0xf]
  %v129 = vld [vmem:[%s1 + $0x190] sm:$0xf]
  %v130 = vld [vmem:[%s1 + $0x194] sm:$0xf]
  %v131 = vld [vmem:[%s1 + $0x198] sm:$0xf]
  %v132 = vld [vmem:[%s1 + $0x19c] sm:$0xf]
  %v133 = vld [vmem:[%s1 + $0x1a0] sm:$0xf]
  %v134 = vld [vmem:[%s1 + $0x1a4] sm:$0xf]
  %v135 = vld [vmem:[%s1 + $0x1a8] sm:$0xf]
  %v136 = vld [vmem:[%s1 + $0x1ac] sm:$0xf]
  %v137 = vld [vmem:[%s1 + $0x1b0] sm:$0xf]
  %v138 = vld [vmem:[%s1 + $0x1b4] sm:$0xf]
  %v139 = vld [vmem:[%s1 + $0x1b8] sm:$0xf]
  %v140 = vld [vmem:[%s1 + $0x1bc] sm:$0xf]
  %v141 = vld [vmem:[%s1 + $0x1c0] sm:$0xf]
  %v142 = vld [vmem:[%s1 + $0x1c4] sm:$0xf]
  %v143 = vld [vmem:[%s1 + $0x1c8] sm:$0xf]
  %v144 = vld [vmem:[%s1 + $0x1cc] sm:$0xf]
  %v145 = vld [vmem:[%s1 + $0x1d0] sm:$0xf]
  %v146 = vld [vmem:[%s1 + $0x1d4] sm:$0xf]
  %v147 = vld [vmem:[%s1 + $0x1d8] sm:$0xf]
  %v148 = vld [vmem:[%s1 + $0x1dc] sm:$0xf]
  %v149 = vld [vmem:[%s1 + $0x1e0] sm:$0xf]
  %v150 = vld [vmem:[%s1 + $0x1e4] sm:$0xf]
  %v151 = vld [vmem:[%s1 + $0x1e8] sm:$0xf]
  %v152 = vld [vmem:[%s1 + $0x1ec] sm:$0xf]
  %v153 = vld [vmem:[%s1 + $0x1f0] sm:$0xf]
  %v154 = vld [vmem:[%s1 + $0x1f4] sm:$0xf]
  %v155 = vld [vmem:[%s1 + $0x1f8] sm:$0xf]
  %v156 = vld [vmem:[%s1 + $0x1fc] sm:$0xf]
  %v157 = vld [vmem:[%s1 + $0x200] sm:$0xf]
  %v158 = vld [vmem:[%s1 + $0x204] sm:$0xf]
  %v159 = vld [vmem:[%s1 + $0x208] sm:$0xf]
  %v160 = vld [vmem:[%s1 + $0x20c] sm:$0xf]
  %v161 = vld [vmem:[%s1 + $0x210] sm:$0xf]
  %v162 = vld [vmem:[%s1 + $0x214] sm:$0xf]
  %v163 = vld [vmem:[%s1 + $0x218] sm:$0xf]
  %v164 = vld [vmem:[%s1 + $0x21c] sm:$0xf]
  %v165 = vld [vmem:[%s1 + $0x220] sm:$0xf]
  %v166 = vld [vmem:[%s1 + $0x224] sm:$0xf]
  %v167 = vld [vmem:[%s1 + $0x228] sm:$0xf]
  %v168 = vld [vmem:[%s1 + $0x22c] sm:$0xf]
  %v169 = vld [vmem:[%s1 + $0x230] sm:$0xf]
  %v170 = vld [vmem:[%s1 + $0x234] sm:$0xf]
  %v171 = vld [vmem:[%s1 + $0x238] sm:$0xf]
  %v172 = vld [vmem:[%s1 + $0x23c] sm:$0xf]
  %v173 = vld [vmem:[%s1 + $0x240] sm:$0xf]
  %v174 = vld [vmem:[%s1 + $0x244] sm:$0xf]
  %v175 = vld [vmem:[%s1 + $0x248] sm:$0xf]
  %v176 = vld [vmem:[%s1 + $0x24c] sm:$0xf]
  %v177 = vld [vmem:[%s1 + $0x250] sm:$0xf]
  %v178 = vld [vmem:[%s1 + $0x254] sm:$0xf]
  %v179 = vld [vmem:[%s1 + $0x258] sm:$0xf]
  %v180 = vld [vmem:[%s1 + $0x25c] sm:$0xf]
  %v181 = vld [vmem:[%s1 + $0x260] sm:$0xf]
  %v182 = vld [vmem:[%s1 + $0x264] sm:$0xf]
  %v183 = vld [vmem:[%s1 + $0x268] sm:$0xf]
  %v184 = vld [vmem:[%s1 + $0x26c] sm:$0xf]
  %v185 = vld [vmem:[%s1 + $0x270] sm:$0xf]
  %v186 = vld [vmem:[%s1 + $0x274] sm:$0xf]
  %v187 = vld [vmem:[%s1 + $0x278] sm:$0xf]
  %v188 = vld [vmem:[%s1 + $0x27c] sm:$0xf]
  %v189 = vld [vmem:[%s1 + $0x280] sm:$0xf]
  %v190 = vld [vmem:[%s1 + $0x284] sm:$0xf]
  %v191 = vld [vmem:[%s1 + $0x288] sm:$0xf]
  %v192 = vld [vmem:[%s1 + $0x28c] sm:$0xf]
  %v193 = vld [vmem:[%s1 + $0x290] sm:$0xf]
  %v194 = vld [vmem:[%s1 + $0x294] sm:$0xf]
  %v195 = vld [vmem:[%s1 + $0x298] sm:$0xf]
  %v196 = vld [vmem:[%s1 + $0x29c] sm:$0xf]
  %v197 = vld [vmem:[%s1 + $0x2a0] sm:$0xf]
  %v198 = vld [vmem:[%s1 + $0x2a4] sm:$0xf]
  %v199 = vld [vmem:[%s1 + $0x2a8] sm:$0xf]
  %v200 = vld [vmem:[%s1 + $0x2ac] sm:$0xf]
  %v201 = vld [vmem:[%s1 + $0x2b0] sm:$0xf]
  %v202 = vld [vmem:[%s1 + $0x2b4] sm:$0xf]
  %v203 = vld [vmem:[%s1 + $0x2b8] sm:$0xf]
  %v204 = vld [vmem:[%s1 + $0x2bc] sm:$0xf]
  %v205 = vld [vmem:[%s1 + $0x2c0] sm:$0xf]
  %v206 = vld [vmem:[%s1 + $0x2c4] sm:$0xf]
  %v207 = vld [vmem:[%s1 + $0x2c8] sm:$0xf]
  %v208 = vld [vmem:[%s1 + $0x2cc] sm:$0xf]
  %v209 = vld [vmem:[%s1 + $0x2d0] sm:$0xf]
  %v210 = vld [vmem:[%s1 + $0x2d4] sm:$0xf]
  %v211 = vld [vmem:[%s1 + $0x2d8] sm:$0xf]
  %v212 = vld [vmem:[%s1 + $0x2dc] sm:$0xf]
  %v213 = vld [vmem:[%s1 + $0x2e0] sm:$0xf]
  %v214 = vld [vmem:[%s1 + $0x2e4] sm:$0xf]
  %v215 = vld [vmem:[%s1 + $0x2e8] sm:$0xf]
  %v216 = vld [vmem:[%s1 + $0x2ec] sm:$0xf]
  %v217 = vld [vmem:[%s1 + $0x2f0] sm:$0xf]
  %v218 = vld [vmem:[%s1 + $0x2f4] sm:$0xf]
  %v219 = vld [vmem:[%s1 + $0x2f8] sm:$0xf]
  %v220 = vld [vmem:[%s1 + $0x2fc] sm:$0xf]
  %v221 = vld [vmem:[%s1 + $0x300] sm:$0xf]
  %v222 = vld [vmem:[%s1 + $0x304] sm:$0xf]
  %v223 = vld [vmem:[%s1 + $0x308] sm:$0xf]
  %v224 = vld [vmem:[%s1 + $0x30c] sm:$0xf]
  %v225 = vld [vmem:[%s1 + $0x310] sm:$0xf]
  %v226 = vld [vmem:[%s1 + $0x314] sm:$0xf]
  %v227 = vld [vmem:[%s1 + $0x318] sm:$0xf]
  %v228 = vld [vmem:[%s1 + $0x31c] sm:$0xf]
  %v229 = vld [vmem:[%s1 + $0x320] sm:$0xf]
  %v230 = vld [vmem:[%s1 + $0x324] sm:$0xf]
  %v231 = vld [vmem:[%s1 + $0x328] sm:$0xf]
  %v232 = vld [vmem:[%s1 + $0x32c] sm:$0xf]
  %v233 = vld [vmem:[%s1 + $0x330] sm:$0xf]
  %v234 = vld [vmem:[%s1 + $0x334] sm:$0xf]
  %v235 = vld [vmem:[%s1 + $0x338] sm:$0xf]
  %v236 = vld [vmem:[%s1 + $0x33c] sm:$0xf]
  %v237 = vld [vmem:[%s1 + $0x340] sm:$0xf]
  %v238 = vld [vmem:[%s1 + $0x344] sm:$0xf]
  %v239 = vld [vmem:[%s1 + $0x348] sm:$0xf]
  %v240 = vld [vmem:[%s1 + $0x34c] sm:$0xf]
  %v241 = vld [vmem:[%s1 + $0x350] sm:$0xf]
  %v242 = vld [vmem:[%s1 + $0x354] sm:$0xf]
  %v243 = vld [vmem:[%s1 + $0x358] sm:$0xf]
  %v244 = vld [vmem:[%s1 + $0x35c] sm:$0xf]
  %v245 = vld [vmem:[%s1 + $0x360] sm:$0xf]
  %v246 = vld [vmem:[%s1 + $0x364] sm:$0xf]
  %v247 = vld [vmem:[%s1 + $0x368] sm:$0xf]
  %v248 = vld [vmem:[%s1 + $0x36c] sm:$0xf]
  %v249 = vld [vmem:[%s1 + $0x370] sm:$0xf]
  %v250 = vld [vmem:[%s1 + $0x374] sm:$0xf]
  %v251 = vld [vmem:[%s1 + $0x378] sm:$0xf]
  %v252 = vld [vmem:[%s1 + $0x37c] sm:$0xf]
  %v253 = vld [vmem:[%s1 + $0x380] sm:$0xf]
  %v254 = vld [vmem:[%s1 + $0x384] sm:$0xf]
  %v255 = vld [vmem:[%s1 + $0x388] sm:$0xf]
  %v256 = vld [vmem:[%s1 + $0x38c] sm:$0xf]
  %v257 = vld [vmem:[%s1 + $0x390] sm:$0xf]
  %v258 = vld [vmem:[%s1 + $0x394] sm:$0xf]
  %v259 = vld [vmem:[%s1 + $0x398] sm:$0xf]
  %v260 = vld [vmem:[%s1 + $0x39c] sm:$0xf]
  %v261 = vld [vmem:[%s1 + $0x3a0] sm:$0xf]
  %v262 = vld [vmem:[%s1 + $0x3a4] sm:$0xf]
  %v263 = vld [vmem:[%s1 + $0x3a8] sm:$0xf]
  %v264 = vld [vmem:[%s1 + $0x3ac] sm:$0xf]
  %v265 = vld [vmem:[%s1 + $0x3b0] sm:$0xf]
  %v266 = vld [vmem:[%s1 + $0x3b4] sm:$0xf]
  %v267 = vld [vmem:[%s1 + $0x3b8] sm:$0xf]
  %v268 = vld [vmem:[%s1 + $0x3bc] sm:$0xf]
  %v269 = vld [vmem:[%s1 + $0x3c0] sm:$0xf]
  %v270 = vld [vmem:[%s1 + $0x3c4] sm:$0xf]
  %v271 = vld [vmem:[%s1 + $0x3c8] sm:$0xf]
  %v272 = vld [vmem:[%s1 + $0x3cc] sm:$0xf]
  %v273 = vld [vmem:[%s1 + $0x3d0] sm:$0xf]
  %v274 = vld [vmem:[%s1 + $0x3d4] sm:$0xf]
  %v275 = vld [vmem:[%s1 + $0x3d8] sm:$0xf]
  %v276 = vld [vmem:[%s1 + $0x3dc] sm:$0xf]
  %v277 = vld [vmem:[%s1 + $0x3e0] sm:$0xf]
  %v278 = vld [vmem:[%s1 + $0x3e4] sm:$0xf]
  %v279 = vld [vmem:[%s1 + $0x3e8] sm:$0xf]
  %v280 = vld [vmem:[%s1 + $0x3ec] sm:$0xf]
  %v281 = vld [vmem:[%s1 + $0x3f0] sm:$0xf]
  %v282 = vld [vmem:[%s1 + $0x3f4] sm:$0xf]
  %v283 = vld [vmem:[%s1 + $0x3f8] sm:$0xf]
  %v284 = vld [vmem:[%s1 + $0x3fc] sm:$0xf]
  %v293 = vunpack.c.l.b16 %v21
  %v294 = vunpack.c.h.b16 %v21
  %v295 = vunpack.c.l.b16 %v22
  %v296 = vunpack.c.h.b16 %v22
  %v297 = vunpack.c.l.b16 %v23
  %v298 = vunpack.c.h.b16 %v23
  %v299 = vunpack.c.l.b16 %v24
  %v300 = vunpack.c.h.b16 %v24
  %v301 = vunpack.c.l.b16 %v25
  %v302 = vunpack.c.h.b16 %v25
  %v303 = vunpack.c.l.b16 %v26
  %v304 = vunpack.c.h.b16 %v26
  %v305 = vunpack.c.l.b16 %v27
  %v306 = vunpack.c.h.b16 %v27
  %v307 = vunpack.c.l.b16 %v28
  %v308 = vunpack.c.h.b16 %v28
  %v309 = vpack.c.b16 %v293, %v293
  %v310 = vpack.c.b16 %v294, %v294
  %v311 = vpack.c.b16 %v295, %v295
  %v312 = vpack.c.b16 %v296, %v296
  %v313 = vpack.c.b16 %v297, %v297
  %v314 = vpack.c.b16 %v298, %v298
  %v315 = vpack.c.b16 %v299, %v299
  %v316 = vpack.c.b16 %v300, %v300
  %v317 = vpack.c.b16 %v301, %v301
  %v318 = vpack.c.b16 %v302, %v302
  %v319 = vpack.c.b16 %v303, %v303
  %v320 = vpack.c.b16 %v304, %v304
  %v321 = vpack.c.b16 %v305, %v305
  %v322 = vpack.c.b16 %v306, %v306
  %v323 = vpack.c.b16 %v307, %v307
  %v324 = vpack.c.b16 %v308, %v308
  %v597 = vunpack.c.l.b16 %v29
  %v598 = vunpack.c.l.b16 %v30
  %v599 = vunpack.c.l.b16 %v31
  %v600 = vunpack.c.l.b16 %v32
  %v601 = vunpack.c.l.b16 %v33
  %v602 = vunpack.c.l.b16 %v34
  %v603 = vunpack.c.l.b16 %v35
  %v604 = vunpack.c.l.b16 %v36
  %v605 = vunpack.c.l.b16 %v37
  %v606 = vunpack.c.l.b16 %v38
  %v607 = vunpack.c.l.b16 %v39
  %v608 = vunpack.c.l.b16 %v40
  %v609 = vunpack.c.l.b16 %v41
  %v610 = vunpack.c.l.b16 %v42
  %v611 = vunpack.c.l.b16 %v43
  %v612 = vunpack.c.l.b16 %v44
  %v613 = vunpack.c.l.b16 %v45
  %v614 = vunpack.c.l.b16 %v46
  %v615 = vunpack.c.l.b16 %v47
  %v616 = vunpack.c.l.b16 %v48
  %v617 = vunpack.c.l.b16 %v49
  %v618 = vunpack.c.l.b16 %v50
  %v619 = vunpack.c.l.b16 %v51
  %v620 = vunpack.c.l.b16 %v52
  %v621 = vunpack.c.l.b16 %v53
  %v622 = vunpack.c.l.b16 %v54
  %v623 = vunpack.c.l.b16 %v55
  %v624 = vunpack.c.l.b16 %v56
  %v625 = vunpack.c.l.b16 %v57
  %v626 = vunpack.c.l.b16 %v58
  %v627 = vunpack.c.l.b16 %v59
  %v628 = vunpack.c.l.b16 %v60
  %v629 = vunpack.c.l.b16 %v61
  %v630 = vunpack.c.l.b16 %v62
  %v631 = vunpack.c.l.b16 %v63
  %v632 = vunpack.c.l.b16 %v64
  %v633 = vunpack.c.l.b16 %v65
  %v634 = vunpack.c.l.b16 %v66
  %v635 = vunpack.c.l.b16 %v67
  %v636 = vunpack.c.l.b16 %v68
  %v637 = vunpack.c.l.b16 %v69
  %v638 = vunpack.c.l.b16 %v70
  %v639 = vunpack.c.l.b16 %v71
  %v640 = vunpack.c.l.b16 %v72
  %v641 = vunpack.c.l.b16 %v73
  %v642 = vunpack.c.l.b16 %v74
  %v643 = vunpack.c.l.b16 %v75
  %v644 = vunpack.c.l.b16 %v76
  %v645 = vunpack.c.l.b16 %v77
  %v646 = vunpack.c.l.b16 %v78
  %v647 = vunpack.c.l.b16 %v79
  %v648 = vunpack.c.l.b16 %v80
  %v649 = vunpack.c.l.b16 %v81
  %v650 = vunpack.c.l.b16 %v82
  %v651 = vunpack.c.l.b16 %v83
  %v652 = vunpack.c.l.b16 %v84
  %v653 = vunpack.c.l.b16 %v85
  %v654 = vunpack.c.l.b16 %v86
  %v655 = vunpack.c.l.b16 %v87
  %v656 = vunpack.c.l.b16 %v88
  %v657 = vunpack.c.l.b16 %v89
  %v658 = vunpack.c.l.b16 %v90
  %v659 = vunpack.c.l.b16 %v91
  %v660 = vunpack.c.l.b16 %v92
  %v661 = vunpack.c.l.b16 %v93
  %v662 = vunpack.c.l.b16 %v94
  %v663 = vunpack.c.l.b16 %v95
  %v664 = vunpack.c.l.b16 %v96
  %v665 = vunpack.c.l.b16 %v97
  %v666 = vunpack.c.l.b16 %v98
  %v667 = vunpack.c.l.b16 %v99
  %v668 = vunpack.c.l.b16 %v100
  %v669 = vunpack.c.l.b16 %v101
  %v670 = vunpack.c.l.b16 %v102
  %v671 = vunpack.c.l.b16 %v103
  %v672 = vunpack.c.l.b16 %v104
  %v673 = vunpack.c.l.b16 %v105
  %v674 = vunpack.c.l.b16 %v106
  %v675 = vunpack.c.l.b16 %v107
  %v676 = vunpack.c.l.b16 %v108
  %v677 = vunpack.c.l.b16 %v109
  %v678 = vunpack.c.l.b16 %v110
  %v679 = vunpack.c.l.b16 %v111
  %v680 = vunpack.c.l.b16 %v112
  %v681 = vunpack.c.l.b16 %v113
  %v682 = vunpack.c.l.b16 %v114
  %v683 = vunpack.c.l.b16 %v115
  %v684 = vunpack.c.l.b16 %v116
  %v685 = vunpack.c.l.b16 %v117
  %v686 = vunpack.c.l.b16 %v118
  %v687 = vunpack.c.l.b16 %v119
  %v688 = vunpack.c.l.b16 %v120
  %v689 = vunpack.c.l.b16 %v121
  %v690 = vunpack.c.l.b16 %v122
  %v691 = vunpack.c.l.b16 %v123
  %v692 = vunpack.c.l.b16 %v124
  %v693 = vunpack.c.l.b16 %v125
  %v694 = vunpack.c.l.b16 %v126
  %v695 = vunpack.c.l.b16 %v127
  %v696 = vunpack.c.l.b16 %v128
  %v697 = vunpack.c.l.b16 %v129
  %v698 = vunpack.c.l.b16 %v130
  %v699 = vunpack.c.l.b16 %v131
  %v700 = vunpack.c.l.b16 %v132
  %v701 = vunpack.c.l.b16 %v133
  %v702 = vunpack.c.l.b16 %v134
  %v703 = vunpack.c.l.b16 %v135
  %v704 = vunpack.c.l.b16 %v136
  %v705 = vunpack.c.l.b16 %v137
  %v706 = vunpack.c.l.b16 %v138
  %v707 = vunpack.c.l.b16 %v139
  %v708 = vunpack.c.l.b16 %v140
  %v709 = vunpack.c.l.b16 %v141
  %v710 = vunpack.c.l.b16 %v142
  %v711 = vunpack.c.l.b16 %v143
  %v712 = vunpack.c.l.b16 %v144
  %v713 = vunpack.c.l.b16 %v145
  %v714 = vunpack.c.l.b16 %v146
  %v715 = vunpack.c.l.b16 %v147
  %v716 = vunpack.c.l.b16 %v148
  %v717 = vunpack.c.l.b16 %v149
  %v718 = vunpack.c.l.b16 %v150
  %v719 = vunpack.c.l.b16 %v151
  %v720 = vunpack.c.l.b16 %v152
  %v721 = vunpack.c.l.b16 %v153
  %v722 = vunpack.c.l.b16 %v154
  %v723 = vunpack.c.l.b16 %v155
  %v724 = vunpack.c.l.b16 %v156
  %v725 = vunpack.c.l.b16 %v157
  %v726 = vunpack.c.l.b16 %v158
  %v727 = vunpack.c.l.b16 %v159
  %v728 = vunpack.c.l.b16 %v160
  %v729 = vunpack.c.l.b16 %v161
  %v730 = vunpack.c.l.b16 %v162
  %v731 = vunpack.c.l.b16 %v163
  %v732 = vunpack.c.l.b16 %v164
  %v733 = vunpack.c.l.b16 %v165
  %v734 = vunpack.c.l.b16 %v166
  %v735 = vunpack.c.l.b16 %v167
  %v736 = vunpack.c.l.b16 %v168
  %v737 = vunpack.c.l.b16 %v169
  %v738 = vunpack.c.l.b16 %v170
  %v739 = vunpack.c.l.b16 %v171
  %v740 = vunpack.c.l.b16 %v172
  %v741 = vunpack.c.l.b16 %v173
  %v742 = vunpack.c.l.b16 %v174
  %v743 = vunpack.c.l.b16 %v175
  %v744 = vunpack.c.l.b16 %v176
  %v745 = vunpack.c.l.b16 %v177
  %v746 = vunpack.c.l.b16 %v178
  %v747 = vunpack.c.l.b16 %v179
  %v748 = vunpack.c.l.b16 %v180
  %v749 = vunpack.c.l.b16 %v181
  %v750 = vunpack.c.l.b16 %v182
  %v751 = vunpack.c.l.b16 %v183
  %v752 = vunpack.c.l.b16 %v184
  %v753 = vunpack.c.l.b16 %v185
  %v754 = vunpack.c.l.b16 %v186
  %v755 = vunpack.c.l.b16 %v187
  %v756 = vunpack.c.l.b16 %v188
  %v757 = vunpack.c.l.b16 %v189
  %v758 = vunpack.c.l.b16 %v190
  %v759 = vunpack.c.l.b16 %v191
  %v760 = vunpack.c.l.b16 %v192
  %v761 = vunpack.c.l.b16 %v193
  %v762 = vunpack.c.l.b16 %v194
  %v763 = vunpack.c.l.b16 %v195
  %v764 = vunpack.c.l.b16 %v196
  %v765 = vunpack.c.l.b16 %v197
  %v766 = vunpack.c.l.b16 %v198
  %v767 = vunpack.c.l.b16 %v199
  %v768 = vunpack.c.l.b16 %v200
  %v769 = vunpack.c.l.b16 %v201
  %v770 = vunpack.c.l.b16 %v202
  %v771 = vunpack.c.l.b16 %v203
  %v772 = vunpack.c.l.b16 %v204
  %v773 = vunpack.c.l.b16 %v205
  %v774 = vunpack.c.l.b16 %v206
  %v775 = vunpack.c.l.b16 %v207
  %v776 = vunpack.c.l.b16 %v208
  %v777 = vunpack.c.l.b16 %v209
  %v778 = vunpack.c.l.b16 %v210
  %v779 = vunpack.c.l.b16 %v211
  %v780 = vunpack.c.l.b16 %v212
  %v781 = vunpack.c.l.b16 %v213
  %v782 = vunpack.c.l.b16 %v214
  %v783 = vunpack.c.l.b16 %v215
  %v784 = vunpack.c.l.b16 %v216
  %v785 = vunpack.c.l.b16 %v217
  %v786 = vunpack.c.l.b16 %v218
  %v787 = vunpack.c.l.b16 %v219
  %v788 = vunpack.c.l.b16 %v220
  %v789 = vunpack.c.l.b16 %v221
  %v790 = vunpack.c.l.b16 %v222
  %v791 = vunpack.c.l.b16 %v223
  %v792 = vunpack.c.l.b16 %v224
  %v793 = vunpack.c.l.b16 %v225
  %v794 = vunpack.c.l.b16 %v226
  %v795 = vunpack.c.l.b16 %v227
  %v796 = vunpack.c.l.b16 %v228
  %v797 = vunpack.c.l.b16 %v229
  %v798 = vunpack.c.l.b16 %v230
  %v799 = vunpack.c.l.b16 %v231
  %v800 = vunpack.c.l.b16 %v232
  %v801 = vunpack.c.l.b16 %v233
  %v802 = vunpack.c.l.b16 %v234
  %v803 = vunpack.c.l.b16 %v235
  %v804 = vunpack.c.l.b16 %v236
  %v805 = vunpack.c.l.b16 %v237
  %v806 = vunpack.c.l.b16 %v238
  %v807 = vunpack.c.l.b16 %v239
  %v808 = vunpack.c.l.b16 %v240
  %v809 = vunpack.c.l.b16 %v241
  %v810 = vunpack.c.l.b16 %v242
  %v811 = vunpack.c.l.b16 %v243
  %v812 = vunpack.c.l.b16 %v244
  %v813 = vunpack.c.l.b16 %v245
  %v814 = vunpack.c.l.b16 %v246
  %v815 = vunpack.c.l.b16 %v247
  %v816 = vunpack.c.l.b16 %v248
  %v817 = vunpack.c.l.b16 %v249
  %v818 = vunpack.c.l.b16 %v250
  %v819 = vunpack.c.l.b16 %v251
  %v820 = vunpack.c.l.b16 %v252
  %v821 = vunpack.c.l.b16 %v253
  %v822 = vunpack.c.l.b16 %v254
  %v823 = vunpack.c.l.b16 %v255
  %v824 = vunpack.c.l.b16 %v256
  %v825 = vunpack.c.l.b16 %v257
  %v826 = vunpack.c.l.b16 %v258
  %v827 = vunpack.c.l.b16 %v259
  %v828 = vunpack.c.l.b16 %v260
  %v829 = vunpack.c.l.b16 %v261
  %v830 = vunpack.c.l.b16 %v262
  %v831 = vunpack.c.l.b16 %v263
  %v832 = vunpack.c.l.b16 %v264
  %v833 = vunpack.c.l.b16 %v265
  %v834 = vunpack.c.l.b16 %v266
  %v835 = vunpack.c.l.b16 %v267
  %v836 = vunpack.c.l.b16 %v268
  %v837 = vunpack.c.l.b16 %v269
  %v838 = vunpack.c.l.b16 %v270
  %v839 = vunpack.c.l.b16 %v271
  %v840 = vunpack.c.l.b16 %v272
  %v841 = vunpack.c.l.b16 %v273
  %v842 = vunpack.c.l.b16 %v274
  %v843 = vunpack.c.l.b16 %v275
  %v844 = vunpack.c.l.b16 %v276
  %v845 = vunpack.c.l.b16 %v277
  %v846 = vunpack.c.l.b16 %v278
  %v847 = vunpack.c.l.b16 %v279
  %v848 = vunpack.c.l.b16 %v280
  %v849 = vunpack.c.l.b16 %v281
  %v850 = vunpack.c.l.b16 %v282
  %v851 = vunpack.c.l.b16 %v283
  %v852 = vunpack.c.l.b16 %v284
  %v853 = vpack.c.b16 %v598, %v597
  %v854 = vpack.c.b16 %v600, %v599
  %v855 = vpack.c.b16 %v602, %v601
  %v856 = vpack.c.b16 %v604, %v603
  %v857 = vpack.c.b16 %v606, %v605
  %v858 = vpack.c.b16 %v608, %v607
  %v859 = vpack.c.b16 %v610, %v609
  %v860 = vpack.c.b16 %v612, %v611
  %v861 = vpack.c.b16 %v614, %v613
  %v862 = vpack.c.b16 %v616, %v615
  %v863 = vpack.c.b16 %v618, %v617
  %v864 = vpack.c.b16 %v620, %v619
  %v865 = vpack.c.b16 %v622, %v621
  %v866 = vpack.c.b16 %v624, %v623
  %v867 = vpack.c.b16 %v626, %v625
  %v868 = vpack.c.b16 %v628, %v627
  %v869 = vpack.c.b16 %v630, %v629
  %v870 = vpack.c.b16 %v632, %v631
  %v871 = vpack.c.b16 %v634, %v633
  %v872 = vpack.c.b16 %v636, %v635
  %v873 = vpack.c.b16 %v638, %v637
  %v874 = vpack.c.b16 %v640, %v639
  %v875 = vpack.c.b16 %v642, %v641
  %v876 = vpack.c.b16 %v644, %v643
  %v877 = vpack.c.b16 %v646, %v645
  %v878 = vpack.c.b16 %v648, %v647
  %v879 = vpack.c.b16 %v650, %v649
  %v880 = vpack.c.b16 %v652, %v651
  %v881 = vpack.c.b16 %v654, %v653
  %v882 = vpack.c.b16 %v656, %v655
  %v883 = vpack.c.b16 %v658, %v657
  %v884 = vpack.c.b16 %v660, %v659
  %v885 = vpack.c.b16 %v662, %v661
  %v886 = vpack.c.b16 %v664, %v663
  %v887 = vpack.c.b16 %v666, %v665
  %v888 = vpack.c.b16 %v668, %v667
  %v889 = vpack.c.b16 %v670, %v669
  %v890 = vpack.c.b16 %v672, %v671
  %v891 = vpack.c.b16 %v674, %v673
  %v892 = vpack.c.b16 %v676, %v675
  %v893 = vpack.c.b16 %v678, %v677
  %v894 = vpack.c.b16 %v680, %v679
  %v895 = vpack.c.b16 %v682, %v681
  %v896 = vpack.c.b16 %v684, %v683
  %v897 = vpack.c.b16 %v686, %v685
  %v898 = vpack.c.b16 %v688, %v687
  %v899 = vpack.c.b16 %v690, %v689
  %v900 = vpack.c.b16 %v692, %v691
  %v901 = vpack.c.b16 %v694, %v693
  %v902 = vpack.c.b16 %v696, %v695
  %v903 = vpack.c.b16 %v698, %v697
  %v904 = vpack.c.b16 %v700, %v699
  %v905 = vpack.c.b16 %v702, %v701
  %v906 = vpack.c.b16 %v704, %v703
  %v907 = vpack.c.b16 %v706, %v705
  %v908 = vpack.c.b16 %v708, %v707
  %v909 = vpack.c.b16 %v710, %v709
  %v910 = vpack.c.b16 %v712, %v711
  %v911 = vpack.c.b16 %v714, %v713
  %v912 = vpack.c.b16 %v716, %v715
  %v913 = vpack.c.b16 %v718, %v717
  %v914 = vpack.c.b16 %v720, %v719
  %v915 = vpack.c.b16 %v722, %v721
  %v916 = vpack.c.b16 %v724, %v723
  %v917 = vpack.c.b16 %v726, %v725
  %v918 = vpack.c.b16 %v728, %v727
  %v919 = vpack.c.b16 %v730, %v729
  %v920 = vpack.c.b16 %v732, %v731
  %v921 = vpack.c.b16 %v734, %v733
  %v922 = vpack.c.b16 %v736, %v735
  %v923 = vpack.c.b16 %v738, %v737
  %v924 = vpack.c.b16 %v740, %v739
  %v925 = vpack.c.b16 %v742, %v741
  %v926 = vpack.c.b16 %v744, %v743
  %v927 = vpack.c.b16 %v746, %v745
  %v928 = vpack.c.b16 %v748, %v747
  %v929 = vpack.c.b16 %v750, %v749
  %v930 = vpack.c.b16 %v752, %v751
  %v931 = vpack.c.b16 %v754, %v753
  %v932 = vpack.c.b16 %v756, %v755
  %v933 = vpack.c.b16 %v758, %v757
  %v934 = vpack.c.b16 %v760, %v759
  %v935 = vpack.c.b16 %v762, %v761
  %v936 = vpack.c.b16 %v764, %v763
  %v937 = vpack.c.b16 %v766, %v765
  %v938 = vpack.c.b16 %v768, %v767
  %v939 = vpack.c.b16 %v770, %v769
  %v940 = vpack.c.b16 %v772, %v771
  %v941 = vpack.c.b16 %v774, %v773
  %v942 = vpack.c.b16 %v776, %v775
  %v943 = vpack.c.b16 %v778, %v777
  %v944 = vpack.c.b16 %v780, %v779
  %v945 = vpack.c.b16 %v782, %v781
  %v946 = vpack.c.b16 %v784, %v783
  %v947 = vpack.c.b16 %v786, %v785
  %v948 = vpack.c.b16 %v788, %v787
  %v949 = vpack.c.b16 %v790, %v789
  %v950 = vpack.c.b16 %v792, %v791
  %v951 = vpack.c.b16 %v794, %v793
  %v952 = vpack.c.b16 %v796, %v795
  %v953 = vpack.c.b16 %v798, %v797
  %v954 = vpack.c.b16 %v800, %v799
  %v955 = vpack.c.b16 %v802, %v801
  %v956 = vpack.c.b16 %v804, %v803
  %v957 = vpack.c.b16 %v806, %v805
  %v958 = vpack.c.b16 %v808, %v807
  %v959 = vpack.c.b16 %v810, %v809
  %v960 = vpack.c.b16 %v812, %v811
  %v961 = vpack.c.b16 %v814, %v813
  %v962 = vpack.c.b16 %v816, %v815
  %v963 = vpack.c.b16 %v818, %v817
  %v964 = vpack.c.b16 %v820, %v819
  %v965 = vpack.c.b16 %v822, %v821
  %v966 = vpack.c.b16 %v824, %v823
  %v967 = vpack.c.b16 %v826, %v825
  %v968 = vpack.c.b16 %v828, %v827
  %v969 = vpack.c.b16 %v830, %v829
  %v970 = vpack.c.b16 %v832, %v831
  %v971 = vpack.c.b16 %v834, %v833
  %v972 = vpack.c.b16 %v836, %v835
  %v973 = vpack.c.b16 %v838, %v837
  %v974 = vpack.c.b16 %v840, %v839
  %v975 = vpack.c.b16 %v842, %v841
  %v976 = vpack.c.b16 %v844, %v843
  %v977 = vpack.c.b16 %v846, %v845
  %v978 = vpack.c.b16 %v848, %v847
  %v979 = vpack.c.b16 %v850, %v849
  %v980 = vpack.c.b16 %v852, %v851
  %1109 = vmatprep.subr.bf16.mxu0 0
  %1110 = vmatpush1.bf16.msra.mxu0 %v860
  %1111 = vmatprep.subr.bf16.mxu0 0
  %1112 = vmatpush1.bf16.msra.mxu0 %v859
  %1113 = vmatprep.subr.bf16.mxu0 0
  %1114 = vmatpush1.bf16.msra.mxu0 %v858
  %1115 = vmatprep.subr.bf16.mxu0 0
  %1116 = vmatpush1.bf16.msra.mxu0 %v857
  %1117 = vmatprep.subr.bf16.mxu0 0
  %1118 = vmatpush1.bf16.msra.mxu0 %v856
  %1119 = vmatprep.subr.bf16.mxu0 0
  %1120 = vmatpush1.bf16.msra.mxu0 %v855
  %1121 = vmatprep.subr.bf16.mxu0 0
  %1122 = vmatpush1.bf16.msra.mxu0 %v854
  %1123 = vmatprep.subr.bf16.mxu0 0
  %1124 = vmatpush1.bf16.msra.mxu0 %v853
  %1125 = vmatprep.subr.bf16.mxu0 0
  %1126 = vmatpush2.bf16.msra.mxu0 %v868
  %1127 = vmatprep.subr.bf16.mxu0 0
  %1128 = vmatpush2.bf16.msra.mxu0 %v867
  %1129 = vmatprep.subr.bf16.mxu0 0
  %1130 = vmatpush2.bf16.msra.mxu0 %v866
  %1131 = vmatprep.subr.bf16.mxu0 0
  %1132 = vmatpush2.bf16.msra.mxu0 %v865
  %1133 = vmatprep.subr.bf16.mxu0 0
  %1134 = vmatpush2.bf16.msra.mxu0 %v864
  %1135 = vmatprep.subr.bf16.mxu0 0
  %1136 = vmatpush2.bf16.msra.mxu0 %v863
  %1137 = vmatprep.subr.bf16.mxu0 0
  %1138 = vmatpush2.bf16.msra.mxu0 %v862
  %1139 = vmatprep.subr.bf16.mxu0 0
  %1140 = vmatpush2.bf16.msra.mxu0 %v861
  %1141 = vmatprep.mubr.bf16.mxu0 %v310
  %1142 = vmatmul.mubr.bf16.gmra.mxu0 %v309
  %v1143 = vpop.f32.mrf.mxu0
  %v1144 = vadd.f32 0.0, %v1143
  %v1145 = vpop.f32.mrf.mxu0
  %v1146 = vpop.f32.mrf.mxu0
  %v1147 = vpop.f32.mrf.mxu0
  %1148 = vdwg.mxu0
  %1149 = vmatprep.subr.bf16.mxu0 0
  %1150 = vmatpush1.bf16.msra.mxu0 %v876
  %1151 = vmatprep.subr.bf16.mxu0 0
  %1152 = vmatpush1.bf16.msra.mxu0 %v875
  %1153 = vmatprep.subr.bf16.mxu0 0
  %1154 = vmatpush1.bf16.msra.mxu0 %v874
  %1155 = vmatprep.subr.bf16.mxu0 0
  %1156 = vmatpush1.bf16.msra.mxu0 %v873
  %1157 = vmatprep.subr.bf16.mxu0 0
  %1158 = vmatpush1.bf16.msra.mxu0 %v872
  %1159 = vmatprep.subr.bf16.mxu0 0
  %1160 = vmatpush1.bf16.msra.mxu0 %v871
  %1161 = vmatprep.subr.bf16.mxu0 0
  %1162 = vmatpush1.bf16.msra.mxu0 %v870
  %1163 = vmatprep.subr.bf16.mxu0 0
  %1164 = vmatpush1.bf16.msra.mxu0 %v869
  %1165 = vmatprep.subr.bf16.mxu0 0
  %1166 = vmatpush2.bf16.msra.mxu0 %v884
  %1167 = vmatprep.subr.bf16.mxu0 0
  %1168 = vmatpush2.bf16.msra.mxu0 %v883
  %1169 = vmatprep.subr.bf16.mxu0 0
  %1170 = vmatpush2.bf16.msra.mxu0 %v882
  %1171 = vmatprep.subr.bf16.mxu0 0
  %1172 = vmatpush2.bf16.msra.mxu0 %v881
  %1173 = vmatprep.subr.bf16.mxu0 0
  %1174 = vmatpush2.bf16.msra.mxu0 %v880
  %1175 = vmatprep.subr.bf16.mxu0 0
  %1176 = vmatpush2.bf16.msra.mxu0 %v879
  %1177 = vmatprep.subr.bf16.mxu0 0
  %1178 = vmatpush2.bf16.msra.mxu0 %v878
  %1179 = vmatprep.subr.bf16.mxu0 0
  %1180 = vmatpush2.bf16.msra.mxu0 %v877
  %1181 = vmatprep.mubr.bf16.mxu0 %v312
  %1182 = vmatmul.mubr.bf16.gmra.mxu0 %v311
  %v1183 = vpop.f32.mrf.mxu0
  %v1184 = vadd.f32 %v1144, %v1183
  %v1185 = vpop.f32.mrf.mxu0
  %v1186 = vpop.f32.mrf.mxu0
  %v1187 = vpop.f32.mrf.mxu0
  %1188 = vdwg.mxu0
  %1189 = vmatprep.subr.bf16.mxu0 0
  %1190 = vmatpush1.bf16.msra.mxu0 %v892
  %1191 = vmatprep.subr.bf16.mxu0 0
  %1192 = vmatpush1.bf16.msra.mxu0 %v891
  %1193 = vmatprep.subr.bf16.mxu0 0
  %1194 = vmatpush1.bf16.msra.mxu0 %v890
  %1195 = vmatprep.subr.bf16.mxu0 0
  %1196 = vmatpush1.bf16.msra.mxu0 %v889
  %1197 = vmatprep.subr.bf16.mxu0 0
  %1198 = vmatpush1.bf16.msra.mxu0 %v888
  %1199 = vmatprep.subr.bf16.mxu0 0
  %1200 = vmatpush1.bf16.msra.mxu0 %v887
  %1201 = vmatprep.subr.bf16.mxu0 0
  %1202 = vmatpush1.bf16.msra.mxu0 %v886
  %1203 = vmatprep.subr.bf16.mxu0 0
  %1204 = vmatpush1.bf16.msra.mxu0 %v885
  %1205 = vmatprep.subr.bf16.mxu0 0
  %1206 = vmatpush2.bf16.msra.mxu0 %v900
  %1207 = vmatprep.subr.bf16.mxu0 0
  %1208 = vmatpush2.bf16.msra.mxu0 %v899
  %1209 = vmatprep.subr.bf16.mxu0 0
  %1210 = vmatpush2.bf16.msra.mxu0 %v898
  %1211 = vmatprep.subr.bf16.mxu0 0
  %1212 = vmatpush2.bf16.msra.mxu0 %v897
  %1213 = vmatprep.subr.bf16.mxu0 0
  %1214 = vmatpush2.bf16.msra.mxu0 %v896
  %1215 = vmatprep.subr.bf16.mxu0 0
  %1216 = vmatpush2.bf16.msra.mxu0 %v895
  %1217 = vmatprep.subr.bf16.mxu0 0
  %1218 = vmatpush2.bf16.msra.mxu0 %v894
  %1219 = vmatprep.subr.bf16.mxu0 0
  %1220 = vmatpush2.bf16.msra.mxu0 %v893
  %1221 = vmatprep.mubr.bf16.mxu0 %v314
  %1222 = vmatmul.mubr.bf16.gmra.mxu0 %v313
  %v1223 = vpop.f32.mrf.mxu0
  %v1224 = vadd.f32 %v1184, %v1223
  %v1225 = vpop.f32.mrf.mxu0
  %v1226 = vpop.f32.mrf.mxu0
  %v1227 = vpop.f32.mrf.mxu0
  %1228 = vdwg.mxu0
  %1229 = vmatprep.subr.bf16.mxu0 0
  %1230 = vmatpush1.bf16.msra.mxu0 %v908
  %1231 = vmatprep.subr.bf16.mxu0 0
  %1232 = vmatpush1.bf16.msra.mxu0 %v907
  %1233 = vmatprep.subr.bf16.mxu0 0
  %1234 = vmatpush1.bf16.msra.mxu0 %v906
  %1235 = vmatprep.subr.bf16.mxu0 0
  %1236 = vmatpush1.bf16.msra.mxu0 %v905
  %1237 = vmatprep.subr.bf16.mxu0 0
  %1238 = vmatpush1.bf16.msra.mxu0 %v904
  %1239 = vmatprep.subr.bf16.mxu0 0
  %1240 = vmatpush1.bf16.msra.mxu0 %v903
  %1241 = vmatprep.subr.bf16.mxu0 0
  %1242 = vmatpush1.bf16.msra.mxu0 %v902
  %1243 = vmatprep.subr.bf16.mxu0 0
  %1244 = vmatpush1.bf16.msra.mxu0 %v901
  %1245 = vmatprep.subr.bf16.mxu0 0
  %1246 = vmatpush2.bf16.msra.mxu0 %v916
  %1247 = vmatprep.subr.bf16.mxu0 0
  %1248 = vmatpush2.bf16.msra.mxu0 %v915
  %1249 = vmatprep.subr.bf16.mxu0 0
  %1250 = vmatpush2.bf16.msra.mxu0 %v914
  %1251 = vmatprep.subr.bf16.mxu0 0
  %1252 = vmatpush2.bf16.msra.mxu0 %v913
  %1253 = vmatprep.subr.bf16.mxu0 0
  %1254 = vmatpush2.bf16.msra.mxu0 %v912
  %1255 = vmatprep.subr.bf16.mxu0 0
  %1256 = vmatpush2.bf16.msra.mxu0 %v911
  %1257 = vmatprep.subr.bf16.mxu0 0
  %1258 = vmatpush2.bf16.msra.mxu0 %v910
  %1259 = vmatprep.subr.bf16.mxu0 0
  %1260 = vmatpush2.bf16.msra.mxu0 %v909
  %1261 = vmatprep.mubr.bf16.mxu0 %v316
  %1262 = vmatmul.mubr.bf16.gmra.mxu0 %v315
  %v1263 = vpop.f32.mrf.mxu0
  %v1264 = vadd.f32 %v1224, %v1263
  %v1265 = vpop.f32.mrf.mxu0
  %v1266 = vpop.f32.mrf.mxu0
  %v1267 = vpop.f32.mrf.mxu0
  %1268 = vdwg.mxu0
  %1269 = vmatprep.subr.bf16.mxu0 0
  %1270 = vmatpush1.bf16.msra.mxu0 %v924
  %1271 = vmatprep.subr.bf16.mxu0 0
  %1272 = vmatpush1.bf16.msra.mxu0 %v923
  %1273 = vmatprep.subr.bf16.mxu0 0
  %1274 = vmatpush1.bf16.msra.mxu0 %v922
  %1275 = vmatprep.subr.bf16.mxu0 0
  %1276 = vmatpush1.bf16.msra.mxu0 %v921
  %1277 = vmatprep.subr.bf16.mxu0 0
  %1278 = vmatpush1.bf16.msra.mxu0 %v920
  %1279 = vmatprep.subr.bf16.mxu0 0
  %1280 = vmatpush1.bf16.msra.mxu0 %v919
  %1281 = vmatprep.subr.bf16.mxu0 0
  %1282 = vmatpush1.bf16.msra.mxu0 %v918
  %1283 = vmatprep.subr.bf16.mxu0 0
  %1284 = vmatpush1.bf16.msra.mxu0 %v917
  %1285 = vmatprep.subr.bf16.mxu0 0
  %1286 = vmatpush2.bf16.msra.mxu0 %v932
  %1287 = vmatprep.subr.bf16.mxu0 0
  %1288 = vmatpush2.bf16.msra.mxu0 %v931
  %1289 = vmatprep.subr.bf16.mxu0 0
  %1290 = vmatpush2.bf16.msra.mxu0 %v930
  %1291 = vmatprep.subr.bf16.mxu0 0
  %1292 = vmatpush2.bf16.msra.mxu0 %v929
  %1293 = vmatprep.subr.bf16.mxu0 0
  %1294 = vmatpush2.bf16.msra.mxu0 %v928
  %1295 = vmatprep.subr.bf16.mxu0 0
  %1296 = vmatpush2.bf16.msra.mxu0 %v927
  %1297 = vmatprep.subr.bf16.mxu0 0
  %1298 = vmatpush2.bf16.msra.mxu0 %v926
  %1299 = vmatprep.subr.bf16.mxu0 0
  %1300 = vmatpush2.bf16.msra.mxu0 %v925
  %1301 = vmatprep.mubr.bf16.mxu0 %v318
  %1302 = vmatmul.mubr.bf16.gmra.mxu0 %v317
  %v1303 = vpop.f32.mrf.mxu0
  %v1304 = vadd.f32 %v1264, %v1303
  %v1305 = vpop.f32.mrf.mxu0
  %v1306 = vpop.f32.mrf.mxu0
  %v1307 = vpop.f32.mrf.mxu0
  %1308 = vdwg.mxu0
  %1309 = vmatprep.subr.bf16.mxu0 0
  %1310 = vmatpush1.bf16.msra.mxu0 %v940
  %1311 = vmatprep.subr.bf16.mxu0 0
  %1312 = vmatpush1.bf16.msra.mxu0 %v939
  %1313 = vmatprep.subr.bf16.mxu0 0
  %1314 = vmatpush1.bf16.msra.mxu0 %v938
  %1315 = vmatprep.subr.bf16.mxu0 0
  %1316 = vmatpush1.bf16.msra.mxu0 %v937
  %1317 = vmatprep.subr.bf16.mxu0 0
  %1318 = vmatpush1.bf16.msra.mxu0 %v936
  %1319 = vmatprep.subr.bf16.mxu0 0
  %1320 = vmatpush1.bf16.msra.mxu0 %v935
  %1321 = vmatprep.subr.bf16.mxu0 0
  %1322 = vmatpush1.bf16.msra.mxu0 %v934
  %1323 = vmatprep.subr.bf16.mxu0 0
  %1324 = vmatpush1.bf16.msra.mxu0 %v933
  %1325 = vmatprep.subr.bf16.mxu0 0
  %1326 = vmatpush2.bf16.msra.mxu0 %v948
  %1327 = vmatprep.subr.bf16.mxu0 0
  %1328 = vmatpush2.bf16.msra.mxu0 %v947
  %1329 = vmatprep.subr.bf16.mxu0 0
  %1330 = vmatpush2.bf16.msra.mxu0 %v946
  %1331 = vmatprep.subr.bf16.mxu0 0
  %1332 = vmatpush2.bf16.msra.mxu0 %v945
  %1333 = vmatprep.subr.bf16.mxu0 0
  %1334 = vmatpush2.bf16.msra.mxu0 %v944
  %1335 = vmatprep.subr.bf16.mxu0 0
  %1336 = vmatpush2.bf16.msra.mxu0 %v943
  %1337 = vmatprep.subr.bf16.mxu0 0
  %1338 = vmatpush2.bf16.msra.mxu0 %v942
  %1339 = vmatprep.subr.bf16.mxu0 0
  %1340 = vmatpush2.bf16.msra.mxu0 %v941
  %1341 = vmatprep.mubr.bf16.mxu0 %v320
  %1342 = vmatmul.mubr.bf16.gmra.mxu0 %v319
  %v1343 = vpop.f32.mrf.mxu0
  %v1344 = vadd.f32 %v1304, %v1343
  %v1345 = vpop.f32.mrf.mxu0
  %v1346 = vpop.f32.mrf.mxu0
  %v1347 = vpop.f32.mrf.mxu0
  %1348 = vdwg.mxu0
  %1349 = vmatprep.subr.bf16.mxu0 0
  %1350 = vmatpush1.bf16.msra.mxu0 %v956
  %1351 = vmatprep.subr.bf16.mxu0 0
  %1352 = vmatpush1.bf16.msra.mxu0 %v955
  %1353 = vmatprep.subr.bf16.mxu0 0
  %1354 = vmatpush1.bf16.msra.mxu0 %v954
  %1355 = vmatprep.subr.bf16.mxu0 0
  %1356 = vmatpush1.bf16.msra.mxu0 %v953
  %1357 = vmatprep.subr.bf16.mxu0 0
  %1358 = vmatpush1.bf16.msra.mxu0 %v952
  %1359 = vmatprep.subr.bf16.mxu0 0
  %1360 = vmatpush1.bf16.msra.mxu0 %v951
  %1361 = vmatprep.subr.bf16.mxu0 0
  %1362 = vmatpush1.bf16.msra.mxu0 %v950
  %1363 = vmatprep.subr.bf16.mxu0 0
  %1364 = vmatpush1.bf16.msra.mxu0 %v949
  %1365 = vmatprep.subr.bf16.mxu0 0
  %1366 = vmatpush2.bf16.msra.mxu0 %v964
  %1367 = vmatprep.subr.bf16.mxu0 0
  %1368 = vmatpush2.bf16.msra.mxu0 %v963
  %1369 = vmatprep.subr.bf16.mxu0 0
  %1370 = vmatpush2.bf16.msra.mxu0 %v962
  %1371 = vmatprep.subr.bf16.mxu0 0
  %1372 = vmatpush2.bf16.msra.mxu0 %v961
  %1373 = vmatprep.subr.bf16.mxu0 0
  %1374 = vmatpush2.bf16.msra.mxu0 %v960
  %1375 = vmatprep.subr.bf16.mxu0 0
  %1376 = vmatpush2.bf16.msra.mxu0 %v959
  %1377 = vmatprep.subr.bf16.mxu0 0
  %1378 = vmatpush2.bf16.msra.mxu0 %v958
  %1379 = vmatprep.subr.bf16.mxu0 0
  %1380 = vmatpush2.bf16.msra.mxu0 %v957
  %1381 = vmatprep.mubr.bf16.mxu0 %v322
  %1382 = vmatmul.mubr.bf16.gmra.mxu0 %v321
  %v1383 = vpop.f32.mrf.mxu0
  %v1384 = vadd.f32 %v1344, %v1383
  %v1385 = vpop.f32.mrf.mxu0
  %v1386 = vpop.f32.mrf.mxu0
  %v1387 = vpop.f32.mrf.mxu0
  %1388 = vdwg.mxu0
  %1389 = vmatprep.subr.bf16.mxu0 0
  %1390 = vmatpush1.bf16.msra.mxu0 %v972
  %1391 = vmatprep.subr.bf16.mxu0 0
  %1392 = vmatpush1.bf16.msra.mxu0 %v971
  %1393 = vmatprep.subr.bf16.mxu0 0
  %1394 = vmatpush1.bf16.msra.mxu0 %v970
  %1395 = vmatprep.subr.bf16.mxu0 0
  %1396 = vmatpush1.bf16.msra.mxu0 %v969
  %1397 = vmatprep.subr.bf16.mxu0 0
  %1398 = vmatpush1.bf16.msra.mxu0 %v968
  %1399 = vmatprep.subr.bf16.mxu0 0
  %1400 = vmatpush1.bf16.msra.mxu0 %v967
  %1401 = vmatprep.subr.bf16.mxu0 0
  %1402 = vmatpush1.bf16.msra.mxu0 %v966
  %1403 = vmatprep.subr.bf16.mxu0 0
  %1404 = vmatpush1.bf16.msra.mxu0 %v965
  %1405 = vmatprep.subr.bf16.mxu0 0
  %1406 = vmatpush2.bf16.msra.mxu0 %v980
  %1407 = vmatprep.subr.bf16.mxu0 0
  %1408 = vmatpush2.bf16.msra.mxu0 %v979
  %1409 = vmatprep.subr.bf16.mxu0 0
  %1410 = vmatpush2.bf16.msra.mxu0 %v978
  %1411 = vmatprep.subr.bf16.mxu0 0
  %1412 = vmatpush2.bf16.msra.mxu0 %v977
  %1413 = vmatprep.subr.bf16.mxu0 0
  %1414 = vmatpush2.bf16.msra.mxu0 %v976
  %1415 = vmatprep.subr.bf16.mxu0 0
  %1416 = vmatpush2.bf16.msra.mxu0 %v975
  %1417 = vmatprep.subr.bf16.mxu0 0
  %1418 = vmatpush2.bf16.msra.mxu0 %v974
  %1419 = vmatprep.subr.bf16.mxu0 0
  %1420 = vmatpush2.bf16.msra.mxu0 %v973
  %1421 = vmatprep.mubr.bf16.mxu0 %v324
  %1422 = vmatmul.mubr.bf16.gmra.mxu0 %v323
  %v1423 = vpop.f32.mrf.mxu0
  %v1424 = vadd.f32 %v1384, %v1423
  %v1425 = vpop.f32.mrf.mxu0
  %v1426 = vpop.f32.mrf.mxu0
  %v1427 = vpop.f32.mrf.mxu0
  %1428 = vdwg.mxu0
  %v1429 = vadd.f32 %v20, %v1424
  %1430 = vst [vmem:[#allocation2] sm:$0xff] %v1429
  // Predicated region
  $region18: #{icp_encoder_big_forward.7} parent=0 // pred_check
    %p1431 = pneg %p15
  $region19: #{icp_encoder_big_forward.7} parent=0 // pred_check_branch
    %1433 = sbr.rel (%p1431) target = $region21
  $region20: #{icp_encoder_big_forward.7} parent=0 // pred_region
    %v1434 = vld [vmem:[#allocation2] sm:$0xff]
    %v1435 = vld [vmem:[%s2] sm:$0x1]
    %v1437 = vlaneseq
    %v1438 = vshrl.u32 %v1437, 7
    %v1439 = vsub.s32 0, %v1438
    %v1440 = vrot.slane %v1435, %v1439
    %v1442 = vadd.f32 %v1434, %v1440
    %1443 = vst [vmem:[%s3] sm:$0xff] %v1442
  $region21: #{icp_encoder_big_forward.7} parent=0 // pred_fallthru
    _
  // Predicated region
  $region22: #{icp_encoder_big_forward.7} parent=0 // pred_check
    _
  $region23: #{icp_encoder_big_forward.7} parent=0 // pred_check_branch
    %1445 = sbr.rel (0) target = $region25
  $region24: #{icp_encoder_big_forward.7} parent=0 // pred_region
    _
  $region25: #{icp_encoder_big_forward.7} parent=0 // pred_fallthru
    _
  // Predicated region
  $region26: #{icp_encoder_big_forward.7} parent=0 // pred_check
    _
  $region27: #{icp_encoder_big_forward.7} parent=0 // pred_check_branch
    %1447 = sbr.rel (0) target = $region29
  $region28: #{icp_encoder_big_forward.7} parent=0 // pred_region
    _
  $region29: #{icp_encoder_big_forward.7} parent=0 // pred_fallthru
    _

</llo_original>
